<compile_context>
chip_gen: v7x
topology: tpu7x:2x2x1
jax: 0.10.0
libtpu: 0.0.40
codegen_flags: <defaults>
</compile_context>

<pallas_src>
import functools
import math

import jax
import jax.numpy as jnp
from jax.experimental import pallas as pl
from jax.experimental.pallas import tpu as pltpu

# ---------------------------------------------------------------------------
# Small synthetic "bert-base-chinese"-style config
# ---------------------------------------------------------------------------
VOCAB_SIZE   = 128
TYPE_VOCAB   = 2
MAX_POS      = 16
HIDDEN       = 32
NUM_HEADS    = 4
HEAD_DIM     = HIDDEN // NUM_HEADS
INTERMEDIATE = 64
NUM_LAYERS   = 2
LN_EPS       = 1e-12
MASK_BIAS    = -1e9

# NOTE: at this toy config (HIDDEN=32, S=8) all matmul outputs are <128 lanes
# wide, so the MXU is mostly idle by construction; lane-dense padding only
# pays off at real BERT sizes.  TODO(synk): pad HIDDEN->128 / use bf16
# operands when scaling to bert-base shapes.


# ---------------------------------------------------------------------------
# In-kernel math helpers (f32 throughout)
# ---------------------------------------------------------------------------
def _ln(x, g, b):
    mean = jnp.mean(x, axis=-1, keepdims=True)
    cen = x - mean
    var = jnp.mean(cen * cen, axis=-1, keepdims=True)
    return cen * jax.lax.rsqrt(var + LN_EPS) * g + b


def _erf(x):
    # Abramowitz & Stegun 7.1.26 polynomial erf (max abs err ~1.5e-7):
    # matches HF's exact erf-GELU to f32 precision while only using
    # exp/mul/add/div, all of which lower cleanly in Mosaic.
    p = 0.3275911
    a1, a2, a3, a4, a5 = (0.254829592, -0.284496736, 1.421413741,
                          -1.453152027, 1.061405429)
    ax = jnp.abs(x)
    t = 1.0 / (1.0 + p * ax)
    poly = t * (a1 + t * (a2 + t * (a3 + t * (a4 + t * a5))))
    y = 1.0 - poly * jnp.exp(-ax * ax)
    return jnp.where(x >= 0, y, -y)


def _gelu_exact(x):
    return 0.5 * x * (1.0 + _erf(x * (1.0 / math.sqrt(2.0))))


# ---------------------------------------------------------------------------
# Fused whole-encoder kernel: one grid step == one transformer layer.
# ---------------------------------------------------------------------------
def _bert_kernel(
    # inputs
    emb_ref, mask_ref, emb_g_ref, emb_b_ref,
    qkv_w_ref, qkv_b_ref, o_w_ref, o_b_ref,
    ln1_g_ref, ln1_b_ref, i_w_ref, i_b_ref, f_w_ref, f_b_ref,
    ln2_g_ref, ln2_b_ref, pool_w_ref, pool_b_ref,
    # outputs
    h_ref, pooled_ref,
    *, batch, seq,
):
    lyr = pl.program_id(0)

    # --- layer 0: embedding LayerNorm seeds the resident hidden state ------
    @pl.when(lyr == 0)
    def _():
        h_ref[...] = _ln(emb_ref[...], emb_g_ref[...], emb_b_ref[...])

    x = h_ref[...]                                   # (B*S, H), resident VMEM
    mask = mask_ref[...]                             # (B, S)

    # --- fused QKV projection: one MXU pass, 3H-wide output ----------------
    qkv = (jnp.dot(x, qkv_w_ref[...], preferred_element_type=jnp.float32)
           + qkv_b_ref[...])                         # (B*S, 3H)

    inv_sqrt_d = 1.0 / math.sqrt(HEAD_DIM)
    attn = None
    for head in range(NUM_HEADS):
        lo, hi = head * HEAD_DIM, (head + 1) * HEAD_DIM
        qh = qkv[:, lo:hi].reshape(batch, seq, HEAD_DIM)
        kh = qkv[:, HIDDEN + lo:HIDDEN + hi].reshape(batch, seq, HEAD_DIM)
        vh = qkv[:, 2 * HIDDEN + lo:2 * HIDDEN + hi].reshape(batch, seq, HEAD_DIM)

        s = jnp.einsum("bqd,bkd->bqk", qh, kh,
                       preferred_element_type=jnp.float32) * inv_sqrt_d
        s = s + mask[:, None, :]                     # broadcast mask in VMEM
        s = s - jnp.max(s, axis=-1, keepdims=True)
        prob = jnp.exp(s)
        prob = prob * pl.reciprocal(jnp.sum(prob, axis=-1, keepdims=True),
                                    approx=True)
        ctx = jnp.einsum("bqk,bkd->bqd", prob, vh,
                         preferred_element_type=jnp.float32)
        ctx2d = ctx.reshape(batch * seq, HEAD_DIM)
        # fold the head merge into the output projection:
        # attn_out = sum_h ctx_h @ o_w[h*HD:(h+1)*HD, :]
        term = jnp.dot(ctx2d, o_w_ref[lo:hi, :],
                       preferred_element_type=jnp.float32)
        attn = term if attn is None else attn + term
    attn = attn + o_b_ref[...]

    # --- residual + LayerNorm 1 --------------------------------------------
    h1 = _ln(attn + x, ln1_g_ref[...], ln1_b_ref[...])

    # --- FFN with exact (erf) GELU ------------------------------------------
    inter = (jnp.dot(h1, i_w_ref[...], preferred_element_type=jnp.float32)
             + i_b_ref[...])
    inter = _gelu_exact(inter)
    ffn = (jnp.dot(inter, f_w_ref[...], preferred_element_type=jnp.float32)
           + f_b_ref[...])

    # --- residual + LayerNorm 2, update resident hidden state ---------------
    h2 = _ln(ffn + h1, ln2_g_ref[...], ln2_b_ref[...])
    h_ref[...] = h2

    # --- final layer: tanh pooler on the [CLS] token -------------------------
    @pl.when(lyr == pl.num_programs(0) - 1)
    def _():
        cls = h2.reshape(batch, seq, HIDDEN)[:, 0, :]         # (B, H)
        pooled_ref[...] = jnp.tanh(
            jnp.dot(cls, pool_w_ref[...], preferred_element_type=jnp.float32)
            + pool_b_ref[...])


# ---------------------------------------------------------------------------
# Parameter init (deterministic synthetic weights; std=0.02 like BERT),
# with per-layer weights pre-stacked into [L, ...] arrays.
# ---------------------------------------------------------------------------
def init_params(key):
    keys = iter(jax.random.split(key, 16))

    def nrm(shape):
        return 0.02 * jax.random.normal(next(keys), shape, jnp.float32)

    L = NUM_LAYERS
    return {
        "word_emb": nrm((VOCAB_SIZE, HIDDEN)),
        "pos_emb":  nrm((MAX_POS, HIDDEN)),
        "type_emb": nrm((TYPE_VOCAB, HIDDEN)),
        "emb_ln_g": jnp.ones((1, HIDDEN), jnp.float32),
        "emb_ln_b": jnp.zeros((1, HIDDEN), jnp.float32),
        "qkv_w": nrm((L, HIDDEN, 3 * HIDDEN)),
        "qkv_b": jnp.zeros((L, 1, 3 * HIDDEN), jnp.float32),
        "o_w":   nrm((L, HIDDEN, HIDDEN)),
        "o_b":   jnp.zeros((L, 1, HIDDEN), jnp.float32),
        "ln1_g": jnp.ones((L, 1, HIDDEN), jnp.float32),
        "ln1_b": jnp.zeros((L, 1, HIDDEN), jnp.float32),
        "i_w":   nrm((L, HIDDEN, INTERMEDIATE)),
        "i_b":   jnp.zeros((L, 1, INTERMEDIATE), jnp.float32),
        "f_w":   nrm((L, INTERMEDIATE, HIDDEN)),
        "f_b":   jnp.zeros((L, 1, HIDDEN), jnp.float32),
        "ln2_g": jnp.ones((L, 1, HIDDEN), jnp.float32),
        "ln2_b": jnp.zeros((L, 1, HIDDEN), jnp.float32),
        "pooler_w": nrm((HIDDEN, HIDDEN)),
        "pooler_b": jnp.zeros((1, HIDDEN), jnp.float32),
    }


# ---------------------------------------------------------------------------
# Forward: embedding gathers in JAX glue, everything else in ONE pallas_call.
# ---------------------------------------------------------------------------
def bert_forward(params, input_ids, attention_mask, token_type_ids):
    B, S = input_ids.shape

    # Embedding lookups (gather) kept as plain-JAX glue.
    word = params["word_emb"][input_ids]                       # (B, S, H)
    pos = params["pos_emb"][:S][None, :, :]                    # (1, S, H)
    typ = params["type_emb"][token_type_ids]                   # (B, S, H)
    emb = (word + pos + typ).reshape(B * S, HIDDEN)

    # Extended attention mask: 0 for keep, large negative for masked; kept as
    # (B, S) — broadcast across heads happens inside the kernel.
    mask_bias = (1.0 - attention_mask.astype(jnp.float32)) * MASK_BIAS  # (B,S)

    def full2d(shape):
        return pl.BlockSpec(shape, lambda l: (0, 0))

    def stacked(d1, d2):
        return pl.BlockSpec((None, d1, d2), lambda l: (l, 0, 0))

    grid_spec = pltpu.PrefetchScalarGridSpec(
        num_scalar_prefetch=0,
        grid=(NUM_LAYERS,),
        in_specs=[
            full2d((B * S, HIDDEN)),         # emb
            full2d((B, S)),                  # mask_bias
            full2d((1, HIDDEN)),             # emb_ln_g
            full2d((1, HIDDEN)),             # emb_ln_b
            stacked(HIDDEN, 3 * HIDDEN),     # qkv_w
            stacked(1, 3 * HIDDEN),          # qkv_b
            stacked(HIDDEN, HIDDEN),         # o_w
            stacked(1, HIDDEN),              # o_b
            stacked(1, HIDDEN),              # ln1_g
            stacked(1, HIDDEN),              # ln1_b
            stacked(HIDDEN, INTERMEDIATE),   # i_w
            stacked(1, INTERMEDIATE),        # i_b
            stacked(INTERMEDIATE, HIDDEN),   # f_w
            stacked(1, HIDDEN),              # f_b
            stacked(1, HIDDEN),              # ln2_g
            stacked(1, HIDDEN),              # ln2_b
            full2d((HIDDEN, HIDDEN)),        # pooler_w
            full2d((1, HIDDEN)),             # pooler_b
        ],
        out_specs=[
            full2d((B * S, HIDDEN)),         # last hidden state (resident)
            full2d((B, HIDDEN)),             # pooled output
        ],
    )

    h_flat, pooled = pl.pallas_call(
        functools.partial(_bert_kernel, batch=B, seq=S),
        grid_spec=grid_spec,
        out_shape=(jax.ShapeDtypeStruct((B * S, HIDDEN), jnp.float32),
                   jax.ShapeDtypeStruct((B, HIDDEN), jnp.float32)),
        compiler_params=pltpu.CompilerParams(
            dimension_semantics=("arbitrary",)),   # h carries across layers
    )(emb, mask_bias,
      params["emb_ln_g"], params["emb_ln_b"],
      params["qkv_w"], params["qkv_b"], params["o_w"], params["o_b"],
      params["ln1_g"], params["ln1_b"],
      params["i_w"], params["i_b"], params["f_w"], params["f_b"],
      params["ln2_g"], params["ln2_b"],
      params["pooler_w"], params["pooler_b"])

    return h_flat.reshape(B, S, HIDDEN), pooled


# ---------------------------------------------------------------------------
if __name__ == "__main__":
    B, S = 2, 8
    key = jax.random.PRNGKey(0)
    k_params, k_ids = jax.random.split(key)

    params = init_params(k_params)

    input_ids = jax.random.randint(k_ids, (B, S), 0, VOCAB_SIZE, dtype=jnp.int32)
    attention_mask = jnp.array(
        [[1, 1, 1, 1, 1, 1, 1, 1],
         [1, 1, 1, 1, 1, 1, 0, 0]], dtype=jnp.int32)
    token_type_ids = jnp.array(
        [[0, 0, 0, 0, 1, 1, 1, 1],
         [0, 0, 0, 1, 1, 1, 1, 1]], dtype=jnp.int32)

    fwd = jax.jit(bert_forward)
    last_hidden, pooled = fwd(params, input_ids, attention_mask, token_type_ids)
    jax.block_until_ready((last_hidden, pooled))

    assert last_hidden.shape == (B, S, HIDDEN)
    assert pooled.shape == (B, HIDDEN)
    assert bool(jnp.all(jnp.isfinite(last_hidden))) and bool(jnp.all(jnp.isfinite(pooled)))
    print("KERNEL_OK")
</pallas_src>

<mosaic_0001>
module attributes {stable_mosaic.version = 11 : i64} {
  func.func @_bert_kernel(%arg0: i32, %arg1: memref<16x32xf32, #tpu.memory_space<vmem>>, %arg2: memref<2x8xf32, #tpu.memory_space<vmem>>, %arg3: memref<1x32xf32, #tpu.memory_space<vmem>>, %arg4: memref<1x32xf32, #tpu.memory_space<vmem>>, %arg5: memref<1x32x96xf32, #tpu.memory_space<vmem>>, %arg6: memref<1x1x96xf32, #tpu.memory_space<vmem>>, %arg7: memref<1x32x32xf32, #tpu.memory_space<vmem>>, %arg8: memref<1x1x32xf32, #tpu.memory_space<vmem>>, %arg9: memref<1x1x32xf32, #tpu.memory_space<vmem>>, %arg10: memref<1x1x32xf32, #tpu.memory_space<vmem>>, %arg11: memref<1x32x64xf32, #tpu.memory_space<vmem>>, %arg12: memref<1x1x64xf32, #tpu.memory_space<vmem>>, %arg13: memref<1x64x32xf32, #tpu.memory_space<vmem>>, %arg14: memref<1x1x32xf32, #tpu.memory_space<vmem>>, %arg15: memref<1x1x32xf32, #tpu.memory_space<vmem>>, %arg16: memref<1x1x32xf32, #tpu.memory_space<vmem>>, %arg17: memref<32x32xf32, #tpu.memory_space<vmem>>, %arg18: memref<1x32xf32, #tpu.memory_space<vmem>>, %arg19: memref<16x32xf32, #tpu.memory_space<vmem>>, %arg20: memref<2x32xf32, #tpu.memory_space<vmem>>) attributes {dimension_semantics = [#tpu.dimension_semantics<arbitrary>], iteration_bounds = array<i64: 2>, scalar_prefetch = 0 : i64, scratch_operands = 0 : i64, tpu.core_type = #tpu.core_type<tc>, window_params = [{pipeline_mode = #tpu.pipeline_mode<synchronous>, transform_indices = @transform_0, window_bounds = array<i64: 16, 32>}, {pipeline_mode = #tpu.pipeline_mode<synchronous>, transform_indices = @transform_1, window_bounds = array<i64: 2, 8>}, {pipeline_mode = #tpu.pipeline_mode<synchronous>, transform_indices = @transform_2, window_bounds = array<i64: 1, 32>}, {pipeline_mode = #tpu.pipeline_mode<synchronous>, transform_indices = @transform_3, window_bounds = array<i64: 1, 32>}, {transform_indices = @transform_4, window_bounds = array<i64: 1, 32, 96>}, {transform_indices = @transform_5, window_bounds = array<i64: 1, 1, 96>}, {transform_indices = @transform_6, window_bounds = array<i64: 1, 32, 32>}, {transform_indices = @transform_7, window_bounds = array<i64: 1, 1, 32>}, {transform_indices = @transform_8, window_bounds = array<i64: 1, 1, 32>}, {transform_indices = @transform_9, window_bounds = array<i64: 1, 1, 32>}, {transform_indices = @transform_10, window_bounds = array<i64: 1, 32, 64>}, {transform_indices = @transform_11, window_bounds = array<i64: 1, 1, 64>}, {transform_indices = @transform_12, window_bounds = array<i64: 1, 64, 32>}, {transform_indices = @transform_13, window_bounds = array<i64: 1, 1, 32>}, {transform_indices = @transform_14, window_bounds = array<i64: 1, 1, 32>}, {transform_indices = @transform_15, window_bounds = array<i64: 1, 1, 32>}, {pipeline_mode = #tpu.pipeline_mode<synchronous>, transform_indices = @transform_16, window_bounds = array<i64: 32, 32>}, {pipeline_mode = #tpu.pipeline_mode<synchronous>, transform_indices = @transform_17, window_bounds = array<i64: 1, 32>}, {pipeline_mode = #tpu.pipeline_mode<synchronous>, transform_indices = @transform_18, window_bounds = array<i64: 16, 32>}, {pipeline_mode = #tpu.pipeline_mode<synchronous>, transform_indices = @transform_19, window_bounds = array<i64: 2, 32>}]} {
    %c0_i32 = arith.constant 0 : i32
    %0 = arith.cmpi eq, %arg0, %c0_i32 : i32
    %1 = arith.extui %0 : i1 to i32
    %c0_i32_0 = arith.constant 0 : i32
    %2 = arith.cmpi ne, %1, %c0_i32_0 : i32
    scf.if %2 {
      %c0_100 = arith.constant 0 : index
      %c0_101 = arith.constant 0 : index
      %235 = vector.load %arg1[%c0_100, %c0_101] : memref<16x32xf32, #tpu.memory_space<vmem>>, vector<16x32xf32>
      %c0_102 = arith.constant 0 : index
      %c0_103 = arith.constant 0 : index
      %236 = vector.load %arg3[%c0_102, %c0_103] : memref<1x32xf32, #tpu.memory_space<vmem>>, vector<1x32xf32>
      %c0_104 = arith.constant 0 : index
      %c0_105 = arith.constant 0 : index
      %237 = vector.load %arg4[%c0_104, %c0_105] : memref<1x32xf32, #tpu.memory_space<vmem>>, vector<1x32xf32>
      %cst_106 = arith.constant dense<0.000000e+00> : vector<16xf32>
      %238 = vector.multi_reduction <add>, %235, %cst_106 [1] : vector<16x32xf32> to vector<16xf32>
      %239 = vector.shape_cast %238 : vector<16xf32> to vector<16x1xf32>
      %cst_107 = arith.constant 3.200000e+01 : f32
      %240 = vector.broadcast %cst_107 : f32 to vector<16x1xf32>
      %241 = arith.divf %239, %240 : vector<16x1xf32>
      %242 = vector.broadcast %241 : vector<16x1xf32> to vector<16x32xf32>
      %243 = arith.subf %235, %242 : vector<16x32xf32>
      %244 = arith.mulf %243, %243 : vector<16x32xf32>
      %cst_108 = arith.constant dense<0.000000e+00> : vector<16xf32>
      %245 = vector.multi_reduction <add>, %244, %cst_108 [1] : vector<16x32xf32> to vector<16xf32>
      %246 = vector.shape_cast %245 : vector<16xf32> to vector<16x1xf32>
      %cst_109 = arith.constant 3.200000e+01 : f32
      %247 = vector.broadcast %cst_109 : f32 to vector<16x1xf32>
      %248 = arith.divf %246, %247 : vector<16x1xf32>
      %cst_110 = arith.constant 9.99999996E-13 : f32
      %249 = vector.broadcast %cst_110 : f32 to vector<16x1xf32>
      %250 = arith.addf %248, %249 : vector<16x1xf32>
      %251 = math.rsqrt %250 : vector<16x1xf32>
      %252 = vector.broadcast %251 : vector<16x1xf32> to vector<16x32xf32>
      %253 = arith.mulf %243, %252 : vector<16x32xf32>
      %254 = vector.broadcast %236 : vector<1x32xf32> to vector<16x32xf32>
      %255 = arith.mulf %253, %254 : vector<16x32xf32>
      %256 = vector.broadcast %237 : vector<1x32xf32> to vector<16x32xf32>
      %257 = arith.addf %255, %256 : vector<16x32xf32>
      %c0_111 = arith.constant 0 : index
      %c0_112 = arith.constant 0 : index
      %258 = vector.load %arg19[%c0_111, %c0_112] : memref<16x32xf32, #tpu.memory_space<vmem>>, vector<16x32xf32>
      tpu.vector_store %arg19[%c0_111, %c0_112], %257 {strides = array<i32>} : memref<16x32xf32, #tpu.memory_space<vmem>>, vector<16x32xf32>,
    } else {
    }
    %c0 = arith.constant 0 : index
    %c0_1 = arith.constant 0 : index
    %3 = vector.load %arg19[%c0, %c0_1] : memref<16x32xf32, #tpu.memory_space<vmem>>, vector<16x32xf32>
    %c0_2 = arith.constant 0 : index
    %c0_3 = arith.constant 0 : index
    %4 = vector.load %arg2[%c0_2, %c0_3] : memref<2x8xf32, #tpu.memory_space<vmem>>, vector<2x8xf32>
    %c0_4 = arith.constant 0 : index
    %c0_5 = arith.constant 0 : index
    %c0_6 = arith.constant 0 : index
    %5 = vector.load %arg5[%c0_4, %c0_5, %c0_6] : memref<1x32x96xf32, #tpu.memory_space<vmem>>, vector<1x32x96xf32>
    %6 = vector.shape_cast %5 : vector<1x32x96xf32> to vector<32x96xf32>
    %cst = arith.constant dense<0.000000e+00> : vector<16x96xf32>
    %7 = tpu.matmul %3, %6, %cst {dimension_numbers = #tpu.dot_dimension_numbers<[1], [0], [0], [1], [0, 0, 1, 1], [], []>} : vector<16x32xf32>, vector<32x96xf32>, vector<16x96xf32> -> vector<16x96xf32>
    %c0_7 = arith.constant 0 : index
    %c0_8 = arith.constant 0 : index
    %c0_9 = arith.constant 0 : index
    %8 = vector.load %arg6[%c0_7, %c0_8, %c0_9] : memref<1x1x96xf32, #tpu.memory_space<vmem>>, vector<1x1x96xf32>
    %9 = vector.shape_cast %8 : vector<1x1x96xf32> to vector<1x96xf32>
    %10 = vector.broadcast %9 : vector<1x96xf32> to vector<16x96xf32>
    %11 = arith.addf %7, %10 : vector<16x96xf32>
    %12 = vector.extract_strided_slice %11 {offsets = [0, 0], sizes = [16, 8], strides = [1, 1]} : vector<16x96xf32> to vector<16x8xf32>
    %13 = vector.shape_cast %12 : vector<16x8xf32> to vector<2x8x8xf32>
    %14 = vector.extract_strided_slice %11 {offsets = [0, 32], sizes = [16, 8], strides = [1, 1]} : vector<16x96xf32> to vector<16x8xf32>
    %15 = vector.shape_cast %14 : vector<16x8xf32> to vector<2x8x8xf32>
    %16 = vector.extract_strided_slice %11 {offsets = [0, 64], sizes = [16, 8], strides = [1, 1]} : vector<16x96xf32> to vector<16x8xf32>
    %17 = vector.shape_cast %16 : vector<16x8xf32> to vector<2x8x8xf32>
    "tpu.trace_start"() <{level = 10 : i32, message = "bqd,bkd->bqk"}> : () -> ()
    %cst_10 = arith.constant dense<0.000000e+00> : vector<2x8x8xf32>
    %18 = tpu.matmul %13, %15, %cst_10 {dimension_numbers = #tpu.dot_dimension_numbers<[2], [2], [1], [1], [0, 0, 0, 1, 1, 1], [0], [0]>} : vector<2x8x8xf32>, vector<2x8x8xf32>, vector<2x8x8xf32> -> vector<2x8x8xf32>
    "tpu.trace_stop"() : () -> ()
    %cst_11 = arith.constant 0.353553385 : f32
    %19 = vector.broadcast %cst_11 : f32 to vector<2x8x8xf32>
    %20 = arith.mulf %18, %19 : vector<2x8x8xf32>
    %21 = vector.shape_cast %4 : vector<2x8xf32> to vector<2x1x8xf32>
    %22 = vector.broadcast %21 : vector<2x1x8xf32> to vector<2x8x8xf32>
    %23 = arith.addf %20, %22 : vector<2x8x8xf32>
    %cst_12 = arith.constant dense<0xFF800000> : vector<2x8xf32>
    %24 = vector.multi_reduction <maximumf>, %23, %cst_12 [2] : vector<2x8x8xf32> to vector<2x8xf32>
    %25 = vector.shape_cast %24 : vector<2x8xf32> to vector<2x8x1xf32>
    %26 = vector.broadcast %25 : vector<2x8x1xf32> to vector<2x8x8xf32>
    %27 = arith.subf %23, %26 : vector<2x8x8xf32>
    %28 = math.exp %27 : vector<2x8x8xf32>
    %cst_13 = arith.constant dense<0.000000e+00> : vector<2x8xf32>
    %29 = vector.multi_reduction <add>, %28, %cst_13 [2] : vector<2x8x8xf32> to vector<2x8xf32>
    %30 = vector.shape_cast %29 : vector<2x8xf32> to vector<2x8x1xf32>
    %31 = tpu.reciprocal %30 {approx = true} : vector<2x8x1xf32> -> vector<2x8x1xf32>
    %32 = vector.broadcast %31 : vector<2x8x1xf32> to vector<2x8x8xf32>
    %33 = arith.mulf %28, %32 : vector<2x8x8xf32>
    "tpu.trace_start"() <{level = 10 : i32, message = "bqk,bkd->bqd"}> : () -> ()
    %cst_14 = arith.constant dense<0.000000e+00> : vector<2x8x8xf32>
    %34 = tpu.matmul %33, %17, %cst_14 {dimension_numbers = #tpu.dot_dimension_numbers<[2], [1], [1], [2], [0, 0, 0, 1, 1, 2], [0], [0]>} : vector<2x8x8xf32>, vector<2x8x8xf32>, vector<2x8x8xf32> -> vector<2x8x8xf32>
    "tpu.trace_stop"() : () -> ()
    %35 = vector.shape_cast %34 : vector<2x8x8xf32> to vector<16x8xf32>
    %c0_15 = arith.constant 0 : index
    %c0_16 = arith.constant 0 : index
    %c0_17 = arith.constant 0 : index
    %36 = vector.load %arg7[%c0_15, %c0_16, %c0_17] : memref<1x32x32xf32, #tpu.memory_space<vmem>>, vector<1x8x32xf32>
    %37 = vector.shape_cast %36 : vector<1x8x32xf32> to vector<8x32xf32>
    %cst_18 = arith.constant dense<0.000000e+00> : vector<16x32xf32>
    %38 = tpu.matmul %35, %37, %cst_18 {dimension_numbers = #tpu.dot_dimension_numbers<[1], [0], [0], [1], [0, 0, 1, 1], [], []>} : vector<16x8xf32>, vector<8x32xf32>, vector<16x32xf32> -> vector<16x32xf32>
    %39 = vector.extract_strided_slice %11 {offsets = [0, 8], sizes = [16, 8], strides = [1, 1]} : vector<16x96xf32> to vector<16x8xf32>
    %40 = vector.shape_cast %39 : vector<16x8xf32> to vector<2x8x8xf32>
    %41 = vector.extract_strided_slice %11 {offsets = [0, 40], sizes = [16, 8], strides = [1, 1]} : vector<16x96xf32> to vector<16x8xf32>
    %42 = vector.shape_cast %41 : vector<16x8xf32> to vector<2x8x8xf32>
    %43 = vector.extract_strided_slice %11 {offsets = [0, 72], sizes = [16, 8], strides = [1, 1]} : vector<16x96xf32> to vector<16x8xf32>
    %44 = vector.shape_cast %43 : vector<16x8xf32> to vector<2x8x8xf32>
    "tpu.trace_start"() <{level = 10 : i32, message = "bqd,bkd->bqk"}> : () -> ()
    %cst_19 = arith.constant dense<0.000000e+00> : vector<2x8x8xf32>
    %45 = tpu.matmul %40, %42, %cst_19 {dimension_numbers = #tpu.dot_dimension_numbers<[2], [2], [1], [1], [0, 0, 0, 1, 1, 1], [0], [0]>} : vector<2x8x8xf32>, vector<2x8x8xf32>, vector<2x8x8xf32> -> vector<2x8x8xf32>
    "tpu.trace_stop"() : () -> ()
    %cst_20 = arith.constant 0.353553385 : f32
    %46 = vector.broadcast %cst_20 : f32 to vector<2x8x8xf32>
    %47 = arith.mulf %45, %46 : vector<2x8x8xf32>
    %48 = vector.shape_cast %4 : vector<2x8xf32> to vector<2x1x8xf32>
    %49 = vector.broadcast %48 : vector<2x1x8xf32> to vector<2x8x8xf32>
    %50 = arith.addf %47, %49 : vector<2x8x8xf32>
    %cst_21 = arith.constant dense<0xFF800000> : vector<2x8xf32>
    %51 = vector.multi_reduction <maximumf>, %50, %cst_21 [2] : vector<2x8x8xf32> to vector<2x8xf32>
    %52 = vector.shape_cast %51 : vector<2x8xf32> to vector<2x8x1xf32>
    %53 = vector.broadcast %52 : vector<2x8x1xf32> to vector<2x8x8xf32>
    %54 = arith.subf %50, %53 : vector<2x8x8xf32>
    %55 = math.exp %54 : vector<2x8x8xf32>
    %cst_22 = arith.constant dense<0.000000e+00> : vector<2x8xf32>
    %56 = vector.multi_reduction <add>, %55, %cst_22 [2] : vector<2x8x8xf32> to vector<2x8xf32>
    %57 = vector.shape_cast %56 : vector<2x8xf32> to vector<2x8x1xf32>
    %58 = tpu.reciprocal %57 {approx = true} : vector<2x8x1xf32> -> vector<2x8x1xf32>
    %59 = vector.broadcast %58 : vector<2x8x1xf32> to vector<2x8x8xf32>
    %60 = arith.mulf %55, %59 : vector<2x8x8xf32>
    "tpu.trace_start"() <{level = 10 : i32, message = "bqk,bkd->bqd"}> : () -> ()
    %cst_23 = arith.constant dense<0.000000e+00> : vector<2x8x8xf32>
    %61 = tpu.matmul %60, %44, %cst_23 {dimension_numbers = #tpu.dot_dimension_numbers<[2], [1], [1], [2], [0, 0, 0, 1, 1, 2], [0], [0]>} : vector<2x8x8xf32>, vector<2x8x8xf32>, vector<2x8x8xf32> -> vector<2x8x8xf32>
    "tpu.trace_stop"() : () -> ()
    %62 = vector.shape_cast %61 : vector<2x8x8xf32> to vector<16x8xf32>
    %c0_24 = arith.constant 0 : index
    %c8 = arith.constant 8 : index
    %c0_25 = arith.constant 0 : index
    %63 = vector.load %arg7[%c0_24, %c8, %c0_25] : memref<1x32x32xf32, #tpu.memory_space<vmem>>, vector<1x8x32xf32>
    %64 = vector.shape_cast %63 : vector<1x8x32xf32> to vector<8x32xf32>
    %cst_26 = arith.constant dense<0.000000e+00> : vector<16x32xf32>
    %65 = tpu.matmul %62, %64, %cst_26 {dimension_numbers = #tpu.dot_dimension_numbers<[1], [0], [0], [1], [0, 0, 1, 1], [], []>} : vector<16x8xf32>, vector<8x32xf32>, vector<16x32xf32> -> vector<16x32xf32>
    %66 = arith.addf %38, %65 : vector<16x32xf32>
    %67 = vector.extract_strided_slice %11 {offsets = [0, 16], sizes = [16, 8], strides = [1, 1]} : vector<16x96xf32> to vector<16x8xf32>
    %68 = vector.shape_cast %67 : vector<16x8xf32> to vector<2x8x8xf32>
    %69 = vector.extract_strided_slice %11 {offsets = [0, 48], sizes = [16, 8], strides = [1, 1]} : vector<16x96xf32> to vector<16x8xf32>
    %70 = vector.shape_cast %69 : vector<16x8xf32> to vector<2x8x8xf32>
    %71 = vector.extract_strided_slice %11 {offsets = [0, 80], sizes = [16, 8], strides = [1, 1]} : vector<16x96xf32> to vector<16x8xf32>
    %72 = vector.shape_cast %71 : vector<16x8xf32> to vector<2x8x8xf32>
    "tpu.trace_start"() <{level = 10 : i32, message = "bqd,bkd->bqk"}> : () -> ()
    %cst_27 = arith.constant dense<0.000000e+00> : vector<2x8x8xf32>
    %73 = tpu.matmul %68, %70, %cst_27 {dimension_numbers = #tpu.dot_dimension_numbers<[2], [2], [1], [1], [0, 0, 0, 1, 1, 1], [0], [0]>} : vector<2x8x8xf32>, vector<2x8x8xf32>, vector<2x8x8xf32> -> vector<2x8x8xf32>
    "tpu.trace_stop"() : () -> ()
    %cst_28 = arith.constant 0.353553385 : f32
    %74 = vector.broadcast %cst_28 : f32 to vector<2x8x8xf32>
    %75 = arith.mulf %73, %74 : vector<2x8x8xf32>
    %76 = vector.shape_cast %4 : vector<2x8xf32> to vector<2x1x8xf32>
    %77 = vector.broadcast %76 : vector<2x1x8xf32> to vector<2x8x8xf32>
    %78 = arith.addf %75, %77 : vector<2x8x8xf32>
    %cst_29 = arith.constant dense<0xFF800000> : vector<2x8xf32>
    %79 = vector.multi_reduction <maximumf>, %78, %cst_29 [2] : vector<2x8x8xf32> to vector<2x8xf32>
    %80 = vector.shape_cast %79 : vector<2x8xf32> to vector<2x8x1xf32>
    %81 = vector.broadcast %80 : vector<2x8x1xf32> to vector<2x8x8xf32>
    %82 = arith.subf %78, %81 : vector<2x8x8xf32>
    %83 = math.exp %82 : vector<2x8x8xf32>
    %cst_30 = arith.constant dense<0.000000e+00> : vector<2x8xf32>
    %84 = vector.multi_reduction <add>, %83, %cst_30 [2] : vector<2x8x8xf32> to vector<2x8xf32>
    %85 = vector.shape_cast %84 : vector<2x8xf32> to vector<2x8x1xf32>
    %86 = tpu.reciprocal %85 {approx = true} : vector<2x8x1xf32> -> vector<2x8x1xf32>
    %87 = vector.broadcast %86 : vector<2x8x1xf32> to vector<2x8x8xf32>
    %88 = arith.mulf %83, %87 : vector<2x8x8xf32>
    "tpu.trace_start"() <{level = 10 : i32, message = "bqk,bkd->bqd"}> : () -> ()
    %cst_31 = arith.constant dense<0.000000e+00> : vector<2x8x8xf32>
    %89 = tpu.matmul %88, %72, %cst_31 {dimension_numbers = #tpu.dot_dimension_numbers<[2], [1], [1], [2], [0, 0, 0, 1, 1, 2], [0], [0]>} : vector<2x8x8xf32>, vector<2x8x8xf32>, vector<2x8x8xf32> -> vector<2x8x8xf32>
    "tpu.trace_stop"() : () -> ()
    %90 = vector.shape_cast %89 : vector<2x8x8xf32> to vector<16x8xf32>
    %c0_32 = arith.constant 0 : index
    %c16 = arith.constant 16 : index
    %c0_33 = arith.constant 0 : index
    %91 = vector.load %arg7[%c0_32, %c16, %c0_33] : memref<1x32x32xf32, #tpu.memory_space<vmem>>, vector<1x8x32xf32>
    %92 = vector.shape_cast %91 : vector<1x8x32xf32> to vector<8x32xf32>
    %cst_34 = arith.constant dense<0.000000e+00> : vector<16x32xf32>
    %93 = tpu.matmul %90, %92, %cst_34 {dimension_numbers = #tpu.dot_dimension_numbers<[1], [0], [0], [1], [0, 0, 1, 1], [], []>} : vector<16x8xf32>, vector<8x32xf32>, vector<16x32xf32> -> vector<16x32xf32>
    %94 = arith.addf %66, %93 : vector<16x32xf32>
    %95 = vector.extract_strided_slice %11 {offsets = [0, 24], sizes = [16, 8], strides = [1, 1]} : vector<16x96xf32> to vector<16x8xf32>
    %96 = vector.shape_cast %95 : vector<16x8xf32> to vector<2x8x8xf32>
    %97 = vector.extract_strided_slice %11 {offsets = [0, 56], sizes = [16, 8], strides = [1, 1]} : vector<16x96xf32> to vector<16x8xf32>
    %98 = vector.shape_cast %97 : vector<16x8xf32> to vector<2x8x8xf32>
    %99 = vector.extract_strided_slice %11 {offsets = [0, 88], sizes = [16, 8], strides = [1, 1]} : vector<16x96xf32> to vector<16x8xf32>
    %100 = vector.shape_cast %99 : vector<16x8xf32> to vector<2x8x8xf32>
    "tpu.trace_start"() <{level = 10 : i32, message = "bqd,bkd->bqk"}> : () -> ()
    %cst_35 = arith.constant dense<0.000000e+00> : vector<2x8x8xf32>
    %101 = tpu.matmul %96, %98, %cst_35 {dimension_numbers = #tpu.dot_dimension_numbers<[2], [2], [1], [1], [0, 0, 0, 1, 1, 1], [0], [0]>} : vector<2x8x8xf32>, vector<2x8x8xf32>, vector<2x8x8xf32> -> vector<2x8x8xf32>
    "tpu.trace_stop"() : () -> ()
    %cst_36 = arith.constant 0.353553385 : f32
    %102 = vector.broadcast %cst_36 : f32 to vector<2x8x8xf32>
    %103 = arith.mulf %101, %102 : vector<2x8x8xf32>
    %104 = vector.shape_cast %4 : vector<2x8xf32> to vector<2x1x8xf32>
    %105 = vector.broadcast %104 : vector<2x1x8xf32> to vector<2x8x8xf32>
    %106 = arith.addf %103, %105 : vector<2x8x8xf32>
    %cst_37 = arith.constant dense<0xFF800000> : vector<2x8xf32>
    %107 = vector.multi_reduction <maximumf>, %106, %cst_37 [2] : vector<2x8x8xf32> to vector<2x8xf32>
    %108 = vector.shape_cast %107 : vector<2x8xf32> to vector<2x8x1xf32>
    %109 = vector.broadcast %108 : vector<2x8x1xf32> to vector<2x8x8xf32>
    %110 = arith.subf %106, %109 : vector<2x8x8xf32>
    %111 = math.exp %110 : vector<2x8x8xf32>
    %cst_38 = arith.constant dense<0.000000e+00> : vector<2x8xf32>
    %112 = vector.multi_reduction <add>, %111, %cst_38 [2] : vector<2x8x8xf32> to vector<2x8xf32>
    %113 = vector.shape_cast %112 : vector<2x8xf32> to vector<2x8x1xf32>
    %114 = tpu.reciprocal %113 {approx = true} : vector<2x8x1xf32> -> vector<2x8x1xf32>
    %115 = vector.broadcast %114 : vector<2x8x1xf32> to vector<2x8x8xf32>
    %116 = arith.mulf %111, %115 : vector<2x8x8xf32>
    "tpu.trace_start"() <{level = 10 : i32, message = "bqk,bkd->bqd"}> : () -> ()
    %cst_39 = arith.constant dense<0.000000e+00> : vector<2x8x8xf32>
    %117 = tpu.matmul %116, %100, %cst_39 {dimension_numbers = #tpu.dot_dimension_numbers<[2], [1], [1], [2], [0, 0, 0, 1, 1, 2], [0], [0]>} : vector<2x8x8xf32>, vector<2x8x8xf32>, vector<2x8x8xf32> -> vector<2x8x8xf32>
    "tpu.trace_stop"() : () -> ()
    %118 = vector.shape_cast %117 : vector<2x8x8xf32> to vector<16x8xf32>
    %c0_40 = arith.constant 0 : index
    %c24 = arith.constant 24 : index
    %c0_41 = arith.constant 0 : index
    %119 = vector.load %arg7[%c0_40, %c24, %c0_41] : memref<1x32x32xf32, #tpu.memory_space<vmem>>, vector<1x8x32xf32>
    %120 = vector.shape_cast %119 : vector<1x8x32xf32> to vector<8x32xf32>
    %cst_42 = arith.constant dense<0.000000e+00> : vector<16x32xf32>
    %121 = tpu.matmul %118, %120, %cst_42 {dimension_numbers = #tpu.dot_dimension_numbers<[1], [0], [0], [1], [0, 0, 1, 1], [], []>} : vector<16x8xf32>, vector<8x32xf32>, vector<16x32xf32> -> vector<16x32xf32>
    %122 = arith.addf %94, %121 : vector<16x32xf32>
    %c0_43 = arith.constant 0 : index
    %c0_44 = arith.constant 0 : index
    %c0_45 = arith.constant 0 : index
    %123 = vector.load %arg8[%c0_43, %c0_44, %c0_45] : memref<1x1x32xf32, #tpu.memory_space<vmem>>, vector<1x1x32xf32>
    %124 = vector.shape_cast %123 : vector<1x1x32xf32> to vector<1x32xf32>
    %125 = vector.broadcast %124 : vector<1x32xf32> to vector<16x32xf32>
    %126 = arith.addf %122, %125 : vector<16x32xf32>
    %127 = arith.addf %126, %3 : vector<16x32xf32>
    %c0_46 = arith.constant 0 : index
    %c0_47 = arith.constant 0 : index
    %c0_48 = arith.constant 0 : index
    %128 = vector.load %arg9[%c0_46, %c0_47, %c0_48] : memref<1x1x32xf32, #tpu.memory_space<vmem>>, vector<1x1x32xf32>
    %129 = vector.shape_cast %128 : vector<1x1x32xf32> to vector<1x32xf32>
    %c0_49 = arith.constant 0 : index
    %c0_50 = arith.constant 0 : index
    %c0_51 = arith.constant 0 : index
    %130 = vector.load %arg10[%c0_49, %c0_50, %c0_51] : memref<1x1x32xf32, #tpu.memory_space<vmem>>, vector<1x1x32xf32>
    %131 = vector.shape_cast %130 : vector<1x1x32xf32> to vector<1x32xf32>
    %cst_52 = arith.constant dense<0.000000e+00> : vector<16xf32>
    %132 = vector.multi_reduction <add>, %127, %cst_52 [1] : vector<16x32xf32> to vector<16xf32>
    %133 = vector.shape_cast %132 : vector<16xf32> to vector<16x1xf32>
    %cst_53 = arith.constant 3.200000e+01 : f32
    %134 = vector.broadcast %cst_53 : f32 to vector<16x1xf32>
    %135 = arith.divf %133, %134 : vector<16x1xf32>
    %136 = vector.broadcast %135 : vector<16x1xf32> to vector<16x32xf32>
    %137 = arith.subf %127, %136 : vector<16x32xf32>
    %138 = arith.mulf %137, %137 : vector<16x32xf32>
    %cst_54 = arith.constant dense<0.000000e+00> : vector<16xf32>
    %139 = vector.multi_reduction <add>, %138, %cst_54 [1] : vector<16x32xf32> to vector<16xf32>
    %140 = vector.shape_cast %139 : vector<16xf32> to vector<16x1xf32>
    %cst_55 = arith.constant 3.200000e+01 : f32
    %141 = vector.broadcast %cst_55 : f32 to vector<16x1xf32>
    %142 = arith.divf %140, %141 : vector<16x1xf32>
    %cst_56 = arith.constant 9.99999996E-13 : f32
    %143 = vector.broadcast %cst_56 : f32 to vector<16x1xf32>
    %144 = arith.addf %142, %143 : vector<16x1xf32>
    %145 = math.rsqrt %144 : vector<16x1xf32>
    %146 = vector.broadcast %145 : vector<16x1xf32> to vector<16x32xf32>
    %147 = arith.mulf %137, %146 : vector<16x32xf32>
    %148 = vector.broadcast %129 : vector<1x32xf32> to vector<16x32xf32>
    %149 = arith.mulf %147, %148 : vector<16x32xf32>
    %150 = vector.broadcast %131 : vector<1x32xf32> to vector<16x32xf32>
    %151 = arith.addf %149, %150 : vector<16x32xf32>
    %c0_57 = arith.constant 0 : index
    %c0_58 = arith.constant 0 : index
    %c0_59 = arith.constant 0 : index
    %152 = vector.load %arg11[%c0_57, %c0_58, %c0_59] : memref<1x32x64xf32, #tpu.memory_space<vmem>>, vector<1x32x64xf32>
    %153 = vector.shape_cast %152 : vector<1x32x64xf32> to vector<32x64xf32>
    %cst_60 = arith.constant dense<0.000000e+00> : vector<16x64xf32>
    %154 = tpu.matmul %151, %153, %cst_60 {dimension_numbers = #tpu.dot_dimension_numbers<[1], [0], [0], [1], [0, 0, 1, 1], [], []>} : vector<16x32xf32>, vector<32x64xf32>, vector<16x64xf32> -> vector<16x64xf32>
    %c0_61 = arith.constant 0 : index
    %c0_62 = arith.constant 0 : index
    %c0_63 = arith.constant 0 : index
    %155 = vector.load %arg12[%c0_61, %c0_62, %c0_63] : memref<1x1x64xf32, #tpu.memory_space<vmem>>, vector<1x1x64xf32>
    %156 = vector.shape_cast %155 : vector<1x1x64xf32> to vector<1x64xf32>
    %157 = vector.broadcast %156 : vector<1x64xf32> to vector<16x64xf32>
    %158 = arith.addf %154, %157 : vector<16x64xf32>
    %cst_64 = arith.constant 5.000000e-01 : f32
    %159 = vector.broadcast %cst_64 : f32 to vector<16x64xf32>
    %160 = arith.mulf %159, %158 : vector<16x64xf32>
    %cst_65 = arith.constant 0.707106769 : f32
    %161 = vector.broadcast %cst_65 : f32 to vector<16x64xf32>
    %162 = arith.mulf %158, %161 : vector<16x64xf32>
    %163 = math.absf %162 : vector<16x64xf32>
    %cst_66 = arith.constant 0.327591091 : f32
    %164 = vector.broadcast %cst_66 : f32 to vector<16x64xf32>
    %165 = arith.mulf %164, %163 : vector<16x64xf32>
    %cst_67 = arith.constant 1.000000e+00 : f32
    %166 = vector.broadcast %cst_67 : f32 to vector<16x64xf32>
    %167 = arith.addf %166, %165 : vector<16x64xf32>
    %cst_68 = arith.constant 1.000000e+00 : f32
    %168 = vector.broadcast %cst_68 : f32 to vector<16x64xf32>
    %169 = arith.divf %168, %167 : vector<16x64xf32>
    %cst_69 = arith.constant 1.06140542 : f32
    %170 = vector.broadcast %cst_69 : f32 to vector<16x64xf32>
    %171 = arith.mulf %169, %170 : vector<16x64xf32>
    %cst_70 = arith.constant -1.45315206 : f32
    %172 = vector.broadcast %cst_70 : f32 to vector<16x64xf32>
    %173 = arith.addf %172, %171 : vector<16x64xf32>
    %174 = arith.mulf %169, %173 : vector<16x64xf32>
    %cst_71 = arith.constant 1.42141378 : f32
    %175 = vector.broadcast %cst_71 : f32 to vector<16x64xf32>
    %176 = arith.addf %175, %174 : vector<16x64xf32>
    %177 = arith.mulf %169, %176 : vector<16x64xf32>
    %cst_72 = arith.constant -0.284496725 : f32
    %178 = vector.broadcast %cst_72 : f32 to vector<16x64xf32>
    %179 = arith.addf %178, %177 : vector<16x64xf32>
    %180 = arith.mulf %169, %179 : vector<16x64xf32>
    %cst_73 = arith.constant 0.254829586 : f32
    %181 = vector.broadcast %cst_73 : f32 to vector<16x64xf32>
    %182 = arith.addf %181, %180 : vector<16x64xf32>
    %183 = arith.mulf %169, %182 : vector<16x64xf32>
    %cst_74 = arith.constant 0.000000e+00 : f32
    %184 = vector.broadcast %cst_74 : f32 to vector<16x64xf32>
    %185 = arith.subf %184, %163 : vector<16x64xf32>
    %186 = arith.mulf %185, %163 : vector<16x64xf32>
    %187 = math.exp %186 : vector<16x64xf32>
    %188 = arith.mulf %183, %187 : vector<16x64xf32>
    %cst_75 = arith.constant 1.000000e+00 : f32
    %189 = vector.broadcast %cst_75 : f32 to vector<16x64xf32>
    %190 = arith.subf %189, %188 : vector<16x64xf32>
    %cst_76 = arith.constant 0.000000e+00 : f32
    %191 = vector.broadcast %cst_76 : f32 to vector<16x64xf32>
    %192 = arith.cmpf oge, %162, %191 : vector<16x64xf32>
    %cst_77 = arith.constant 0.000000e+00 : f32
    %193 = vector.broadcast %cst_77 : f32 to vector<16x64xf32>
    %194 = arith.subf %193, %190 : vector<16x64xf32>
    %195 = arith.select %192, %190, %194 : vector<16x64xi1>, vector<16x64xf32>
    %cst_78 = arith.constant 1.000000e+00 : f32
    %196 = vector.broadcast %cst_78 : f32 to vector<16x64xf32>
    %197 = arith.addf %196, %195 : vector<16x64xf32>
    %198 = arith.mulf %160, %197 : vector<16x64xf32>
    %c0_79 = arith.constant 0 : index
    %c0_80 = arith.constant 0 : index
    %c0_81 = arith.constant 0 : index
    %199 = vector.load %arg13[%c0_79, %c0_80, %c0_81] : memref<1x64x32xf32, #tpu.memory_space<vmem>>, vector<1x64x32xf32>
    %200 = vector.shape_cast %199 : vector<1x64x32xf32> to vector<64x32xf32>
    %cst_82 = arith.constant dense<0.000000e+00> : vector<16x32xf32>
    %201 = tpu.matmul %198, %200, %cst_82 {dimension_numbers = #tpu.dot_dimension_numbers<[1], [0], [0], [1], [0, 0, 1, 1], [], []>} : vector<16x64xf32>, vector<64x32xf32>, vector<16x32xf32> -> vector<16x32xf32>
    %c0_83 = arith.constant 0 : index
    %c0_84 = arith.constant 0 : index
    %c0_85 = arith.constant 0 : index
    %202 = vector.load %arg14[%c0_83, %c0_84, %c0_85] : memref<1x1x32xf32, #tpu.memory_space<vmem>>, vector<1x1x32xf32>
    %203 = vector.shape_cast %202 : vector<1x1x32xf32> to vector<1x32xf32>
    %204 = vector.broadcast %203 : vector<1x32xf32> to vector<16x32xf32>
    %205 = arith.addf %201, %204 : vector<16x32xf32>
    %206 = arith.addf %205, %151 : vector<16x32xf32>
    %c0_86 = arith.constant 0 : index
    %c0_87 = arith.constant 0 : index
    %c0_88 = arith.constant 0 : index
    %207 = vector.load %arg15[%c0_86, %c0_87, %c0_88] : memref<1x1x32xf32, #tpu.memory_space<vmem>>, vector<1x1x32xf32>
    %208 = vector.shape_cast %207 : vector<1x1x32xf32> to vector<1x32xf32>
    %c0_89 = arith.constant 0 : index
    %c0_90 = arith.constant 0 : index
    %c0_91 = arith.constant 0 : index
    %209 = vector.load %arg16[%c0_89, %c0_90, %c0_91] : memref<1x1x32xf32, #tpu.memory_space<vmem>>, vector<1x1x32xf32>
    %210 = vector.shape_cast %209 : vector<1x1x32xf32> to vector<1x32xf32>
    %cst_92 = arith.constant dense<0.000000e+00> : vector<16xf32>
    %211 = vector.multi_reduction <add>, %206, %cst_92 [1] : vector<16x32xf32> to vector<16xf32>
    %212 = vector.shape_cast %211 : vector<16xf32> to vector<16x1xf32>
    %cst_93 = arith.constant 3.200000e+01 : f32
    %213 = vector.broadcast %cst_93 : f32 to vector<16x1xf32>
    %214 = arith.divf %212, %213 : vector<16x1xf32>
    %215 = vector.broadcast %214 : vector<16x1xf32> to vector<16x32xf32>
    %216 = arith.subf %206, %215 : vector<16x32xf32>
    %217 = arith.mulf %216, %216 : vector<16x32xf32>
    %cst_94 = arith.constant dense<0.000000e+00> : vector<16xf32>
    %218 = vector.multi_reduction <add>, %217, %cst_94 [1] : vector<16x32xf32> to vector<16xf32>
    %219 = vector.shape_cast %218 : vector<16xf32> to vector<16x1xf32>
    %cst_95 = arith.constant 3.200000e+01 : f32
    %220 = vector.broadcast %cst_95 : f32 to vector<16x1xf32>
    %221 = arith.divf %219, %220 : vector<16x1xf32>
    %cst_96 = arith.constant 9.99999996E-13 : f32
    %222 = vector.broadcast %cst_96 : f32 to vector<16x1xf32>
    %223 = arith.addf %221, %222 : vector<16x1xf32>
    %224 = math.rsqrt %223 : vector<16x1xf32>
    %225 = vector.broadcast %224 : vector<16x1xf32> to vector<16x32xf32>
    %226 = arith.mulf %216, %225 : vector<16x32xf32>
    %227 = vector.broadcast %208 : vector<1x32xf32> to vector<16x32xf32>
    %228 = arith.mulf %226, %227 : vector<16x32xf32>
    %229 = vector.broadcast %210 : vector<1x32xf32> to vector<16x32xf32>
    %230 = arith.addf %228, %229 : vector<16x32xf32>
    %c0_97 = arith.constant 0 : index
    %c0_98 = arith.constant 0 : index
    %231 = vector.load %arg19[%c0_97, %c0_98] : memref<16x32xf32, #tpu.memory_space<vmem>>, vector<16x32xf32>
    tpu.vector_store %arg19[%c0_97, %c0_98], %230 {strides = array<i32>} : memref<16x32xf32, #tpu.memory_space<vmem>>, vector<16x32xf32>,
    %c1_i32 = arith.constant 1 : i32
    %232 = arith.cmpi eq, %arg0, %c1_i32 : i32
    %233 = arith.extui %232 : i1 to i32
    %c0_i32_99 = arith.constant 0 : i32
    %234 = arith.cmpi ne, %233, %c0_i32_99 : i32
    scf.if %234 {
      %235 = vector.shape_cast %230 : vector<16x32xf32> to vector<2x8x32xf32>
      %236 = vector.extract_strided_slice %235 {offsets = [0, 0, 0], sizes = [2, 1, 32], strides = [1, 1, 1]} : vector<2x8x32xf32> to vector<2x1x32xf32>
      %237 = vector.shape_cast %236 : vector<2x1x32xf32> to vector<2x32xf32>
      %c0_100 = arith.constant 0 : index
      %c0_101 = arith.constant 0 : index
      %238 = vector.load %arg17[%c0_100, %c0_101] : memref<32x32xf32, #tpu.memory_space<vmem>>, vector<32x32xf32>
      %cst_102 = arith.constant dense<0.000000e+00> : vector<2x32xf32>
      %239 = tpu.matmul %237, %238, %cst_102 {dimension_numbers = #tpu.dot_dimension_numbers<[1], [0], [0], [1], [0, 0, 1, 1], [], []>} : vector<2x32xf32>, vector<32x32xf32>, vector<2x32xf32> -> vector<2x32xf32>
      %c0_103 = arith.constant 0 : index
      %c0_104 = arith.constant 0 : index
      %240 = vector.load %arg18[%c0_103, %c0_104] : memref<1x32xf32, #tpu.memory_space<vmem>>, vector<1x32xf32>
      %241 = vector.broadcast %240 : vector<1x32xf32> to vector<2x32xf32>
      %242 = arith.addf %239, %241 : vector<2x32xf32>
      %243 = math.tanh %242 : vector<2x32xf32>
      %c0_105 = arith.constant 0 : index
      %c0_106 = arith.constant 0 : index
      %244 = vector.load %arg20[%c0_105, %c0_106] : memref<2x32xf32, #tpu.memory_space<vmem>>, vector<2x32xf32>
      tpu.vector_store %arg20[%c0_105, %c0_106], %243 {strides = array<i32>} : memref<2x32xf32, #tpu.memory_space<vmem>>, vector<2x32xf32>,
    } else {
    }
    return
  }
  func.func @transform_0(%arg0: i32) -> (i32, i32) {
    %c0_i32 = arith.constant 0 : i32
    %c0_i32_0 = arith.constant 0 : i32
    %c0_i32_1 = arith.constant 0 : i32
    return %c0_i32, %c0_i32_0 : i32, i32
  }
  func.func @transform_1(%arg0: i32) -> (i32, i32) {
    %c0_i32 = arith.constant 0 : i32
    %c0_i32_0 = arith.constant 0 : i32
    %c0_i32_1 = arith.constant 0 : i32
    return %c0_i32, %c0_i32_0 : i32, i32
  }
  func.func @transform_2(%arg0: i32) -> (i32, i32) {
    %c0_i32 = arith.constant 0 : i32
    %c0_i32_0 = arith.constant 0 : i32
    %c0_i32_1 = arith.constant 0 : i32
    return %c0_i32, %c0_i32_0 : i32, i32
  }
  func.func @transform_3(%arg0: i32) -> (i32, i32) {
    %c0_i32 = arith.constant 0 : i32
    %c0_i32_0 = arith.constant 0 : i32
    %c0_i32_1 = arith.constant 0 : i32
    return %c0_i32, %c0_i32_0 : i32, i32
  }
  func.func @transform_4(%arg0: i32) -> (i32, i32, i32) {
    %c0_i32 = arith.constant 0 : i32
    %c0_i32_0 = arith.constant 0 : i32
    %c0_i32_1 = arith.constant 0 : i32
    return %arg0, %c0_i32, %c0_i32_0 : i32, i32, i32
  }
  func.func @transform_5(%arg0: i32) -> (i32, i32, i32) {
    %c0_i32 = arith.constant 0 : i32
    %c0_i32_0 = arith.constant 0 : i32
    %c0_i32_1 = arith.constant 0 : i32
    return %arg0, %c0_i32, %c0_i32_0 : i32, i32, i32
  }
  func.func @transform_6(%arg0: i32) -> (i32, i32, i32) {
    %c0_i32 = arith.constant 0 : i32
    %c0_i32_0 = arith.constant 0 : i32
    %c0_i32_1 = arith.constant 0 : i32
    return %arg0, %c0_i32, %c0_i32_0 : i32, i32, i32
  }
  func.func @transform_7(%arg0: i32) -> (i32, i32, i32) {
    %c0_i32 = arith.constant 0 : i32
    %c0_i32_0 = arith.constant 0 : i32
    %c0_i32_1 = arith.constant 0 : i32
    return %arg0, %c0_i32, %c0_i32_0 : i32, i32, i32
  }
  func.func @transform_8(%arg0: i32) -> (i32, i32, i32) {
    %c0_i32 = arith.constant 0 : i32
    %c0_i32_0 = arith.constant 0 : i32
    %c0_i32_1 = arith.constant 0 : i32
    return %arg0, %c0_i32, %c0_i32_0 : i32, i32, i32
  }
  func.func @transform_9(%arg0: i32) -> (i32, i32, i32) {
    %c0_i32 = arith.constant 0 : i32
    %c0_i32_0 = arith.constant 0 : i32
    %c0_i32_1 = arith.constant 0 : i32
    return %arg0, %c0_i32, %c0_i32_0 : i32, i32, i32
  }
  func.func @transform_10(%arg0: i32) -> (i32, i32, i32) {
    %c0_i32 = arith.constant 0 : i32
    %c0_i32_0 = arith.constant 0 : i32
    %c0_i32_1 = arith.constant 0 : i32
    return %arg0, %c0_i32, %c0_i32_0 : i32, i32, i32
  }
  func.func @transform_11(%arg0: i32) -> (i32, i32, i32) {
    %c0_i32 = arith.constant 0 : i32
    %c0_i32_0 = arith.constant 0 : i32
    %c0_i32_1 = arith.constant 0 : i32
    return %arg0, %c0_i32, %c0_i32_0 : i32, i32, i32
  }
  func.func @transform_12(%arg0: i32) -> (i32, i32, i32) {
    %c0_i32 = arith.constant 0 : i32
    %c0_i32_0 = arith.constant 0 : i32
    %c0_i32_1 = arith.constant 0 : i32
    return %arg0, %c0_i32, %c0_i32_0 : i32, i32, i32
  }
  func.func @transform_13(%arg0: i32) -> (i32, i32, i32) {
    %c0_i32 = arith.constant 0 : i32
    %c0_i32_0 = arith.constant 0 : i32
    %c0_i32_1 = arith.constant 0 : i32
    return %arg0, %c0_i32, %c0_i32_0 : i32, i32, i32
  }
  func.func @transform_14(%arg0: i32) -> (i32, i32, i32) {
    %c0_i32 = arith.constant 0 : i32
    %c0_i32_0 = arith.constant 0 : i32
    %c0_i32_1 = arith.constant 0 : i32
    return %arg0, %c0_i32, %c0_i32_0 : i32, i32, i32
  }
  func.func @transform_15(%arg0: i32) -> (i32, i32, i32) {
    %c0_i32 = arith.constant 0 : i32
    %c0_i32_0 = arith.constant 0 : i32
    %c0_i32_1 = arith.constant 0 : i32
    return %arg0, %c0_i32, %c0_i32_0 : i32, i32, i32
  }
  func.func @transform_16(%arg0: i32) -> (i32, i32) {
    %c0_i32 = arith.constant 0 : i32
    %c0_i32_0 = arith.constant 0 : i32
    %c0_i32_1 = arith.constant 0 : i32
    return %c0_i32, %c0_i32_0 : i32, i32
  }
  func.func @transform_17(%arg0: i32) -> (i32, i32) {
    %c0_i32 = arith.constant 0 : i32
    %c0_i32_0 = arith.constant 0 : i32
    %c0_i32_1 = arith.constant 0 : i32
    return %c0_i32, %c0_i32_0 : i32, i32
  }
  func.func @transform_18(%arg0: i32) -> (i32, i32) {
    %c0_i32 = arith.constant 0 : i32
    %c0_i32_0 = arith.constant 0 : i32
    %c0_i32_1 = arith.constant 0 : i32
    return %c0_i32, %c0_i32_0 : i32, i32
  }
  func.func @transform_19(%arg0: i32) -> (i32, i32) {
    %c0_i32 = arith.constant 0 : i32
    %c0_i32_0 = arith.constant 0 : i32
    %c0_i32_1 = arith.constant 0 : i32
    return %c0_i32, %c0_i32_0 : i32, i32
  }
}

</mosaic_0001>

<llo_original>
// kernel: bert_forward.1
$region0: #{bert_forward.1}
  #allocation0 [shape = 'u32[]', space=smem, size = 0x4, offset = 0x4, fixed_abs, tag = 'smem constant byte address 0x4 - core index']
  #allocation1 [shape = 'u32[144,128]{1,0:T(1,128)}', space=vmem, size = 0x12000, scoped, tag = 'internal scratch']
  %s0 = inlined_call_operand.vmem [shape: f32[16,32], index: 0, kind: input, shape index: {}]
  %s1 = inlined_call_operand.vmem [shape: f32[2,8], index: 1, kind: input, shape index: {}]
  %s2 = inlined_call_operand.vmem [shape: f32[1,32], index: 2, kind: input, shape index: {}]
  %s3 = inlined_call_operand.vmem [shape: f32[1,32], index: 3, kind: input, shape index: {}]
  %s4 = inlined_call_operand.vmem [shape: f32[2,32,96], index: 4, kind: input, shape index: {}]
  %s5 = inlined_call_operand.vmem [shape: f32[2,1,96], index: 5, kind: input, shape index: {}]
  %s6 = inlined_call_operand.vmem [shape: f32[2,32,32], index: 6, kind: input, shape index: {}]
  %s7 = inlined_call_operand.vmem [shape: f32[2,1,32], index: 7, kind: input, shape index: {}]
  %s8 = inlined_call_operand.vmem [shape: f32[2,1,32], index: 8, kind: input, shape index: {}]
  %s9 = inlined_call_operand.vmem [shape: f32[2,1,32], index: 9, kind: input, shape index: {}]
  %s10 = inlined_call_operand.vmem [shape: f32[2,32,64], index: 10, kind: input, shape index: {}]
  %s11 = inlined_call_operand.vmem [shape: f32[2,1,64], index: 11, kind: input, shape index: {}]
  %s12 = inlined_call_operand.vmem [shape: f32[2,64,32], index: 12, kind: input, shape index: {}]
  %s13 = inlined_call_operand.vmem [shape: f32[2,1,32], index: 13, kind: input, shape index: {}]
  %s14 = inlined_call_operand.vmem [shape: f32[2,1,32], index: 14, kind: input, shape index: {}]
  %s15 = inlined_call_operand.vmem [shape: f32[2,1,32], index: 15, kind: input, shape index: {}]
  %s16 = inlined_call_operand.vmem [shape: f32[32,32], index: 16, kind: input, shape index: {}]
  %s17 = inlined_call_operand.vmem [shape: f32[1,32], index: 17, kind: input, shape index: {}]
  %s18 = inlined_call_operand.hbm [shape: f32[16,32], index: 18, kind: output, shape index: {0}]
  %s19 = inlined_call_operand.hbm [shape: f32[2,32], index: 19, kind: output, shape index: {1}]
  %20 = xla_tuple %s18, %s19
  %s21 = sld [smem:[#allocation0]]
  $region121: #{bert_forward.1} parent=0
    _
  %s23 = ssub.s32 1, %s21
  %s24 = scalar_select 0, %s23, %s21
  $region1: #{bert_forward.1} parent=0
    #allocation2 [shape = 'u8[8192]{0}', space=vmem, size = 0x2000, scoped, tag = 'output window, operand 0, single buffered']
    #allocation3 [shape = 's32[2]{0}', space=sflag, size = 0x8, scoped, tag = 'scoped memory for bert_forward.1']
    #allocation4 [shape = 'u8[1024]{0}', space=vmem, size = 0x400, scoped, tag = 'output window, operand 1, single buffered']
    #allocation5 [shape = 's32[1]{0}', space=sflag, size = 0x4, scoped, tag = 'scoped memory for bert_forward.1']
    %25 = vsyncpa [#allocation3], 0
    %26 = vsyncpa [#allocation5], 0
    loop: start=0, step=1, limit=4
    $region2: #{bert_forward.1} parent=1 // loop_pre_header
      _
    $region3: #{bert_forward.1} parent=1 // loop_header
      %s28 = sphi 0, %s32
      %p29 = scmp.ge.s32.totalorder %s28, 4
      %s36 = sphi 0, %s36
      %s38 = sphi 0, %s36
      %s39 = sphi 0, %s38
      %s53 = sphi 0, %s39
      %s57 = sphi 0, %s57
      %s59 = sphi 0, %s57
      %s60 = sphi 0, %s59
      %s74 = sphi 0, %s60
      %s78 = sphi 0, %s78
      %s80 = sphi 0, %s78
      %s81 = sphi 0, %s80
      %s95 = sphi 0, %s81
      %s99 = sphi 0, %s99
      %s101 = sphi 0, %s99
      %s102 = sphi 0, %s101
      %s116 = sphi 0, %s102
      %s122 = sphi 0, %s124
      %s125 = sphi 0, %s122
      %s126 = sphi 0, %s125
      %s142 = sphi 0, %s126
      %s148 = sphi 0, %s150
      %s151 = sphi 0, %s148
      %s152 = sphi 0, %s151
      %s168 = sphi 0, %s152
      %s174 = sphi 0, %s176
      %s177 = sphi 0, %s174
      %s178 = sphi 0, %s177
      %s194 = sphi 0, %s178
      %s200 = sphi 0, %s202
      %s203 = sphi 0, %s200
      %s204 = sphi 0, %s203
      %s220 = sphi 0, %s204
      %s226 = sphi 0, %s228
      %s229 = sphi 0, %s226
      %s230 = sphi 0, %s229
      %s246 = sphi 0, %s230
      %s252 = sphi 0, %s254
      %s255 = sphi 0, %s252
      %s256 = sphi 0, %s255
      %s272 = sphi 0, %s256
      %s278 = sphi 0, %s280
      %s281 = sphi 0, %s278
      %s282 = sphi 0, %s281
      %s298 = sphi 0, %s282
      %s304 = sphi 0, %s306
      %s307 = sphi 0, %s304
      %s308 = sphi 0, %s307
      %s324 = sphi 0, %s308
      %s330 = sphi 0, %s332
      %s333 = sphi 0, %s330
      %s334 = sphi 0, %s333
      %s350 = sphi 0, %s334
      %s356 = sphi 0, %s358
      %s359 = sphi 0, %s356
      %s360 = sphi 0, %s359
      %s376 = sphi 0, %s360
      %s382 = sphi 0, %s384
      %s385 = sphi 0, %s382
      %s386 = sphi 0, %s385
      %s402 = sphi 0, %s386
      %s408 = sphi 0, %s410
      %s411 = sphi 0, %s408
      %s412 = sphi 0, %s411
      %s428 = sphi 0, %s412
      %s432 = sphi 0, %s432
      %s434 = sphi 0, %s432
      %s435 = sphi 0, %s434
      %s449 = sphi 0, %s435
      %s453 = sphi 0, %s453
      %s455 = sphi 0, %s453
      %s456 = sphi 0, %s455
      %s470 = sphi 0, %s456
      %s474 = sphi 0, %s474
      %s476 = sphi 0, %s474
      %s477 = sphi 0, %s476
      %s491 = sphi 0, %s477
      %s495 = sphi 0, %s495
      %s497 = sphi 0, %s495
      %s498 = sphi 0, %s497
      %s512 = sphi 0, %s498
    $region4: #{bert_forward.1} parent=1 // loop_header_branch
      %31 = sbr.rel (%p29) target = $region8
    $region5: #{bert_forward.1} parent=1 // loop_body
      %s33 = ssub.s32 %s28, 1
      %s34 = ssub.s32 %s28, 2
      %s35 = sadd.s32 %s28, 1
      %s37 = sadd.s32 %s36, 1
      %p40 = scmp.eq.s32.totalorder %s28, 1
      %p41 = scmp.ne.s32.totalorder %s36, %s38
      %p42 = scmp.eq.s32.totalorder %s28, 0
      %p43 = por %p41, %p42
      %p44 = scmp.ne.s32.totalorder %s36, %s38
      %p45 = scmp.eq.s32.totalorder %s33, 1
      %p46 = por %p44, %p45
      %p47 = scmp.ne.s32.totalorder %s38, %s39
      %p48 = scmp.eq.s32.totalorder %s33, 0
      %p49 = por %p47, %p48
      %p50 = scmp.ne.s32.totalorder %s38, %s39
      %p51 = scmp.eq.s32.totalorder %s34, 1
      %p52 = por %p50, %p51
      %p54 = scmp.ne.s32.totalorder %s39, %s53
      %p55 = scmp.eq.s32.totalorder %s34, 0
      %p56 = por %p54, %p55
      %s58 = sadd.s32 %s57, 1
      %p61 = scmp.eq.s32.totalorder %s28, 1
      %p62 = scmp.ne.s32.totalorder %s57, %s59
      %p63 = scmp.eq.s32.totalorder %s28, 0
      %p64 = por %p62, %p63
      %p65 = scmp.ne.s32.totalorder %s57, %s59
      %p66 = scmp.eq.s32.totalorder %s33, 1
      %p67 = por %p65, %p66
      %p68 = scmp.ne.s32.totalorder %s59, %s60
      %p69 = scmp.eq.s32.totalorder %s33, 0
      %p70 = por %p68, %p69
      %p71 = scmp.ne.s32.totalorder %s59, %s60
      %p72 = scmp.eq.s32.totalorder %s34, 1
      %p73 = por %p71, %p72
      %p75 = scmp.ne.s32.totalorder %s60, %s74
      %p76 = scmp.eq.s32.totalorder %s34, 0
      %p77 = por %p75, %p76
      %s79 = sadd.s32 %s78, 1
      %p82 = scmp.eq.s32.totalorder %s28, 1
      %p83 = scmp.ne.s32.totalorder %s78, %s80
      %p84 = scmp.eq.s32.totalorder %s28, 0
      %p85 = por %p83, %p84
      %p86 = scmp.ne.s32.totalorder %s78, %s80
      %p87 = scmp.eq.s32.totalorder %s33, 1
      %p88 = por %p86, %p87
      %p89 = scmp.ne.s32.totalorder %s80, %s81
      %p90 = scmp.eq.s32.totalorder %s33, 0
      %p91 = por %p89, %p90
      %p92 = scmp.ne.s32.totalorder %s80, %s81
      %p93 = scmp.eq.s32.totalorder %s34, 1
      %p94 = por %p92, %p93
      %p96 = scmp.ne.s32.totalorder %s81, %s95
      %p97 = scmp.eq.s32.totalorder %s34, 0
      %p98 = por %p96, %p97
      %s100 = sadd.s32 %s99, 1
      %p103 = scmp.eq.s32.totalorder %s28, 1
      %p104 = scmp.ne.s32.totalorder %s99, %s101
      %p105 = scmp.eq.s32.totalorder %s28, 0
      %p106 = por %p104, %p105
      %p107 = scmp.ne.s32.totalorder %s99, %s101
      %p108 = scmp.eq.s32.totalorder %s33, 1
      %p109 = por %p107, %p108
      %p110 = scmp.ne.s32.totalorder %s101, %s102
      %p111 = scmp.eq.s32.totalorder %s33, 0
      %p112 = por %p110, %p111
      %p113 = scmp.ne.s32.totalorder %s101, %s102
      %p114 = scmp.eq.s32.totalorder %s34, 1
      %p115 = por %p113, %p114
      %p117 = scmp.ne.s32.totalorder %s102, %s116
      %p118 = scmp.eq.s32.totalorder %s34, 0
      %p119 = por %p117, %p118
      %s120 = ssub.s32 %s28, %s35
      %p121 = scmp.eq.s32.totalorder %s120, 0
      %s123 = sadd.s32 %s122, 1
      %s124 = scalar_select %p121, %s122, %s123
      %p127 = pneg %p121
      %p128 = scmp.eq.s32.totalorder %s28, 1
      %p129 = por %p127, %p128
      %p130 = scmp.ne.s32.totalorder %s122, %s125
      %p131 = scmp.eq.s32.totalorder %s28, 0
      %p132 = por %p130, %p131
      %p133 = scmp.ne.s32.totalorder %s122, %s125
      %p134 = scmp.eq.s32.totalorder %s33, 1
      %p135 = por %p133, %p134
      %p136 = scmp.ne.s32.totalorder %s125, %s126
      %p137 = scmp.eq.s32.totalorder %s33, 0
      %p138 = por %p136, %p137
      %p139 = scmp.ne.s32.totalorder %s125, %s126
      %p140 = scmp.eq.s32.totalorder %s34, 1
      %p141 = por %p139, %p140
      %p143 = scmp.ne.s32.totalorder %s126, %s142
      %p144 = scmp.eq.s32.totalorder %s34, 0
      %p145 = por %p143, %p144
      %s146 = ssub.s32 %s28, %s35
      %p147 = scmp.eq.s32.totalorder %s146, 0
      %s149 = sadd.s32 %s148, 1
      %s150 = scalar_select %p147, %s148, %s149
      %p153 = pneg %p147
      %p154 = scmp.eq.s32.totalorder %s28, 1
      %p155 = por %p153, %p154
      %p156 = scmp.ne.s32.totalorder %s148, %s151
      %p157 = scmp.eq.s32.totalorder %s28, 0
      %p158 = por %p156, %p157
      %p159 = scmp.ne.s32.totalorder %s148, %s151
      %p160 = scmp.eq.s32.totalorder %s33, 1
      %p161 = por %p159, %p160
      %p162 = scmp.ne.s32.totalorder %s151, %s152
      %p163 = scmp.eq.s32.totalorder %s33, 0
      %p164 = por %p162, %p163
      %p165 = scmp.ne.s32.totalorder %s151, %s152
      %p166 = scmp.eq.s32.totalorder %s34, 1
      %p167 = por %p165, %p166
      %p169 = scmp.ne.s32.totalorder %s152, %s168
      %p170 = scmp.eq.s32.totalorder %s34, 0
      %p171 = por %p169, %p170
      %s172 = ssub.s32 %s28, %s35
      %p173 = scmp.eq.s32.totalorder %s172, 0
      %s175 = sadd.s32 %s174, 1
      %s176 = scalar_select %p173, %s174, %s175
      %p179 = pneg %p173
      %p180 = scmp.eq.s32.totalorder %s28, 1
      %p181 = por %p179, %p180
      %p182 = scmp.ne.s32.totalorder %s174, %s177
      %p183 = scmp.eq.s32.totalorder %s28, 0
      %p184 = por %p182, %p183
      %p185 = scmp.ne.s32.totalorder %s174, %s177
      %p186 = scmp.eq.s32.totalorder %s33, 1
      %p187 = por %p185, %p186
      %p188 = scmp.ne.s32.totalorder %s177, %s178
      %p189 = scmp.eq.s32.totalorder %s33, 0
      %p190 = por %p188, %p189
      %p191 = scmp.ne.s32.totalorder %s177, %s178
      %p192 = scmp.eq.s32.totalorder %s34, 1
      %p193 = por %p191, %p192
      %p195 = scmp.ne.s32.totalorder %s178, %s194
      %p196 = scmp.eq.s32.totalorder %s34, 0
      %p197 = por %p195, %p196
      %s198 = ssub.s32 %s28, %s35
      %p199 = scmp.eq.s32.totalorder %s198, 0
      %s201 = sadd.s32 %s200, 1
      %s202 = scalar_select %p199, %s200, %s201
      %p205 = pneg %p199
      %p206 = scmp.eq.s32.totalorder %s28, 1
      %p207 = por %p205, %p206
      %p208 = scmp.ne.s32.totalorder %s200, %s203
      %p209 = scmp.eq.s32.totalorder %s28, 0
      %p210 = por %p208, %p209
      %p211 = scmp.ne.s32.totalorder %s200, %s203
      %p212 = scmp.eq.s32.totalorder %s33, 1
      %p213 = por %p211, %p212
      %p214 = scmp.ne.s32.totalorder %s203, %s204
      %p215 = scmp.eq.s32.totalorder %s33, 0
      %p216 = por %p214, %p215
      %p217 = scmp.ne.s32.totalorder %s203, %s204
      %p218 = scmp.eq.s32.totalorder %s34, 1
      %p219 = por %p217, %p218
      %p221 = scmp.ne.s32.totalorder %s204, %s220
      %p222 = scmp.eq.s32.totalorder %s34, 0
      %p223 = por %p221, %p222
      %s224 = ssub.s32 %s28, %s35
      %p225 = scmp.eq.s32.totalorder %s224, 0
      %s227 = sadd.s32 %s226, 1
      %s228 = scalar_select %p225, %s226, %s227
      %p231 = pneg %p225
      %p232 = scmp.eq.s32.totalorder %s28, 1
      %p233 = por %p231, %p232
      %p234 = scmp.ne.s32.totalorder %s226, %s229
      %p235 = scmp.eq.s32.totalorder %s28, 0
      %p236 = por %p234, %p235
      %p237 = scmp.ne.s32.totalorder %s226, %s229
      %p238 = scmp.eq.s32.totalorder %s33, 1
      %p239 = por %p237, %p238
      %p240 = scmp.ne.s32.totalorder %s229, %s230
      %p241 = scmp.eq.s32.totalorder %s33, 0
      %p242 = por %p240, %p241
      %p243 = scmp.ne.s32.totalorder %s229, %s230
      %p244 = scmp.eq.s32.totalorder %s34, 1
      %p245 = por %p243, %p244
      %p247 = scmp.ne.s32.totalorder %s230, %s246
      %p248 = scmp.eq.s32.totalorder %s34, 0
      %p249 = por %p247, %p248
      %s250 = ssub.s32 %s28, %s35
      %p251 = scmp.eq.s32.totalorder %s250, 0
      %s253 = sadd.s32 %s252, 1
      %s254 = scalar_select %p251, %s252, %s253
      %p257 = pneg %p251
      %p258 = scmp.eq.s32.totalorder %s28, 1
      %p259 = por %p257, %p258
      %p260 = scmp.ne.s32.totalorder %s252, %s255
      %p261 = scmp.eq.s32.totalorder %s28, 0
      %p262 = por %p260, %p261
      %p263 = scmp.ne.s32.totalorder %s252, %s255
      %p264 = scmp.eq.s32.totalorder %s33, 1
      %p265 = por %p263, %p264
      %p266 = scmp.ne.s32.totalorder %s255, %s256
      %p267 = scmp.eq.s32.totalorder %s33, 0
      %p268 = por %p266, %p267
      %p269 = scmp.ne.s32.totalorder %s255, %s256
      %p270 = scmp.eq.s32.totalorder %s34, 1
      %p271 = por %p269, %p270
      %p273 = scmp.ne.s32.totalorder %s256, %s272
      %p274 = scmp.eq.s32.totalorder %s34, 0
      %p275 = por %p273, %p274
      %s276 = ssub.s32 %s28, %s35
      %p277 = scmp.eq.s32.totalorder %s276, 0
      %s279 = sadd.s32 %s278, 1
      %s280 = scalar_select %p277, %s278, %s279
      %p283 = pneg %p277
      %p284 = scmp.eq.s32.totalorder %s28, 1
      %p285 = por %p283, %p284
      %p286 = scmp.ne.s32.totalorder %s278, %s281
      %p287 = scmp.eq.s32.totalorder %s28, 0
      %p288 = por %p286, %p287
      %p289 = scmp.ne.s32.totalorder %s278, %s281
      %p290 = scmp.eq.s32.totalorder %s33, 1
      %p291 = por %p289, %p290
      %p292 = scmp.ne.s32.totalorder %s281, %s282
      %p293 = scmp.eq.s32.totalorder %s33, 0
      %p294 = por %p292, %p293
      %p295 = scmp.ne.s32.totalorder %s281, %s282
      %p296 = scmp.eq.s32.totalorder %s34, 1
      %p297 = por %p295, %p296
      %p299 = scmp.ne.s32.totalorder %s282, %s298
      %p300 = scmp.eq.s32.totalorder %s34, 0
      %p301 = por %p299, %p300
      %s302 = ssub.s32 %s28, %s35
      %p303 = scmp.eq.s32.totalorder %s302, 0
      %s305 = sadd.s32 %s304, 1
      %s306 = scalar_select %p303, %s304, %s305
      %p309 = pneg %p303
      %p310 = scmp.eq.s32.totalorder %s28, 1
      %p311 = por %p309, %p310
      %p312 = scmp.ne.s32.totalorder %s304, %s307
      %p313 = scmp.eq.s32.totalorder %s28, 0
      %p314 = por %p312, %p313
      %p315 = scmp.ne.s32.totalorder %s304, %s307
      %p316 = scmp.eq.s32.totalorder %s33, 1
      %p317 = por %p315, %p316
      %p318 = scmp.ne.s32.totalorder %s307, %s308
      %p319 = scmp.eq.s32.totalorder %s33, 0
      %p320 = por %p318, %p319
      %p321 = scmp.ne.s32.totalorder %s307, %s308
      %p322 = scmp.eq.s32.totalorder %s34, 1
      %p323 = por %p321, %p322
      %p325 = scmp.ne.s32.totalorder %s308, %s324
      %p326 = scmp.eq.s32.totalorder %s34, 0
      %p327 = por %p325, %p326
      %s328 = ssub.s32 %s28, %s35
      %p329 = scmp.eq.s32.totalorder %s328, 0
      %s331 = sadd.s32 %s330, 1
      %s332 = scalar_select %p329, %s330, %s331
      %p335 = pneg %p329
      %p336 = scmp.eq.s32.totalorder %s28, 1
      %p337 = por %p335, %p336
      %p338 = scmp.ne.s32.totalorder %s330, %s333
      %p339 = scmp.eq.s32.totalorder %s28, 0
      %p340 = por %p338, %p339
      %p341 = scmp.ne.s32.totalorder %s330, %s333
      %p342 = scmp.eq.s32.totalorder %s33, 1
      %p343 = por %p341, %p342
      %p344 = scmp.ne.s32.totalorder %s333, %s334
      %p345 = scmp.eq.s32.totalorder %s33, 0
      %p346 = por %p344, %p345
      %p347 = scmp.ne.s32.totalorder %s333, %s334
      %p348 = scmp.eq.s32.totalorder %s34, 1
      %p349 = por %p347, %p348
      %p351 = scmp.ne.s32.totalorder %s334, %s350
      %p352 = scmp.eq.s32.totalorder %s34, 0
      %p353 = por %p351, %p352
      %s354 = ssub.s32 %s28, %s35
      %p355 = scmp.eq.s32.totalorder %s354, 0
      %s357 = sadd.s32 %s356, 1
      %s358 = scalar_select %p355, %s356, %s357
      %p361 = pneg %p355
      %p362 = scmp.eq.s32.totalorder %s28, 1
      %p363 = por %p361, %p362
      %p364 = scmp.ne.s32.totalorder %s356, %s359
      %p365 = scmp.eq.s32.totalorder %s28, 0
      %p366 = por %p364, %p365
      %p367 = scmp.ne.s32.totalorder %s356, %s359
      %p368 = scmp.eq.s32.totalorder %s33, 1
      %p369 = por %p367, %p368
      %p370 = scmp.ne.s32.totalorder %s359, %s360
      %p371 = scmp.eq.s32.totalorder %s33, 0
      %p372 = por %p370, %p371
      %p373 = scmp.ne.s32.totalorder %s359, %s360
      %p374 = scmp.eq.s32.totalorder %s34, 1
      %p375 = por %p373, %p374
      %p377 = scmp.ne.s32.totalorder %s360, %s376
      %p378 = scmp.eq.s32.totalorder %s34, 0
      %p379 = por %p377, %p378
      %s380 = ssub.s32 %s28, %s35
      %p381 = scmp.eq.s32.totalorder %s380, 0
      %s383 = sadd.s32 %s382, 1
      %s384 = scalar_select %p381, %s382, %s383
      %p387 = pneg %p381
      %p388 = scmp.eq.s32.totalorder %s28, 1
      %p389 = por %p387, %p388
      %p390 = scmp.ne.s32.totalorder %s382, %s385
      %p391 = scmp.eq.s32.totalorder %s28, 0
      %p392 = por %p390, %p391
      %p393 = scmp.ne.s32.totalorder %s382, %s385
      %p394 = scmp.eq.s32.totalorder %s33, 1
      %p395 = por %p393, %p394
      %p396 = scmp.ne.s32.totalorder %s385, %s386
      %p397 = scmp.eq.s32.totalorder %s33, 0
      %p398 = por %p396, %p397
      %p399 = scmp.ne.s32.totalorder %s385, %s386
      %p400 = scmp.eq.s32.totalorder %s34, 1
      %p401 = por %p399, %p400
      %p403 = scmp.ne.s32.totalorder %s386, %s402
      %p404 = scmp.eq.s32.totalorder %s34, 0
      %p405 = por %p403, %p404
      %s406 = ssub.s32 %s28, %s35
      %p407 = scmp.eq.s32.totalorder %s406, 0
      %s409 = sadd.s32 %s408, 1
      %s410 = scalar_select %p407, %s408, %s409
      %p413 = pneg %p407
      %p414 = scmp.eq.s32.totalorder %s28, 1
      %p415 = por %p413, %p414
      %p416 = scmp.ne.s32.totalorder %s408, %s411
      %p417 = scmp.eq.s32.totalorder %s28, 0
      %p418 = por %p416, %p417
      %p419 = scmp.ne.s32.totalorder %s408, %s411
      %p420 = scmp.eq.s32.totalorder %s33, 1
      %p421 = por %p419, %p420
      %p422 = scmp.ne.s32.totalorder %s411, %s412
      %p423 = scmp.eq.s32.totalorder %s33, 0
      %p424 = por %p422, %p423
      %p425 = scmp.ne.s32.totalorder %s411, %s412
      %p426 = scmp.eq.s32.totalorder %s34, 1
      %p427 = por %p425, %p426
      %p429 = scmp.ne.s32.totalorder %s412, %s428
      %p430 = scmp.eq.s32.totalorder %s34, 0
      %p431 = por %p429, %p430
      %s433 = sadd.s32 %s432, 1
      %p436 = scmp.eq.s32.totalorder %s28, 1
      %p437 = scmp.ne.s32.totalorder %s432, %s434
      %p438 = scmp.eq.s32.totalorder %s28, 0
      %p439 = por %p437, %p438
      %p440 = scmp.ne.s32.totalorder %s432, %s434
      %p441 = scmp.eq.s32.totalorder %s33, 1
      %p442 = por %p440, %p441
      %p443 = scmp.ne.s32.totalorder %s434, %s435
      %p444 = scmp.eq.s32.totalorder %s33, 0
      %p445 = por %p443, %p444
      %p446 = scmp.ne.s32.totalorder %s434, %s435
      %p447 = scmp.eq.s32.totalorder %s34, 1
      %p448 = por %p446, %p447
      %p450 = scmp.ne.s32.totalorder %s435, %s449
      %p451 = scmp.eq.s32.totalorder %s34, 0
      %p452 = por %p450, %p451
      %s454 = sadd.s32 %s453, 1
      %p457 = scmp.eq.s32.totalorder %s28, 1
      %p458 = scmp.ne.s32.totalorder %s453, %s455
      %p459 = scmp.eq.s32.totalorder %s28, 0
      %p460 = por %p458, %p459
      %p461 = scmp.ne.s32.totalorder %s453, %s455
      %p462 = scmp.eq.s32.totalorder %s33, 1
      %p463 = por %p461, %p462
      %p464 = scmp.ne.s32.totalorder %s455, %s456
      %p465 = scmp.eq.s32.totalorder %s33, 0
      %p466 = por %p464, %p465
      %p467 = scmp.ne.s32.totalorder %s455, %s456
      %p468 = scmp.eq.s32.totalorder %s34, 1
      %p469 = por %p467, %p468
      %p471 = scmp.ne.s32.totalorder %s456, %s470
      %p472 = scmp.eq.s32.totalorder %s34, 0
      %p473 = por %p471, %p472
      %s475 = sadd.s32 %s474, 1
      %p478 = scmp.eq.s32.totalorder %s28, 1
      %p479 = scmp.ne.s32.totalorder %s474, %s476
      %p480 = scmp.eq.s32.totalorder %s28, 0
      %p481 = por %p479, %p480
      %p482 = scmp.ne.s32.totalorder %s474, %s476
      %p483 = scmp.eq.s32.totalorder %s33, 1
      %p484 = por %p482, %p483
      %p485 = scmp.ne.s32.totalorder %s476, %s477
      %p486 = scmp.eq.s32.totalorder %s33, 0
      %p487 = por %p485, %p486
      %p488 = scmp.ne.s32.totalorder %s476, %s477
      %p489 = scmp.eq.s32.totalorder %s34, 1
      %p490 = por %p488, %p489
      %p492 = scmp.ne.s32.totalorder %s477, %s491
      %p493 = scmp.eq.s32.totalorder %s34, 0
      %p494 = por %p492, %p493
      %s496 = sadd.s32 %s495, 1
      %p499 = scmp.eq.s32.totalorder %s28, 1
      %p500 = scmp.ne.s32.totalorder %s495, %s497
      %p501 = scmp.eq.s32.totalorder %s28, 0
      %p502 = por %p500, %p501
      %p503 = scmp.ne.s32.totalorder %s495, %s497
      %p504 = scmp.eq.s32.totalorder %s33, 1
      %p505 = por %p503, %p504
      %p506 = scmp.ne.s32.totalorder %s497, %s498
      %p507 = scmp.eq.s32.totalorder %s33, 0
      %p508 = por %p506, %p507
      %p509 = scmp.ne.s32.totalorder %s497, %s498
      %p510 = scmp.eq.s32.totalorder %s34, 1
      %p511 = por %p509, %p510
      %p513 = scmp.ne.s32.totalorder %s498, %s512
      %p514 = scmp.eq.s32.totalorder %s34, 0
      %p515 = por %p513, %p514
      %p516 = scmp.le.s32.totalorder 1, %s28
      %p517 = scmp.lt.s32.totalorder %s28, 3
      %p518 = pnand %p516, %p517
      %p519 = pneg %p518
      // Predicated region
      $region9: #{bert_forward.1} parent=5 // pred_check
        _
      $region10: #{bert_forward.1} parent=5 // pred_check_branch
        %521 = sbr.rel (%p518) target = $region12
      $region11: #{bert_forward.1} parent=5 // pred_region
        %s522 = ssub.s32 %s28, 1
        // Predicated region
        $region13: #{bert_forward.1} parent=11 // pred_check
          %p523 = pneg %p49
        $region14: #{bert_forward.1} parent=11 // pred_check_branch
          %525 = sbr.rel (%p523) target = $region16
        $region15: #{bert_forward.1} parent=11 // pred_region
          _
        $region16: #{bert_forward.1} parent=11 // pred_fallthru
          _
        // Predicated region
        $region17: #{bert_forward.1} parent=11 // pred_check
          %p526 = pneg %p70
        $region18: #{bert_forward.1} parent=11 // pred_check_branch
          %528 = sbr.rel (%p526) target = $region20
        $region19: #{bert_forward.1} parent=11 // pred_region
          _
        $region20: #{bert_forward.1} parent=11 // pred_fallthru
          _
        // Predicated region
        $region21: #{bert_forward.1} parent=11 // pred_check
          %p529 = pneg %p91
        $region22: #{bert_forward.1} parent=11 // pred_check_branch
          %531 = sbr.rel (%p529) target = $region24
        $region23: #{bert_forward.1} parent=11 // pred_region
          _
        $region24: #{bert_forward.1} parent=11 // pred_fallthru
          _
        // Predicated region
        $region25: #{bert_forward.1} parent=11 // pred_check
          %p532 = pneg %p112
        $region26: #{bert_forward.1} parent=11 // pred_check_branch
          %534 = sbr.rel (%p532) target = $region28
        $region27: #{bert_forward.1} parent=11 // pred_region
          _
        $region28: #{bert_forward.1} parent=11 // pred_fallthru
          _
        // Predicated region
        $region29: #{bert_forward.1} parent=11 // pred_check
          %p535 = pneg %p445
        $region30: #{bert_forward.1} parent=11 // pred_check_branch
          %537 = sbr.rel (%p535) target = $region32
        $region31: #{bert_forward.1} parent=11 // pred_region
          _
        $region32: #{bert_forward.1} parent=11 // pred_fallthru
          _
        // Predicated region
        $region33: #{bert_forward.1} parent=11 // pred_check
          %p538 = pneg %p466
        $region34: #{bert_forward.1} parent=11 // pred_check_branch
          %540 = sbr.rel (%p538) target = $region36
        $region35: #{bert_forward.1} parent=11 // pred_region
          _
        $region36: #{bert_forward.1} parent=11 // pred_fallthru
          _
      $region12: #{bert_forward.1} parent=5 // pred_fallthru
        _
      %p541 = scmp.lt.s32.totalorder %s28, 2
      // Predicated region
      $region37: #{bert_forward.1} parent=5 // pred_check
        %p542 = pneg %p541
      $region38: #{bert_forward.1} parent=5 // pred_check_branch
        %544 = sbr.rel (%p542) target = $region40
      $region39: #{bert_forward.1} parent=5 // pred_region
        // Predicated region
        $region41: #{bert_forward.1} parent=39 // pred_check
          %p545 = pneg %p132
        $region42: #{bert_forward.1} parent=39 // pred_check_branch
          %547 = sbr.rel (%p545) target = $region44
        $region43: #{bert_forward.1} parent=39 // pred_region
          %p548 = scmp.lt.s32.totalorder %s28, 1
          %s549 = scalar_select %p548, %s28, 1
          %s550 = smul.addr %s549, 4
          %s551 = smul.addr %s550, 8
          %s552 = scalar_lea.vmem %s4, %s551
        $region44: #{bert_forward.1} parent=39 // pred_fallthru
          _
        // Predicated region
        $region45: #{bert_forward.1} parent=39 // pred_check
          %p553 = pneg %p158
        $region46: #{bert_forward.1} parent=39 // pred_check_branch
          %555 = sbr.rel (%p553) target = $region48
        $region47: #{bert_forward.1} parent=39 // pred_region
          %p556 = scmp.lt.s32.totalorder %s28, 1
          %s557 = scalar_select %p556, %s28, 1
          %s558 = scalar_lea.vmem %s5, %s557
        $region48: #{bert_forward.1} parent=39 // pred_fallthru
          _
        // Predicated region
        $region49: #{bert_forward.1} parent=39 // pred_check
          %p559 = pneg %p184
        $region50: #{bert_forward.1} parent=39 // pred_check_branch
          %561 = sbr.rel (%p559) target = $region52
        $region51: #{bert_forward.1} parent=39 // pred_region
          %p562 = scmp.lt.s32.totalorder %s28, 1
          %s563 = scalar_select %p562, %s28, 1
          %s564 = smul.addr %s563, 4
          %s565 = smul.addr %s564, 8
          %s566 = scalar_lea.vmem %s6, %s565
        $region52: #{bert_forward.1} parent=39 // pred_fallthru
          _
        // Predicated region
        $region53: #{bert_forward.1} parent=39 // pred_check
          %p567 = pneg %p210
        $region54: #{bert_forward.1} parent=39 // pred_check_branch
          %569 = sbr.rel (%p567) target = $region56
        $region55: #{bert_forward.1} parent=39 // pred_region
          %p570 = scmp.lt.s32.totalorder %s28, 1
          %s571 = scalar_select %p570, %s28, 1
          %s572 = scalar_lea.vmem %s7, %s571
        $region56: #{bert_forward.1} parent=39 // pred_fallthru
          _
        // Predicated region
        $region57: #{bert_forward.1} parent=39 // pred_check
          %p573 = pneg %p236
        $region58: #{bert_forward.1} parent=39 // pred_check_branch
          %575 = sbr.rel (%p573) target = $region60
        $region59: #{bert_forward.1} parent=39 // pred_region
          %p576 = scmp.lt.s32.totalorder %s28, 1
          %s577 = scalar_select %p576, %s28, 1
          %s578 = scalar_lea.vmem %s8, %s577
        $region60: #{bert_forward.1} parent=39 // pred_fallthru
          _
        // Predicated region
        $region61: #{bert_forward.1} parent=39 // pred_check
          %p579 = pneg %p262
        $region62: #{bert_forward.1} parent=39 // pred_check_branch
          %581 = sbr.rel (%p579) target = $region64
        $region63: #{bert_forward.1} parent=39 // pred_region
          %p582 = scmp.lt.s32.totalorder %s28, 1
          %s583 = scalar_select %p582, %s28, 1
          %s584 = scalar_lea.vmem %s9, %s583
        $region64: #{bert_forward.1} parent=39 // pred_fallthru
          _
        // Predicated region
        $region65: #{bert_forward.1} parent=39 // pred_check
          %p585 = pneg %p288
        $region66: #{bert_forward.1} parent=39 // pred_check_branch
          %587 = sbr.rel (%p585) target = $region68
        $region67: #{bert_forward.1} parent=39 // pred_region
          %p588 = scmp.lt.s32.totalorder %s28, 1
          %s589 = scalar_select %p588, %s28, 1
          %s590 = smul.addr %s589, 4
          %s591 = smul.addr %s590, 8
          %s592 = scalar_lea.vmem %s10, %s591
        $region68: #{bert_forward.1} parent=39 // pred_fallthru
          _
        // Predicated region
        $region69: #{bert_forward.1} parent=39 // pred_check
          %p593 = pneg %p314
        $region70: #{bert_forward.1} parent=39 // pred_check_branch
          %595 = sbr.rel (%p593) target = $region72
        $region71: #{bert_forward.1} parent=39 // pred_region
          %p596 = scmp.lt.s32.totalorder %s28, 1
          %s597 = scalar_select %p596, %s28, 1
          %s598 = scalar_lea.vmem %s11, %s597
        $region72: #{bert_forward.1} parent=39 // pred_fallthru
          _
        // Predicated region
        $region73: #{bert_forward.1} parent=39 // pred_check
          %p599 = pneg %p340
        $region74: #{bert_forward.1} parent=39 // pred_check_branch
          %601 = sbr.rel (%p599) target = $region76
        $region75: #{bert_forward.1} parent=39 // pred_region
          %p602 = scmp.lt.s32.totalorder %s28, 1
          %s603 = scalar_select %p602, %s28, 1
          %s604 = smul.addr %s603, 8
          %s605 = smul.addr %s604, 8
          %s606 = scalar_lea.vmem %s12, %s605
        $region76: #{bert_forward.1} parent=39 // pred_fallthru
          _
        // Predicated region
        $region77: #{bert_forward.1} parent=39 // pred_check
          %p607 = pneg %p366
        $region78: #{bert_forward.1} parent=39 // pred_check_branch
          %609 = sbr.rel (%p607) target = $region80
        $region79: #{bert_forward.1} parent=39 // pred_region
          %p610 = scmp.lt.s32.totalorder %s28, 1
          %s611 = scalar_select %p610, %s28, 1
          %s612 = scalar_lea.vmem %s13, %s611
        $region80: #{bert_forward.1} parent=39 // pred_fallthru
          _
        // Predicated region
        $region81: #{bert_forward.1} parent=39 // pred_check
          %p613 = pneg %p392
        $region82: #{bert_forward.1} parent=39 // pred_check_branch
          %615 = sbr.rel (%p613) target = $region84
        $region83: #{bert_forward.1} parent=39 // pred_region
          %p616 = scmp.lt.s32.totalorder %s28, 1
          %s617 = scalar_select %p616, %s28, 1
          %s618 = scalar_lea.vmem %s14, %s617
        $region84: #{bert_forward.1} parent=39 // pred_fallthru
          _
        // Predicated region
        $region85: #{bert_forward.1} parent=39 // pred_check
          %p619 = pneg %p418
        $region86: #{bert_forward.1} parent=39 // pred_check_branch
          %621 = sbr.rel (%p619) target = $region88
        $region87: #{bert_forward.1} parent=39 // pred_region
          %p622 = scmp.lt.s32.totalorder %s28, 1
          %s623 = scalar_select %p622, %s28, 1
          %s624 = scalar_lea.vmem %s15, %s623
        $region88: #{bert_forward.1} parent=39 // pred_fallthru
          _
      $region40: #{bert_forward.1} parent=5 // pred_fallthru
        _
      %p625 = scmp.le.s32.totalorder 1, %s28
      %p626 = scmp.lt.s32.totalorder %s28, 3
      %p627 = pnand %p625, %p626
      %p628 = pneg %p627
      // Predicated region
      $region89: #{bert_forward.1} parent=5 // pred_check
        _
      $region90: #{bert_forward.1} parent=5 // pred_check_branch
        %630 = sbr.rel (%p627) target = $region92
      $region91: #{bert_forward.1} parent=5 // pred_region
        %s631 = ssub.s32 %s28, 1
        %p632 = pneg %p49
        %p633 = pneg %p46
        %p634 = pneg %p70
        %p635 = pneg %p67
        %p636 = pneg %p91
        %p637 = pneg %p88
        %p638 = pneg %p112
        %p639 = pneg %p109
        %p640 = scmp.lt.s32.totalorder %s33, 1
        %s641 = scalar_select %p640, %s33, 1
        %s642 = smul.addr %s641, 4
        %s643 = smul.addr %s642, 8
        %s644 = scalar_lea.vmem %s4, %s643
        %p645 = pneg %p138
        %p646 = pneg %p135
        %p647 = scmp.lt.s32.totalorder %s33, 1
        %s648 = scalar_select %p647, %s33, 1
        %s649 = scalar_lea.vmem %s5, %s648
        %p650 = pneg %p164
        %p651 = pneg %p161
        %p652 = scmp.lt.s32.totalorder %s33, 1
        %s653 = scalar_select %p652, %s33, 1
        %s654 = smul.addr %s653, 4
        %s655 = smul.addr %s654, 8
        %s656 = scalar_lea.vmem %s6, %s655
        %p657 = pneg %p190
        %p658 = pneg %p187
        %p659 = scmp.lt.s32.totalorder %s33, 1
        %s660 = scalar_select %p659, %s33, 1
        %s661 = scalar_lea.vmem %s7, %s660
        %p662 = pneg %p216
        %p663 = pneg %p213
        %p664 = scmp.lt.s32.totalorder %s33, 1
        %s665 = scalar_select %p664, %s33, 1
        %s666 = scalar_lea.vmem %s8, %s665
        %p667 = pneg %p242
        %p668 = pneg %p239
        %p669 = scmp.lt.s32.totalorder %s33, 1
        %s670 = scalar_select %p669, %s33, 1
        %s671 = scalar_lea.vmem %s9, %s670
        %p672 = pneg %p268
        %p673 = pneg %p265
        %p674 = scmp.lt.s32.totalorder %s33, 1
        %s675 = scalar_select %p674, %s33, 1
        %s676 = smul.addr %s675, 4
        %s677 = smul.addr %s676, 8
        %s678 = scalar_lea.vmem %s10, %s677
        %p679 = pneg %p294
        %p680 = pneg %p291
        %p681 = scmp.lt.s32.totalorder %s33, 1
        %s682 = scalar_select %p681, %s33, 1
        %s683 = scalar_lea.vmem %s11, %s682
        %p684 = pneg %p320
        %p685 = pneg %p317
        %p686 = scmp.lt.s32.totalorder %s33, 1
        %s687 = scalar_select %p686, %s33, 1
        %s688 = smul.addr %s687, 8
        %s689 = smul.addr %s688, 8
        %s690 = scalar_lea.vmem %s12, %s689
        %p691 = pneg %p346
        %p692 = pneg %p343
        %p693 = scmp.lt.s32.totalorder %s33, 1
        %s694 = scalar_select %p693, %s33, 1
        %s695 = scalar_lea.vmem %s13, %s694
        %p696 = pneg %p372
        %p697 = pneg %p369
        %p698 = scmp.lt.s32.totalorder %s33, 1
        %s699 = scalar_select %p698, %s33, 1
        %s700 = scalar_lea.vmem %s14, %s699
        %p701 = pneg %p398
        %p702 = pneg %p395
        %p703 = scmp.lt.s32.totalorder %s33, 1
        %s704 = scalar_select %p703, %s33, 1
        %s705 = scalar_lea.vmem %s15, %s704
        %p706 = pneg %p424
        %p707 = pneg %p421
        %p708 = pneg %p445
        %p709 = pneg %p442
        %p710 = pneg %p466
        %p711 = pneg %p463
        %p712 = pneg %p487
        %p713 = pneg %p484
        %p714 = pneg %p508
        %p715 = pneg %p505
        %p716 = scmp.lt.s32.totalorder %s33, 1
        %s717 = scalar_select %p716, %s33, 1
        %s718 = smul.addr %s717, 4
        %s719 = smul.addr %s718, 8
        %s720 = scalar_lea.vmem %s4, %s719
        %p721 = scmp.lt.s32.totalorder %s33, 1
        %s722 = scalar_select %p721, %s33, 1
        %s723 = scalar_lea.vmem %s5, %s722
        %p724 = scmp.lt.s32.totalorder %s33, 1
        %s725 = scalar_select %p724, %s33, 1
        %s726 = smul.addr %s725, 4
        %s727 = smul.addr %s726, 8
        %s728 = scalar_lea.vmem %s6, %s727
        %p729 = scmp.lt.s32.totalorder %s33, 1
        %s730 = scalar_select %p729, %s33, 1
        %s731 = scalar_lea.vmem %s7, %s730
        %p732 = scmp.lt.s32.totalorder %s33, 1
        %s733 = scalar_select %p732, %s33, 1
        %s734 = scalar_lea.vmem %s8, %s733
        %p735 = scmp.lt.s32.totalorder %s33, 1
        %s736 = scalar_select %p735, %s33, 1
        %s737 = scalar_lea.vmem %s9, %s736
        %p738 = scmp.lt.s32.totalorder %s33, 1
        %s739 = scalar_select %p738, %s33, 1
        %s740 = smul.addr %s739, 4
        %s741 = smul.addr %s740, 8
        %s742 = scalar_lea.vmem %s10, %s741
        %p743 = scmp.lt.s32.totalorder %s33, 1
        %s744 = scalar_select %p743, %s33, 1
        %s745 = scalar_lea.vmem %s11, %s744
        %p746 = scmp.lt.s32.totalorder %s33, 1
        %s747 = scalar_select %p746, %s33, 1
        %s748 = smul.addr %s747, 8
        %s749 = smul.addr %s748, 8
        %s750 = scalar_lea.vmem %s12, %s749
        %p751 = scmp.lt.s32.totalorder %s33, 1
        %s752 = scalar_select %p751, %s33, 1
        %s753 = scalar_lea.vmem %s13, %s752
        %p754 = scmp.lt.s32.totalorder %s33, 1
        %s755 = scalar_select %p754, %s33, 1
        %s756 = scalar_lea.vmem %s14, %s755
        %p757 = scmp.lt.s32.totalorder %s33, 1
        %s758 = scalar_select %p757, %s33, 1
        %s759 = scalar_lea.vmem %s15, %s758
        %p760 = scmp.eq.s32.totalorder %s33, 0
        // Predicated region
        $region93: #{bert_forward.1} parent=91 // pred_check
          %p761 = pneg %p760
        $region94: #{bert_forward.1} parent=91 // pred_check_branch
          %763 = sbr.rel (%p761) target = $region96
        $region95: #{bert_forward.1} parent=91 // pred_region
          %v764 = vld [vmem:[%s0] sm:$0xff]
          %v765 = vld [vmem:[%s0 + $0x8] sm:$0xff]
          %v766 = vld [vmem:[%s2] sm:$0x1]
          %v767 = vld [vmem:[%s3] sm:$0x1]
          %vm768 = vcmask 261120
          %v769 = vsel %vm768, %v764, 0.0
          %770 = vadd.xlane.f32.xlu0 %v769
          %v771 = vpop.xlane.xlu0 %770
          %v772 = vsel %vm768, %v765, 0.0
          %773 = vadd.xlane.f32.xlu0 %v772
          %v774 = vpop.xlane.xlu0 %773
          %v775 = vrcp.pop 32.0
          %v776 = vmul.f32 %v771, %v775
          %v777 = vmul.f32 %v774, %v775
          %v778 = vsub.f32 %v764, %v776
          %v779 = vsub.f32 %v765, %v777
          %v780 = vmul.f32 %v778, %v778
          %v781 = vmul.f32 %v779, %v779
          %v782 = vsel %vm768, %v780, 0.0
          %783 = vadd.xlane.f32.xlu0 %v782
          %v784 = vpop.xlane.xlu0 %783
          %v785 = vsel %vm768, %v781, 0.0
          %786 = vadd.xlane.f32.xlu0 %v785
          %v787 = vpop.xlane.xlu0 %786
          %v788 = vmul.f32 %v784, %v775
          %v789 = vmul.f32 %v787, %v775
          %v790 = vadd.f32 %v788, 1e-12
          %v791 = vadd.f32 %v789, 1e-12
          %v792 = vrsqrt.pop %v790
          %v793 = vrsqrt.pop %v791
          %v794 = vmul.f32 %v778, %v792
          %v795 = vmul.f32 %v779, %v793
          %v797 = vlaneseq
          %v798 = vshrl.u32 %v797, 7
          %v799 = vsub.s32 0, %v798
          %v800 = vrot.slane %v766, %v799
          %v802 = vmul.f32 %v794, %v800
          %v803 = vmul.f32 %v795, %v800
          %v805 = vlaneseq
          %v806 = vshrl.u32 %v805, 7
          %v807 = vsub.s32 0, %v806
          %v808 = vrot.slane %v767, %v807
          %v810 = vadd.f32 %v802, %v808
          %v811 = vadd.f32 %v803, %v808
          %812 = vst.msk [vmem:[#allocation2] sm:$0xff] %vm768, %v810
          %813 = vst.msk [vmem:[#allocation2 + $0x8] sm:$0xff] %vm768, %v811
        $region96: #{bert_forward.1} parent=91 // pred_fallthru
          _
        %v814 = vld [vmem:[#allocation2] sm:$0xff]
        %v815 = vld [vmem:[#allocation2 + $0x8] sm:$0xff]
        %v816 = vld [vmem:[%s1] sm:$0x3]
        %v817 = vld [vmem:[%s720] sm:$0xff]
        %v818 = vld [vmem:[%s720 + $0x8] sm:$0xff]
        %v819 = vld [vmem:[%s720 + $0x10] sm:$0xff]
        %v820 = vld [vmem:[%s720 + $0x18] sm:$0xff]
        %v821 = vld [vmem:[%s723] sm:$0x1]
        %v823 = vlaneseq
        %v824 = vshrl.u32 %v823, 7
        %v825 = vsub.s32 0, %v824
        %v826 = vrot.slane %v821, %v825
        %vm828 = vcmask 261120
        %v830 = vsel %vm828, %v814, 0
        %v833 = vsel %vm828, %v815, 0
        %835 = vmatprep.subr.mxu0 0.0
        %836 = vmatpush1.msra.mxu0 %v817
        %837 = vmatprep.subr.mxu0 0.0
        %838 = vmatpush1.msra.mxu0 %v818
        %839 = vmatprep.subr.mxu0 0.0
        %840 = vmatpush1.msra.mxu0 %v819
        %841 = vmatprep.subr.mxu0 0.0
        %842 = vmatpush1.msra.mxu0 %v820
        %843 = vmatprep.subr.mxu0 0.0
        %844 = vmatpush1.msra.mxu0 0.0
        %845 = vmatprep.subr.mxu0 0.0
        %846 = vmatpush1.msra.mxu0 0.0
        %847 = vmatprep.subr.mxu0 0.0
        %848 = vmatpush1.msra.mxu0 0.0
        %849 = vmatprep.subr.mxu0 0.0
        %850 = vmatpush1.msra.mxu0 0.0
        %851 = vmatprep.subr.mxu0 0.0
        %852 = vmatpush1.msra.mxu0 0.0
        %853 = vmatprep.subr.mxu0 0.0
        %854 = vmatpush1.msra.mxu0 0.0
        %855 = vmatprep.subr.mxu0 0.0
        %856 = vmatpush1.msra.mxu0 0.0
        %857 = vmatprep.subr.mxu0 0.0
        %858 = vmatpush1.msra.mxu0 0.0
        %859 = vmatprep.subr.mxu0 0.0
        %860 = vmatpush1.msra.mxu0 0.0
        %861 = vmatprep.subr.mxu0 0.0
        %862 = vmatpush1.msra.mxu0 0.0
        %863 = vmatprep.subr.mxu0 0.0
        %864 = vmatpush1.msra.mxu0 0.0
        %865 = vmatprep.subr.mxu0 0.0
        %866 = vmatpush1.msra.mxu0 0.0
        %867 = vmatprep.subr.mxu0 0.0
        %868 = vmatpush1.msra.mxu0 0.0
        %869 = vmatprep.subr.mxu0 0.0
        %870 = vmatpush1.msra.mxu0 0.0
        %871 = vmatprep.subr.mxu0 0.0
        %872 = vmatpush1.msra.mxu0 0.0
        %873 = vmatprep.subr.mxu0 0.0
        %874 = vmatpush1.msra.mxu0 0.0
        %875 = vmatprep.subr.mxu0 0.0
        %876 = vmatpush1.msra.mxu0 0.0
        %877 = vmatprep.subr.mxu0 0.0
        %878 = vmatpush1.msra.mxu0 0.0
        %879 = vmatprep.subr.mxu0 0.0
        %880 = vmatpush1.msra.mxu0 0.0
        %881 = vmatprep.subr.mxu0 0.0
        %882 = vmatpush1.msra.mxu0 0.0
        %883 = vmatprep.subr.mxu0 0.0
        %884 = vmatpush1.msra.mxu0 0.0
        %885 = vmatprep.subr.mxu0 0.0
        %886 = vmatpush1.msra.mxu0 0.0
        %887 = vmatprep.subr.mxu0 0.0
        %888 = vmatpush1.msra.mxu0 0.0
        %889 = vmatprep.subr.mxu0 0.0
        %890 = vmatpush1.msra.mxu0 0.0
        %891 = vmatprep.subr.mxu0 0.0
        %892 = vmatpush1.msra.mxu0 0.0
        %893 = vmatprep.subr.mxu0 0.0
        %894 = vmatpush1.msra.mxu0 0.0
        %895 = vmatprep.subr.mxu0 0.0
        %896 = vmatpush1.msra.mxu0 0.0
        %897 = vmatprep.subr.mxu0 0.0
        %898 = vmatpush1.msra.mxu0 0.0
        %899 = vmatprep.mubr.f32.mxu0 0.0
        %900 = vmatmul.mubr.f32.gmra.mrb[0].mxu0 %v830
        %v901 = vpop.f32.mrb[0].mxu0
        %v902 = vadd.f32 %v826, %v901
        %v903 = vpop.f32.mrb[0].mxu0
        %904 = vmatprep.mubr.f32.mxu0 0.0
        %905 = vmatmul.mubr.f32.gmra.mrb[0].mxu0 %v833
        %v906 = vpop.f32.mrb[0].mxu0
        %v907 = vadd.f32 %v826, %v906
        %v908 = vpop.f32.mrb[0].mxu0
        %909 = vdwg.mxu0
        %911 = vrot.lane.b32.xlu0 %v902, 96
        %v912 = vpop.permute.xlu0 %911
        %vm913 = vcmask 64512
        %v914 = vsel %vm913, %v902, 0
        %v916 = vsel %vm913, %v912, 0
        %918 = vmatprep.subr.mxu0 0.0
        %919 = vmatpush1.xpose.msra.mxu0 %v916
        %920 = vmatprep.subr.mxu0 0.0
        %921 = vmatpush1.xpose.msra.mxu0 0.0
        %922 = vmatprep.subr.mxu0 0.0
        %923 = vmatpush1.xpose.msra.mxu0 0.0
        %924 = vmatprep.subr.mxu0 0.0
        %925 = vmatpush1.xpose.msra.mxu0 0.0
        %926 = vmatprep.subr.mxu0 0.0
        %927 = vmatpush1.xpose.msra.mxu0 0.0
        %928 = vmatprep.subr.mxu0 0.0
        %929 = vmatpush1.xpose.msra.mxu0 0.0
        %930 = vmatprep.subr.mxu0 0.0
        %931 = vmatpush1.xpose.msra.mxu0 0.0
        %932 = vmatprep.subr.mxu0 0.0
        %933 = vmatpush1.xpose.msra.mxu0 0.0
        %934 = vmatprep.subr.mxu0 0.0
        %935 = vmatpush1.xpose.msra.mxu0 0.0
        %936 = vmatprep.subr.mxu0 0.0
        %937 = vmatpush1.xpose.msra.mxu0 0.0
        %938 = vmatprep.subr.mxu0 0.0
        %939 = vmatpush1.xpose.msra.mxu0 0.0
        %940 = vmatprep.subr.mxu0 0.0
        %941 = vmatpush1.xpose.msra.mxu0 0.0
        %942 = vmatprep.subr.mxu0 0.0
        %943 = vmatpush1.xpose.msra.mxu0 0.0
        %944 = vmatprep.subr.mxu0 0.0
        %945 = vmatpush1.xpose.msra.mxu0 0.0
        %946 = vmatprep.subr.mxu0 0.0
        %947 = vmatpush1.xpose.msra.mxu0 0.0
        %948 = vmatprep.subr.mxu0 0.0
        %949 = vmatpush1.xpose.msra.mxu0 0.0
        %950 = vmatprep.subr.mxu0 0.0
        %951 = vmatpush1.xpose.msra.mxu0 0.0
        %952 = vmatprep.subr.mxu0 0.0
        %953 = vmatpush1.xpose.msra.mxu0 0.0
        %954 = vmatprep.subr.mxu0 0.0
        %955 = vmatpush1.xpose.msra.mxu0 0.0
        %956 = vmatprep.subr.mxu0 0.0
        %957 = vmatpush1.xpose.msra.mxu0 0.0
        %958 = vmatprep.subr.mxu0 0.0
        %959 = vmatpush1.xpose.msra.mxu0 0.0
        %960 = vmatprep.subr.mxu0 0.0
        %961 = vmatpush1.xpose.msra.mxu0 0.0
        %962 = vmatprep.subr.mxu0 0.0
        %963 = vmatpush1.xpose.msra.mxu0 0.0
        %964 = vmatprep.subr.mxu0 0.0
        %965 = vmatpush1.xpose.msra.mxu0 0.0
        %966 = vmatprep.subr.mxu0 0.0
        %967 = vmatpush1.xpose.msra.mxu0 0.0
        %968 = vmatprep.subr.mxu0 0.0
        %969 = vmatpush1.xpose.msra.mxu0 0.0
        %970 = vmatprep.subr.mxu0 0.0
        %971 = vmatpush1.xpose.msra.mxu0 0.0
        %972 = vmatprep.subr.mxu0 0.0
        %973 = vmatpush1.xpose.msra.mxu0 0.0
        %974 = vmatprep.subr.mxu0 0.0
        %975 = vmatpush1.xpose.msra.mxu0 0.0
        %976 = vmatprep.subr.mxu0 0.0
        %977 = vmatpush1.xpose.msra.mxu0 0.0
        %978 = vmatprep.subr.mxu0 0.0
        %979 = vmatpush1.xpose.msra.mxu0 0.0
        %980 = vmatprep.subr.mxu0 0.0
        %981 = vmatpush1.xpose.msra.mxu0 0.0
        %982 = vmatprep.mubr.f32.mxu0 0.0
        %983 = vmatmul.mubr.f32.gmra.mrb[0].mxu0 %v914
        %v984 = vpop.f32.mrb[0].mxu0
        %v985 = vadd.f32 0.0, %v984
        %v986 = vpop.f32.mrb[0].mxu0
        %987 = vdwg.mxu0
        %989 = vrot.lane.b32.xlu0 %v907, 96
        %v990 = vpop.permute.xlu0 %989
        %v991 = vsel %vm913, %v907, 0
        %v993 = vsel %vm913, %v990, 0
        %995 = vmatprep.subr.mxu0 0.0
        %996 = vmatpush1.xpose.msra.mxu0 %v993
        %997 = vmatprep.subr.mxu0 0.0
        %998 = vmatpush1.xpose.msra.mxu0 0.0
        %999 = vmatprep.subr.mxu0 0.0
        %1000 = vmatpush1.xpose.msra.mxu0 0.0
        %1001 = vmatprep.subr.mxu0 0.0
        %1002 = vmatpush1.xpose.msra.mxu0 0.0
        %1003 = vmatprep.subr.mxu0 0.0
        %1004 = vmatpush1.xpose.msra.mxu0 0.0
        %1005 = vmatprep.subr.mxu0 0.0
        %1006 = vmatpush1.xpose.msra.mxu0 0.0
        %1007 = vmatprep.subr.mxu0 0.0
        %1008 = vmatpush1.xpose.msra.mxu0 0.0
        %1009 = vmatprep.subr.mxu0 0.0
        %1010 = vmatpush1.xpose.msra.mxu0 0.0
        %1011 = vmatprep.subr.mxu0 0.0
        %1012 = vmatpush1.xpose.msra.mxu0 0.0
        %1013 = vmatprep.subr.mxu0 0.0
        %1014 = vmatpush1.xpose.msra.mxu0 0.0
        %1015 = vmatprep.subr.mxu0 0.0
        %1016 = vmatpush1.xpose.msra.mxu0 0.0
        %1017 = vmatprep.subr.mxu0 0.0
        %1018 = vmatpush1.xpose.msra.mxu0 0.0
        %1019 = vmatprep.subr.mxu0 0.0
        %1020 = vmatpush1.xpose.msra.mxu0 0.0
        %1021 = vmatprep.subr.mxu0 0.0
        %1022 = vmatpush1.xpose.msra.mxu0 0.0
        %1023 = vmatprep.subr.mxu0 0.0
        %1024 = vmatpush1.xpose.msra.mxu0 0.0
        %1025 = vmatprep.subr.mxu0 0.0
        %1026 = vmatpush1.xpose.msra.mxu0 0.0
        %1027 = vmatprep.subr.mxu0 0.0
        %1028 = vmatpush1.xpose.msra.mxu0 0.0
        %1029 = vmatprep.subr.mxu0 0.0
        %1030 = vmatpush1.xpose.msra.mxu0 0.0
        %1031 = vmatprep.subr.mxu0 0.0
        %1032 = vmatpush1.xpose.msra.mxu0 0.0
        %1033 = vmatprep.subr.mxu0 0.0
        %1034 = vmatpush1.xpose.msra.mxu0 0.0
        %1035 = vmatprep.subr.mxu0 0.0
        %1036 = vmatpush1.xpose.msra.mxu0 0.0
        %1037 = vmatprep.subr.mxu0 0.0
        %1038 = vmatpush1.xpose.msra.mxu0 0.0
        %1039 = vmatprep.subr.mxu0 0.0
        %1040 = vmatpush1.xpose.msra.mxu0 0.0
        %1041 = vmatprep.subr.mxu0 0.0
        %1042 = vmatpush1.xpose.msra.mxu0 0.0
        %1043 = vmatprep.subr.mxu0 0.0
        %1044 = vmatpush1.xpose.msra.mxu0 0.0
        %1045 = vmatprep.subr.mxu0 0.0
        %1046 = vmatpush1.xpose.msra.mxu0 0.0
        %1047 = vmatprep.subr.mxu0 0.0
        %1048 = vmatpush1.xpose.msra.mxu0 0.0
        %1049 = vmatprep.subr.mxu0 0.0
        %1050 = vmatpush1.xpose.msra.mxu0 0.0
        %1051 = vmatprep.subr.mxu0 0.0
        %1052 = vmatpush1.xpose.msra.mxu0 0.0
        %1053 = vmatprep.subr.mxu0 0.0
        %1054 = vmatpush1.xpose.msra.mxu0 0.0
        %1055 = vmatprep.subr.mxu0 0.0
        %1056 = vmatpush1.xpose.msra.mxu0 0.0
        %1057 = vmatprep.subr.mxu0 0.0
        %1058 = vmatpush1.xpose.msra.mxu0 0.0
        %1059 = vmatprep.mubr.f32.mxu0 0.0
        %1060 = vmatmul.mubr.f32.gmra.mrb[0].mxu0 %v991
        %v1061 = vpop.f32.mrb[0].mxu0
        %v1062 = vadd.f32 0.0, %v1061
        %v1063 = vpop.f32.mrb[0].mxu0
        %1064 = vdwg.mxu0
        %v1065 = vmul.f32 %v985, 0.35355338
        %v1066 = vmul.f32 %v1062, 0.35355338
        %v1069 = vunpack.c.l.s4 1966171168
        %v1070 = vunpack.c.0.s8 %v1069
        %v1071 = vlaneseq
        %v1072 = vshrl.u32 %v1071, 7
        %v1073 = vsub.s32 %v1070, %v1072
        %v1074 = vrot.slane %v816, %v1073
        %v1075 = vcombine.high %v1074, %v1074
        %v1077 = vunpack.c.l.s4 1966171168
        %v1078 = vunpack.c.0.s8 %v1077
        %v1079 = vlaneseq
        %v1080 = vshrl.u32 %v1079, 7
        %v1081 = vsub.s32 %v1078, %v1080
        %v1082 = vrot.slane %v1074, %v1081
        %v1084 = vunpack.c.l.s4 1966171168
        %v1085 = vunpack.c.0.s8 %v1084
        %v1086 = vlaneseq
        %v1087 = vshrl.u32 %v1086, 7
        %v1088 = vsub.s32 %v1085, %v1087
        %v1089 = vrot.slane %v1075, %v1088
        %v1090 = vlaneseq
        %v1091 = vshrl.u32 %v1090, 7
        %v1092 = vsub.s32 0, %v1091
        %v1093 = vrot.slane %v1082, %v1092
        %v1094 = vlaneseq
        %v1095 = vshrl.u32 %v1094, 7
        %v1096 = vsub.s32 0, %v1095
        %v1097 = vrot.slane %v1089, %v1096
        %v1100 = vadd.f32 %v1065, %v1093
        %v1101 = vadd.f32 %v1066, %v1097
        %v1102 = vsel %vm913, %v1100, -inf
        %1103 = vmax.xlane.f32.xlu0 %v1102
        %v1104 = vpop.xlane.xlu0 %1103
        %v1105 = vsel %vm913, %v1101, -inf
        %1106 = vmax.xlane.f32.xlu0 %v1105
        %v1107 = vpop.xlane.xlu0 %1106
        %v1108 = vsub.f32 %v1100, %v1104
        %v1109 = vsub.f32 %v1101, %v1107
        %v1110 = vmul.f32 %v1108, 1.442695
        %v1111 = vpow.pop %v1110
        %v1112 = vmul.f32 %v1109, 1.442695
        %v1113 = vpow.pop %v1112
        %v1114 = vsel %vm913, %v1111, 0.0
        %1115 = vadd.xlane.f32.xlu0 %v1114
        %v1116 = vpop.xlane.xlu0 %1115
        %v1117 = vsel %vm913, %v1113, 0.0
        %1118 = vadd.xlane.f32.xlu0 %v1117
        %v1119 = vpop.xlane.xlu0 %1118
        %v1120 = vrcp.pop %v1116
        %v1121 = vrcp.pop %v1119
        %v1122 = vmul.f32 %v1111, %v1120
        %v1123 = vmul.f32 %v1113, %v1121
        %1124 = vrot.lane.b32.xlu0 %v902, 64
        %v1125 = vpop.permute.xlu0 %1124
        %v1128 = vsel %vm913, %v1122, 0
        %1130 = vmatprep.subr.mxu0 0.0
        %1131 = vmatpush1.msra.mxu0 %v1125
        %1132 = vmatprep.subr.mxu0 0.0
        %1133 = vmatpush1.msra.mxu0 0.0
        %1134 = vmatprep.subr.mxu0 0.0
        %1135 = vmatpush1.msra.mxu0 0.0
        %1136 = vmatprep.subr.mxu0 0.0
        %1137 = vmatpush1.msra.mxu0 0.0
        %1138 = vmatprep.subr.mxu0 0.0
        %1139 = vmatpush1.msra.mxu0 0.0
        %1140 = vmatprep.subr.mxu0 0.0
        %1141 = vmatpush1.msra.mxu0 0.0
        %1142 = vmatprep.subr.mxu0 0.0
        %1143 = vmatpush1.msra.mxu0 0.0
        %1144 = vmatprep.subr.mxu0 0.0
        %1145 = vmatpush1.msra.mxu0 0.0
        %1146 = vmatprep.subr.mxu0 0.0
        %1147 = vmatpush1.msra.mxu0 0.0
        %1148 = vmatprep.subr.mxu0 0.0
        %1149 = vmatpush1.msra.mxu0 0.0
        %1150 = vmatprep.subr.mxu0 0.0
        %1151 = vmatpush1.msra.mxu0 0.0
        %1152 = vmatprep.subr.mxu0 0.0
        %1153 = vmatpush1.msra.mxu0 0.0
        %1154 = vmatprep.subr.mxu0 0.0
        %1155 = vmatpush1.msra.mxu0 0.0
        %1156 = vmatprep.subr.mxu0 0.0
        %1157 = vmatpush1.msra.mxu0 0.0
        %1158 = vmatprep.subr.mxu0 0.0
        %1159 = vmatpush1.msra.mxu0 0.0
        %1160 = vmatprep.subr.mxu0 0.0
        %1161 = vmatpush1.msra.mxu0 0.0
        %1162 = vmatprep.subr.mxu0 0.0
        %1163 = vmatpush1.msra.mxu0 0.0
        %1164 = vmatprep.subr.mxu0 0.0
        %1165 = vmatpush1.msra.mxu0 0.0
        %1166 = vmatprep.subr.mxu0 0.0
        %1167 = vmatpush1.msra.mxu0 0.0
        %1168 = vmatprep.subr.mxu0 0.0
        %1169 = vmatpush1.msra.mxu0 0.0
        %1170 = vmatprep.subr.mxu0 0.0
        %1171 = vmatpush1.msra.mxu0 0.0
        %1172 = vmatprep.subr.mxu0 0.0
        %1173 = vmatpush1.msra.mxu0 0.0
        %1174 = vmatprep.subr.mxu0 0.0
        %1175 = vmatpush1.msra.mxu0 0.0
        %1176 = vmatprep.subr.mxu0 0.0
        %1177 = vmatpush1.msra.mxu0 0.0
        %1178 = vmatprep.subr.mxu0 0.0
        %1179 = vmatpush1.msra.mxu0 0.0
        %1180 = vmatprep.subr.mxu0 0.0
        %1181 = vmatpush1.msra.mxu0 0.0
        %1182 = vmatprep.subr.mxu0 0.0
        %1183 = vmatpush1.msra.mxu0 0.0
        %1184 = vmatprep.subr.mxu0 0.0
        %1185 = vmatpush1.msra.mxu0 0.0
        %1186 = vmatprep.subr.mxu0 0.0
        %1187 = vmatpush1.msra.mxu0 0.0
        %1188 = vmatprep.subr.mxu0 0.0
        %1189 = vmatpush1.msra.mxu0 0.0
        %1190 = vmatprep.subr.mxu0 0.0
        %1191 = vmatpush1.msra.mxu0 0.0
        %1192 = vmatprep.subr.mxu0 0.0
        %1193 = vmatpush1.msra.mxu0 0.0
        %1194 = vmatprep.mubr.f32.mxu0 0.0
        %1195 = vmatmul.mubr.f32.gmra.mrb[0].mxu0 %v1128
        %v1196 = vpop.f32.mrb[0].mxu0
        %v1197 = vadd.f32 0.0, %v1196
        %v1198 = vpop.f32.mrb[0].mxu0
        %1199 = vdwg.mxu0
        %1200 = vrot.lane.b32.xlu0 %v907, 64
        %v1201 = vpop.permute.xlu0 %1200
        %v1204 = vsel %vm913, %v1123, 0
        %1206 = vmatprep.subr.mxu0 0.0
        %1207 = vmatpush1.msra.mxu0 %v1201
        %1208 = vmatprep.subr.mxu0 0.0
        %1209 = vmatpush1.msra.mxu0 0.0
        %1210 = vmatprep.subr.mxu0 0.0
        %1211 = vmatpush1.msra.mxu0 0.0
        %1212 = vmatprep.subr.mxu0 0.0
        %1213 = vmatpush1.msra.mxu0 0.0
        %1214 = vmatprep.subr.mxu0 0.0
        %1215 = vmatpush1.msra.mxu0 0.0
        %1216 = vmatprep.subr.mxu0 0.0
        %1217 = vmatpush1.msra.mxu0 0.0
        %1218 = vmatprep.subr.mxu0 0.0
        %1219 = vmatpush1.msra.mxu0 0.0
        %1220 = vmatprep.subr.mxu0 0.0
        %1221 = vmatpush1.msra.mxu0 0.0
        %1222 = vmatprep.subr.mxu0 0.0
        %1223 = vmatpush1.msra.mxu0 0.0
        %1224 = vmatprep.subr.mxu0 0.0
        %1225 = vmatpush1.msra.mxu0 0.0
        %1226 = vmatprep.subr.mxu0 0.0
        %1227 = vmatpush1.msra.mxu0 0.0
        %1228 = vmatprep.subr.mxu0 0.0
        %1229 = vmatpush1.msra.mxu0 0.0
        %1230 = vmatprep.subr.mxu0 0.0
        %1231 = vmatpush1.msra.mxu0 0.0
        %1232 = vmatprep.subr.mxu0 0.0
        %1233 = vmatpush1.msra.mxu0 0.0
        %1234 = vmatprep.subr.mxu0 0.0
        %1235 = vmatpush1.msra.mxu0 0.0
        %1236 = vmatprep.subr.mxu0 0.0
        %1237 = vmatpush1.msra.mxu0 0.0
        %1238 = vmatprep.subr.mxu0 0.0
        %1239 = vmatpush1.msra.mxu0 0.0
        %1240 = vmatprep.subr.mxu0 0.0
        %1241 = vmatpush1.msra.mxu0 0.0
        %1242 = vmatprep.subr.mxu0 0.0
        %1243 = vmatpush1.msra.mxu0 0.0
        %1244 = vmatprep.subr.mxu0 0.0
        %1245 = vmatpush1.msra.mxu0 0.0
        %1246 = vmatprep.subr.mxu0 0.0
        %1247 = vmatpush1.msra.mxu0 0.0
        %1248 = vmatprep.subr.mxu0 0.0
        %1249 = vmatpush1.msra.mxu0 0.0
        %1250 = vmatprep.subr.mxu0 0.0
        %1251 = vmatpush1.msra.mxu0 0.0
        %1252 = vmatprep.subr.mxu0 0.0
        %1253 = vmatpush1.msra.mxu0 0.0
        %1254 = vmatprep.subr.mxu0 0.0
        %1255 = vmatpush1.msra.mxu0 0.0
        %1256 = vmatprep.subr.mxu0 0.0
        %1257 = vmatpush1.msra.mxu0 0.0
        %1258 = vmatprep.subr.mxu0 0.0
        %1259 = vmatpush1.msra.mxu0 0.0
        %1260 = vmatprep.subr.mxu0 0.0
        %1261 = vmatpush1.msra.mxu0 0.0
        %1262 = vmatprep.subr.mxu0 0.0
        %1263 = vmatpush1.msra.mxu0 0.0
        %1264 = vmatprep.subr.mxu0 0.0
        %1265 = vmatpush1.msra.mxu0 0.0
        %1266 = vmatprep.subr.mxu0 0.0
        %1267 = vmatpush1.msra.mxu0 0.0
        %1268 = vmatprep.subr.mxu0 0.0
        %1269 = vmatpush1.msra.mxu0 0.0
        %1270 = vmatprep.mubr.f32.mxu0 0.0
        %1271 = vmatmul.mubr.f32.gmra.mrb[0].mxu0 %v1204
        %v1272 = vpop.f32.mrb[0].mxu0
        %v1273 = vadd.f32 0.0, %v1272
        %v1274 = vpop.f32.mrb[0].mxu0
        %1275 = vdwg.mxu0
        %v1276 = vld [vmem:[%s728] sm:$0xff]
        %1277 = vrot.lane.b32.xlu0 %v902, 120
        %v1278 = vpop.permute.xlu0 %1277
        %1279 = vrot.lane.b32.xlu0 %v902, 88
        %v1280 = vpop.permute.xlu0 %1279
        %v1281 = vsel %vm913, %v1278, 0
        %v1283 = vsel %vm913, %v1280, 0
        %1285 = vmatprep.subr.mxu0 0.0
        %1286 = vmatpush1.xpose.msra.mxu0 %v1283
        %1287 = vmatprep.subr.mxu0 0.0
        %1288 = vmatpush1.xpose.msra.mxu0 0.0
        %1289 = vmatprep.subr.mxu0 0.0
        %1290 = vmatpush1.xpose.msra.mxu0 0.0
        %1291 = vmatprep.subr.mxu0 0.0
        %1292 = vmatpush1.xpose.msra.mxu0 0.0
        %1293 = vmatprep.subr.mxu0 0.0
        %1294 = vmatpush1.xpose.msra.mxu0 0.0
        %1295 = vmatprep.subr.mxu0 0.0
        %1296 = vmatpush1.xpose.msra.mxu0 0.0
        %1297 = vmatprep.subr.mxu0 0.0
        %1298 = vmatpush1.xpose.msra.mxu0 0.0
        %1299 = vmatprep.subr.mxu0 0.0
        %1300 = vmatpush1.xpose.msra.mxu0 0.0
        %1301 = vmatprep.subr.mxu0 0.0
        %1302 = vmatpush1.xpose.msra.mxu0 0.0
        %1303 = vmatprep.subr.mxu0 0.0
        %1304 = vmatpush1.xpose.msra.mxu0 0.0
        %1305 = vmatprep.subr.mxu0 0.0
        %1306 = vmatpush1.xpose.msra.mxu0 0.0
        %1307 = vmatprep.subr.mxu0 0.0
        %1308 = vmatpush1.xpose.msra.mxu0 0.0
        %1309 = vmatprep.subr.mxu0 0.0
        %1310 = vmatpush1.xpose.msra.mxu0 0.0
        %1311 = vmatprep.subr.mxu0 0.0
        %1312 = vmatpush1.xpose.msra.mxu0 0.0
        %1313 = vmatprep.subr.mxu0 0.0
        %1314 = vmatpush1.xpose.msra.mxu0 0.0
        %1315 = vmatprep.subr.mxu0 0.0
        %1316 = vmatpush1.xpose.msra.mxu0 0.0
        %1317 = vmatprep.subr.mxu0 0.0
        %1318 = vmatpush1.xpose.msra.mxu0 0.0
        %1319 = vmatprep.subr.mxu0 0.0
        %1320 = vmatpush1.xpose.msra.mxu0 0.0
        %1321 = vmatprep.subr.mxu0 0.0
        %1322 = vmatpush1.xpose.msra.mxu0 0.0
        %1323 = vmatprep.subr.mxu0 0.0
        %1324 = vmatpush1.xpose.msra.mxu0 0.0
        %1325 = vmatprep.subr.mxu0 0.0
        %1326 = vmatpush1.xpose.msra.mxu0 0.0
        %1327 = vmatprep.subr.mxu0 0.0
        %1328 = vmatpush1.xpose.msra.mxu0 0.0
        %1329 = vmatprep.subr.mxu0 0.0
        %1330 = vmatpush1.xpose.msra.mxu0 0.0
        %1331 = vmatprep.subr.mxu0 0.0
        %1332 = vmatpush1.xpose.msra.mxu0 0.0
        %1333 = vmatprep.subr.mxu0 0.0
        %1334 = vmatpush1.xpose.msra.mxu0 0.0
        %1335 = vmatprep.subr.mxu0 0.0
        %1336 = vmatpush1.xpose.msra.mxu0 0.0
        %1337 = vmatprep.subr.mxu0 0.0
        %1338 = vmatpush1.xpose.msra.mxu0 0.0
        %1339 = vmatprep.subr.mxu0 0.0
        %1340 = vmatpush1.xpose.msra.mxu0 0.0
        %1341 = vmatprep.subr.mxu0 0.0
        %1342 = vmatpush1.xpose.msra.mxu0 0.0
        %1343 = vmatprep.subr.mxu0 0.0
        %1344 = vmatpush1.xpose.msra.mxu0 0.0
        %1345 = vmatprep.subr.mxu0 0.0
        %1346 = vmatpush1.xpose.msra.mxu0 0.0
        %1347 = vmatprep.subr.mxu0 0.0
        %1348 = vmatpush1.xpose.msra.mxu0 0.0
        %1349 = vmatprep.mubr.f32.mxu0 0.0
        %1350 = vmatmul.mubr.f32.gmra.mrb[0].mxu0 %v1281
        %v1351 = vpop.f32.mrb[0].mxu0
        %v1352 = vadd.f32 0.0, %v1351
        %v1353 = vpop.f32.mrb[0].mxu0
        %1354 = vdwg.mxu0
        %1355 = vrot.lane.b32.xlu0 %v907, 120
        %v1356 = vpop.permute.xlu0 %1355
        %1357 = vrot.lane.b32.xlu0 %v907, 88
        %v1358 = vpop.permute.xlu0 %1357
        %v1359 = vsel %vm913, %v1356, 0
        %v1361 = vsel %vm913, %v1358, 0
        %1363 = vmatprep.subr.mxu0 0.0
        %1364 = vmatpush1.xpose.msra.mxu0 %v1361
        %1365 = vmatprep.subr.mxu0 0.0
        %1366 = vmatpush1.xpose.msra.mxu0 0.0
        %1367 = vmatprep.subr.mxu0 0.0
        %1368 = vmatpush1.xpose.msra.mxu0 0.0
        %1369 = vmatprep.subr.mxu0 0.0
        %1370 = vmatpush1.xpose.msra.mxu0 0.0
        %1371 = vmatprep.subr.mxu0 0.0
        %1372 = vmatpush1.xpose.msra.mxu0 0.0
        %1373 = vmatprep.subr.mxu0 0.0
        %1374 = vmatpush1.xpose.msra.mxu0 0.0
        %1375 = vmatprep.subr.mxu0 0.0
        %1376 = vmatpush1.xpose.msra.mxu0 0.0
        %1377 = vmatprep.subr.mxu0 0.0
        %1378 = vmatpush1.xpose.msra.mxu0 0.0
        %1379 = vmatprep.subr.mxu0 0.0
        %1380 = vmatpush1.xpose.msra.mxu0 0.0
        %1381 = vmatprep.subr.mxu0 0.0
        %1382 = vmatpush1.xpose.msra.mxu0 0.0
        %1383 = vmatprep.subr.mxu0 0.0
        %1384 = vmatpush1.xpose.msra.mxu0 0.0
        %1385 = vmatprep.subr.mxu0 0.0
        %1386 = vmatpush1.xpose.msra.mxu0 0.0
        %1387 = vmatprep.subr.mxu0 0.0
        %1388 = vmatpush1.xpose.msra.mxu0 0.0
        %1389 = vmatprep.subr.mxu0 0.0
        %1390 = vmatpush1.xpose.msra.mxu0 0.0
        %1391 = vmatprep.subr.mxu0 0.0
        %1392 = vmatpush1.xpose.msra.mxu0 0.0
        %1393 = vmatprep.subr.mxu0 0.0
        %1394 = vmatpush1.xpose.msra.mxu0 0.0
        %1395 = vmatprep.subr.mxu0 0.0
        %1396 = vmatpush1.xpose.msra.mxu0 0.0
        %1397 = vmatprep.subr.mxu0 0.0
        %1398 = vmatpush1.xpose.msra.mxu0 0.0
        %1399 = vmatprep.subr.mxu0 0.0
        %1400 = vmatpush1.xpose.msra.mxu0 0.0
        %1401 = vmatprep.subr.mxu0 0.0
        %1402 = vmatpush1.xpose.msra.mxu0 0.0
        %1403 = vmatprep.subr.mxu0 0.0
        %1404 = vmatpush1.xpose.msra.mxu0 0.0
        %1405 = vmatprep.subr.mxu0 0.0
        %1406 = vmatpush1.xpose.msra.mxu0 0.0
        %1407 = vmatprep.subr.mxu0 0.0
        %1408 = vmatpush1.xpose.msra.mxu0 0.0
        %1409 = vmatprep.subr.mxu0 0.0
        %1410 = vmatpush1.xpose.msra.mxu0 0.0
        %1411 = vmatprep.subr.mxu0 0.0
        %1412 = vmatpush1.xpose.msra.mxu0 0.0
        %1413 = vmatprep.subr.mxu0 0.0
        %1414 = vmatpush1.xpose.msra.mxu0 0.0
        %1415 = vmatprep.subr.mxu0 0.0
        %1416 = vmatpush1.xpose.msra.mxu0 0.0
        %1417 = vmatprep.subr.mxu0 0.0
        %1418 = vmatpush1.xpose.msra.mxu0 0.0
        %1419 = vmatprep.subr.mxu0 0.0
        %1420 = vmatpush1.xpose.msra.mxu0 0.0
        %1421 = vmatprep.subr.mxu0 0.0
        %1422 = vmatpush1.xpose.msra.mxu0 0.0
        %1423 = vmatprep.subr.mxu0 0.0
        %1424 = vmatpush1.xpose.msra.mxu0 0.0
        %1425 = vmatprep.subr.mxu0 0.0
        %1426 = vmatpush1.xpose.msra.mxu0 0.0
        %1427 = vmatprep.mubr.f32.mxu0 0.0
        %1428 = vmatmul.mubr.f32.gmra.mrb[0].mxu0 %v1359
        %v1429 = vpop.f32.mrb[0].mxu0
        %v1430 = vadd.f32 0.0, %v1429
        %v1431 = vpop.f32.mrb[0].mxu0
        %1432 = vdwg.mxu0
        %v1433 = vmul.f32 %v1352, 0.35355338
        %v1434 = vmul.f32 %v1430, 0.35355338
        %v1435 = vadd.f32 %v1433, %v1093
        %v1436 = vadd.f32 %v1434, %v1097
        %v1437 = vsel %vm913, %v1435, -inf
        %1438 = vmax.xlane.f32.xlu0 %v1437
        %v1439 = vpop.xlane.xlu0 %1438
        %v1440 = vsel %vm913, %v1436, -inf
        %1441 = vmax.xlane.f32.xlu0 %v1440
        %v1442 = vpop.xlane.xlu0 %1441
        %v1443 = vsub.f32 %v1435, %v1439
        %v1444 = vsub.f32 %v1436, %v1442
        %v1445 = vmul.f32 %v1443, 1.442695
        %v1446 = vpow.pop %v1445
        %v1447 = vmul.f32 %v1444, 1.442695
        %v1448 = vpow.pop %v1447
        %v1449 = vsel %vm913, %v1446, 0.0
        %1450 = vadd.xlane.f32.xlu0 %v1449
        %v1451 = vpop.xlane.xlu0 %1450
        %v1452 = vsel %vm913, %v1448, 0.0
        %1453 = vadd.xlane.f32.xlu0 %v1452
        %v1454 = vpop.xlane.xlu0 %1453
        %v1455 = vrcp.pop %v1451
        %v1456 = vrcp.pop %v1454
        %v1457 = vmul.f32 %v1446, %v1455
        %v1458 = vmul.f32 %v1448, %v1456
        %1459 = vrot.lane.b32.xlu0 %v902, 56
        %v1460 = vpop.permute.xlu0 %1459
        %v1463 = vsel %vm913, %v1457, 0
        %1465 = vmatprep.subr.mxu0 0.0
        %1466 = vmatpush1.msra.mxu0 %v1460
        %1467 = vmatprep.subr.mxu0 0.0
        %1468 = vmatpush1.msra.mxu0 0.0
        %1469 = vmatprep.subr.mxu0 0.0
        %1470 = vmatpush1.msra.mxu0 0.0
        %1471 = vmatprep.subr.mxu0 0.0
        %1472 = vmatpush1.msra.mxu0 0.0
        %1473 = vmatprep.subr.mxu0 0.0
        %1474 = vmatpush1.msra.mxu0 0.0
        %1475 = vmatprep.subr.mxu0 0.0
        %1476 = vmatpush1.msra.mxu0 0.0
        %1477 = vmatprep.subr.mxu0 0.0
        %1478 = vmatpush1.msra.mxu0 0.0
        %1479 = vmatprep.subr.mxu0 0.0
        %1480 = vmatpush1.msra.mxu0 0.0
        %1481 = vmatprep.subr.mxu0 0.0
        %1482 = vmatpush1.msra.mxu0 0.0
        %1483 = vmatprep.subr.mxu0 0.0
        %1484 = vmatpush1.msra.mxu0 0.0
        %1485 = vmatprep.subr.mxu0 0.0
        %1486 = vmatpush1.msra.mxu0 0.0
        %1487 = vmatprep.subr.mxu0 0.0
        %1488 = vmatpush1.msra.mxu0 0.0
        %1489 = vmatprep.subr.mxu0 0.0
        %1490 = vmatpush1.msra.mxu0 0.0
        %1491 = vmatprep.subr.mxu0 0.0
        %1492 = vmatpush1.msra.mxu0 0.0
        %1493 = vmatprep.subr.mxu0 0.0
        %1494 = vmatpush1.msra.mxu0 0.0
        %1495 = vmatprep.subr.mxu0 0.0
        %1496 = vmatpush1.msra.mxu0 0.0
        %1497 = vmatprep.subr.mxu0 0.0
        %1498 = vmatpush1.msra.mxu0 0.0
        %1499 = vmatprep.subr.mxu0 0.0
        %1500 = vmatpush1.msra.mxu0 0.0
        %1501 = vmatprep.subr.mxu0 0.0
        %1502 = vmatpush1.msra.mxu0 0.0
        %1503 = vmatprep.subr.mxu0 0.0
        %1504 = vmatpush1.msra.mxu0 0.0
        %1505 = vmatprep.subr.mxu0 0.0
        %1506 = vmatpush1.msra.mxu0 0.0
        %1507 = vmatprep.subr.mxu0 0.0
        %1508 = vmatpush1.msra.mxu0 0.0
        %1509 = vmatprep.subr.mxu0 0.0
        %1510 = vmatpush1.msra.mxu0 0.0
        %1511 = vmatprep.subr.mxu0 0.0
        %1512 = vmatpush1.msra.mxu0 0.0
        %1513 = vmatprep.subr.mxu0 0.0
        %1514 = vmatpush1.msra.mxu0 0.0
        %1515 = vmatprep.subr.mxu0 0.0
        %1516 = vmatpush1.msra.mxu0 0.0
        %1517 = vmatprep.subr.mxu0 0.0
        %1518 = vmatpush1.msra.mxu0 0.0
        %1519 = vmatprep.subr.mxu0 0.0
        %1520 = vmatpush1.msra.mxu0 0.0
        %1521 = vmatprep.subr.mxu0 0.0
        %1522 = vmatpush1.msra.mxu0 0.0
        %1523 = vmatprep.subr.mxu0 0.0
        %1524 = vmatpush1.msra.mxu0 0.0
        %1525 = vmatprep.subr.mxu0 0.0
        %1526 = vmatpush1.msra.mxu0 0.0
        %1527 = vmatprep.subr.mxu0 0.0
        %1528 = vmatpush1.msra.mxu0 0.0
        %1529 = vmatprep.mubr.f32.mxu0 0.0
        %1530 = vmatmul.mubr.f32.gmra.mrb[0].mxu0 %v1463
        %v1531 = vpop.f32.mrb[0].mxu0
        %v1532 = vadd.f32 0.0, %v1531
        %v1533 = vpop.f32.mrb[0].mxu0
        %1534 = vdwg.mxu0
        %1535 = vrot.lane.b32.xlu0 %v907, 56
        %v1536 = vpop.permute.xlu0 %1535
        %v1539 = vsel %vm913, %v1458, 0
        %1541 = vmatprep.subr.mxu0 0.0
        %1542 = vmatpush1.msra.mxu0 %v1536
        %1543 = vmatprep.subr.mxu0 0.0
        %1544 = vmatpush1.msra.mxu0 0.0
        %1545 = vmatprep.subr.mxu0 0.0
        %1546 = vmatpush1.msra.mxu0 0.0
        %1547 = vmatprep.subr.mxu0 0.0
        %1548 = vmatpush1.msra.mxu0 0.0
        %1549 = vmatprep.subr.mxu0 0.0
        %1550 = vmatpush1.msra.mxu0 0.0
        %1551 = vmatprep.subr.mxu0 0.0
        %1552 = vmatpush1.msra.mxu0 0.0
        %1553 = vmatprep.subr.mxu0 0.0
        %1554 = vmatpush1.msra.mxu0 0.0
        %1555 = vmatprep.subr.mxu0 0.0
        %1556 = vmatpush1.msra.mxu0 0.0
        %1557 = vmatprep.subr.mxu0 0.0
        %1558 = vmatpush1.msra.mxu0 0.0
        %1559 = vmatprep.subr.mxu0 0.0
        %1560 = vmatpush1.msra.mxu0 0.0
        %1561 = vmatprep.subr.mxu0 0.0
        %1562 = vmatpush1.msra.mxu0 0.0
        %1563 = vmatprep.subr.mxu0 0.0
        %1564 = vmatpush1.msra.mxu0 0.0
        %1565 = vmatprep.subr.mxu0 0.0
        %1566 = vmatpush1.msra.mxu0 0.0
        %1567 = vmatprep.subr.mxu0 0.0
        %1568 = vmatpush1.msra.mxu0 0.0
        %1569 = vmatprep.subr.mxu0 0.0
        %1570 = vmatpush1.msra.mxu0 0.0
        %1571 = vmatprep.subr.mxu0 0.0
        %1572 = vmatpush1.msra.mxu0 0.0
        %1573 = vmatprep.subr.mxu0 0.0
        %1574 = vmatpush1.msra.mxu0 0.0
        %1575 = vmatprep.subr.mxu0 0.0
        %1576 = vmatpush1.msra.mxu0 0.0
        %1577 = vmatprep.subr.mxu0 0.0
        %1578 = vmatpush1.msra.mxu0 0.0
        %1579 = vmatprep.subr.mxu0 0.0
        %1580 = vmatpush1.msra.mxu0 0.0
        %1581 = vmatprep.subr.mxu0 0.0
        %1582 = vmatpush1.msra.mxu0 0.0
        %1583 = vmatprep.subr.mxu0 0.0
        %1584 = vmatpush1.msra.mxu0 0.0
        %1585 = vmatprep.subr.mxu0 0.0
        %1586 = vmatpush1.msra.mxu0 0.0
        %1587 = vmatprep.subr.mxu0 0.0
        %1588 = vmatpush1.msra.mxu0 0.0
        %1589 = vmatprep.subr.mxu0 0.0
        %1590 = vmatpush1.msra.mxu0 0.0
        %1591 = vmatprep.subr.mxu0 0.0
        %1592 = vmatpush1.msra.mxu0 0.0
        %1593 = vmatprep.subr.mxu0 0.0
        %1594 = vmatpush1.msra.mxu0 0.0
        %1595 = vmatprep.subr.mxu0 0.0
        %1596 = vmatpush1.msra.mxu0 0.0
        %1597 = vmatprep.subr.mxu0 0.0
        %1598 = vmatpush1.msra.mxu0 0.0
        %1599 = vmatprep.subr.mxu0 0.0
        %1600 = vmatpush1.msra.mxu0 0.0
        %1601 = vmatprep.subr.mxu0 0.0
        %1602 = vmatpush1.msra.mxu0 0.0
        %1603 = vmatprep.subr.mxu0 0.0
        %1604 = vmatpush1.msra.mxu0 0.0
        %1605 = vmatprep.mubr.f32.mxu0 0.0
        %1606 = vmatmul.mubr.f32.gmra.mrb[0].mxu0 %v1539
        %v1607 = vpop.f32.mrb[0].mxu0
        %v1608 = vadd.f32 0.0, %v1607
        %v1609 = vpop.f32.mrb[0].mxu0
        %1610 = vdwg.mxu0
        %v1611 = vld [vmem:[%s728 + $0x8] sm:$0xff]
        %v1613 = vsel %vm913, %v1532, 0
        %v1616 = vsel %vm913, %v1608, 0
        %1618 = vmatprep.subr.mxu0 0.0
        %1619 = vmatpush1.msra.mxu0 %v1611
        %1620 = vmatprep.subr.mxu0 0.0
        %1621 = vmatpush1.msra.mxu0 0.0
        %1622 = vmatprep.subr.mxu0 0.0
        %1623 = vmatpush1.msra.mxu0 0.0
        %1624 = vmatprep.subr.mxu0 0.0
        %1625 = vmatpush1.msra.mxu0 0.0
        %1626 = vmatprep.subr.mxu0 0.0
        %1627 = vmatpush1.msra.mxu0 0.0
        %1628 = vmatprep.subr.mxu0 0.0
        %1629 = vmatpush1.msra.mxu0 0.0
        %1630 = vmatprep.subr.mxu0 0.0
        %1631 = vmatpush1.msra.mxu0 0.0
        %1632 = vmatprep.subr.mxu0 0.0
        %1633 = vmatpush1.msra.mxu0 0.0
        %1634 = vmatprep.subr.mxu0 0.0
        %1635 = vmatpush1.msra.mxu0 0.0
        %1636 = vmatprep.subr.mxu0 0.0
        %1637 = vmatpush1.msra.mxu0 0.0
        %1638 = vmatprep.subr.mxu0 0.0
        %1639 = vmatpush1.msra.mxu0 0.0
        %1640 = vmatprep.subr.mxu0 0.0
        %1641 = vmatpush1.msra.mxu0 0.0
        %1642 = vmatprep.subr.mxu0 0.0
        %1643 = vmatpush1.msra.mxu0 0.0
        %1644 = vmatprep.subr.mxu0 0.0
        %1645 = vmatpush1.msra.mxu0 0.0
        %1646 = vmatprep.subr.mxu0 0.0
        %1647 = vmatpush1.msra.mxu0 0.0
        %1648 = vmatprep.subr.mxu0 0.0
        %1649 = vmatpush1.msra.mxu0 0.0
        %1650 = vmatprep.subr.mxu0 0.0
        %1651 = vmatpush1.msra.mxu0 0.0
        %1652 = vmatprep.subr.mxu0 0.0
        %1653 = vmatpush1.msra.mxu0 0.0
        %1654 = vmatprep.subr.mxu0 0.0
        %1655 = vmatpush1.msra.mxu0 0.0
        %1656 = vmatprep.subr.mxu0 0.0
        %1657 = vmatpush1.msra.mxu0 0.0
        %1658 = vmatprep.subr.mxu0 0.0
        %1659 = vmatpush1.msra.mxu0 0.0
        %1660 = vmatprep.subr.mxu0 0.0
        %1661 = vmatpush1.msra.mxu0 0.0
        %1662 = vmatprep.subr.mxu0 0.0
        %1663 = vmatpush1.msra.mxu0 0.0
        %1664 = vmatprep.subr.mxu0 0.0
        %1665 = vmatpush1.msra.mxu0 0.0
        %1666 = vmatprep.subr.mxu0 0.0
        %1667 = vmatpush1.msra.mxu0 0.0
        %1668 = vmatprep.subr.mxu0 0.0
        %1669 = vmatpush1.msra.mxu0 0.0
        %1670 = vmatprep.subr.mxu0 0.0
        %1671 = vmatpush1.msra.mxu0 0.0
        %1672 = vmatprep.subr.mxu0 0.0
        %1673 = vmatpush1.msra.mxu0 0.0
        %1674 = vmatprep.subr.mxu0 0.0
        %1675 = vmatpush1.msra.mxu0 0.0
        %1676 = vmatprep.subr.mxu0 0.0
        %1677 = vmatpush1.msra.mxu0 0.0
        %1678 = vmatprep.subr.mxu0 0.0
        %1679 = vmatpush1.msra.mxu0 0.0
        %1680 = vmatprep.subr.mxu0 0.0
        %1681 = vmatpush1.msra.mxu0 0.0
        %1682 = vmatprep.mubr.f32.mxu0 0.0
        %1683 = vmatmul.mubr.f32.gmra.mrb[0].mxu0 %v1613
        %v1684 = vpop.f32.mrb[0].mxu0
        %v1685 = vadd.f32 0.0, %v1684
        %v1686 = vpop.f32.mrb[0].mxu0
        %1687 = vmatprep.mubr.f32.mxu0 0.0
        %1688 = vmatmul.mubr.f32.gmra.mrb[0].mxu0 %v1616
        %v1689 = vpop.f32.mrb[0].mxu0
        %v1690 = vadd.f32 0.0, %v1689
        %v1691 = vpop.f32.mrb[0].mxu0
        %1692 = vdwg.mxu0
        %v1694 = vsel %vm913, %v1197, 0
        %v1697 = vsel %vm913, %v1273, 0
        %1699 = vmatprep.subr.mxu0 0.0
        %1700 = vmatpush1.msra.mxu0 %v1276
        %1701 = vmatprep.subr.mxu0 0.0
        %1702 = vmatpush1.msra.mxu0 0.0
        %1703 = vmatprep.subr.mxu0 0.0
        %1704 = vmatpush1.msra.mxu0 0.0
        %1705 = vmatprep.subr.mxu0 0.0
        %1706 = vmatpush1.msra.mxu0 0.0
        %1707 = vmatprep.subr.mxu0 0.0
        %1708 = vmatpush1.msra.mxu0 0.0
        %1709 = vmatprep.subr.mxu0 0.0
        %1710 = vmatpush1.msra.mxu0 0.0
        %1711 = vmatprep.subr.mxu0 0.0
        %1712 = vmatpush1.msra.mxu0 0.0
        %1713 = vmatprep.subr.mxu0 0.0
        %1714 = vmatpush1.msra.mxu0 0.0
        %1715 = vmatprep.subr.mxu0 0.0
        %1716 = vmatpush1.msra.mxu0 0.0
        %1717 = vmatprep.subr.mxu0 0.0
        %1718 = vmatpush1.msra.mxu0 0.0
        %1719 = vmatprep.subr.mxu0 0.0
        %1720 = vmatpush1.msra.mxu0 0.0
        %1721 = vmatprep.subr.mxu0 0.0
        %1722 = vmatpush1.msra.mxu0 0.0
        %1723 = vmatprep.subr.mxu0 0.0
        %1724 = vmatpush1.msra.mxu0 0.0
        %1725 = vmatprep.subr.mxu0 0.0
        %1726 = vmatpush1.msra.mxu0 0.0
        %1727 = vmatprep.subr.mxu0 0.0
        %1728 = vmatpush1.msra.mxu0 0.0
        %1729 = vmatprep.subr.mxu0 0.0
        %1730 = vmatpush1.msra.mxu0 0.0
        %1731 = vmatprep.subr.mxu0 0.0
        %1732 = vmatpush1.msra.mxu0 0.0
        %1733 = vmatprep.subr.mxu0 0.0
        %1734 = vmatpush1.msra.mxu0 0.0
        %1735 = vmatprep.subr.mxu0 0.0
        %1736 = vmatpush1.msra.mxu0 0.0
        %1737 = vmatprep.subr.mxu0 0.0
        %1738 = vmatpush1.msra.mxu0 0.0
        %1739 = vmatprep.subr.mxu0 0.0
        %1740 = vmatpush1.msra.mxu0 0.0
        %1741 = vmatprep.subr.mxu0 0.0
        %1742 = vmatpush1.msra.mxu0 0.0
        %1743 = vmatprep.subr.mxu0 0.0
        %1744 = vmatpush1.msra.mxu0 0.0
        %1745 = vmatprep.subr.mxu0 0.0
        %1746 = vmatpush1.msra.mxu0 0.0
        %1747 = vmatprep.subr.mxu0 0.0
        %1748 = vmatpush1.msra.mxu0 0.0
        %1749 = vmatprep.subr.mxu0 0.0
        %1750 = vmatpush1.msra.mxu0 0.0
        %1751 = vmatprep.subr.mxu0 0.0
        %1752 = vmatpush1.msra.mxu0 0.0
        %1753 = vmatprep.subr.mxu0 0.0
        %1754 = vmatpush1.msra.mxu0 0.0
        %1755 = vmatprep.subr.mxu0 0.0
        %1756 = vmatpush1.msra.mxu0 0.0
        %1757 = vmatprep.subr.mxu0 0.0
        %1758 = vmatpush1.msra.mxu0 0.0
        %1759 = vmatprep.subr.mxu0 0.0
        %1760 = vmatpush1.msra.mxu0 0.0
        %1761 = vmatprep.subr.mxu0 0.0
        %1762 = vmatpush1.msra.mxu0 0.0
        %1763 = vmatprep.mubr.f32.mxu0 0.0
        %1764 = vmatmul.mubr.f32.gmra.mrb[0].mxu0 %v1694
        %v1765 = vpop.f32.mrb[0].mxu0
        %v1766 = vadd.f32 %v1685, %v1765
        %v1767 = vpop.f32.mrb[0].mxu0
        %1768 = vmatprep.mubr.f32.mxu0 0.0
        %1769 = vmatmul.mubr.f32.gmra.mrb[0].mxu0 %v1697
        %v1770 = vpop.f32.mrb[0].mxu0
        %v1771 = vadd.f32 %v1690, %v1770
        %v1772 = vpop.f32.mrb[0].mxu0
        %1773 = vdwg.mxu0
        %1774 = vrot.lane.b32.xlu0 %v902, 112
        %v1775 = vpop.permute.xlu0 %1774
        %1776 = vrot.lane.b32.xlu0 %v902, 80
        %v1777 = vpop.permute.xlu0 %1776
        %v1778 = vsel %vm913, %v1775, 0
        %v1780 = vsel %vm913, %v1777, 0
        %1782 = vmatprep.subr.mxu0 0.0
        %1783 = vmatpush1.xpose.msra.mxu0 %v1780
        %1784 = vmatprep.subr.mxu0 0.0
        %1785 = vmatpush1.xpose.msra.mxu0 0.0
        %1786 = vmatprep.subr.mxu0 0.0
        %1787 = vmatpush1.xpose.msra.mxu0 0.0
        %1788 = vmatprep.subr.mxu0 0.0
        %1789 = vmatpush1.xpose.msra.mxu0 0.0
        %1790 = vmatprep.subr.mxu0 0.0
        %1791 = vmatpush1.xpose.msra.mxu0 0.0
        %1792 = vmatprep.subr.mxu0 0.0
        %1793 = vmatpush1.xpose.msra.mxu0 0.0
        %1794 = vmatprep.subr.mxu0 0.0
        %1795 = vmatpush1.xpose.msra.mxu0 0.0
        %1796 = vmatprep.subr.mxu0 0.0
        %1797 = vmatpush1.xpose.msra.mxu0 0.0
        %1798 = vmatprep.subr.mxu0 0.0
        %1799 = vmatpush1.xpose.msra.mxu0 0.0
        %1800 = vmatprep.subr.mxu0 0.0
        %1801 = vmatpush1.xpose.msra.mxu0 0.0
        %1802 = vmatprep.subr.mxu0 0.0
        %1803 = vmatpush1.xpose.msra.mxu0 0.0
        %1804 = vmatprep.subr.mxu0 0.0
        %1805 = vmatpush1.xpose.msra.mxu0 0.0
        %1806 = vmatprep.subr.mxu0 0.0
        %1807 = vmatpush1.xpose.msra.mxu0 0.0
        %1808 = vmatprep.subr.mxu0 0.0
        %1809 = vmatpush1.xpose.msra.mxu0 0.0
        %1810 = vmatprep.subr.mxu0 0.0
        %1811 = vmatpush1.xpose.msra.mxu0 0.0
        %1812 = vmatprep.subr.mxu0 0.0
        %1813 = vmatpush1.xpose.msra.mxu0 0.0
        %1814 = vmatprep.subr.mxu0 0.0
        %1815 = vmatpush1.xpose.msra.mxu0 0.0
        %1816 = vmatprep.subr.mxu0 0.0
        %1817 = vmatpush1.xpose.msra.mxu0 0.0
        %1818 = vmatprep.subr.mxu0 0.0
        %1819 = vmatpush1.xpose.msra.mxu0 0.0
        %1820 = vmatprep.subr.mxu0 0.0
        %1821 = vmatpush1.xpose.msra.mxu0 0.0
        %1822 = vmatprep.subr.mxu0 0.0
        %1823 = vmatpush1.xpose.msra.mxu0 0.0
        %1824 = vmatprep.subr.mxu0 0.0
        %1825 = vmatpush1.xpose.msra.mxu0 0.0
        %1826 = vmatprep.subr.mxu0 0.0
        %1827 = vmatpush1.xpose.msra.mxu0 0.0
        %1828 = vmatprep.subr.mxu0 0.0
        %1829 = vmatpush1.xpose.msra.mxu0 0.0
        %1830 = vmatprep.subr.mxu0 0.0
        %1831 = vmatpush1.xpose.msra.mxu0 0.0
        %1832 = vmatprep.subr.mxu0 0.0
        %1833 = vmatpush1.xpose.msra.mxu0 0.0
        %1834 = vmatprep.subr.mxu0 0.0
        %1835 = vmatpush1.xpose.msra.mxu0 0.0
        %1836 = vmatprep.subr.mxu0 0.0
        %1837 = vmatpush1.xpose.msra.mxu0 0.0
        %1838 = vmatprep.subr.mxu0 0.0
        %1839 = vmatpush1.xpose.msra.mxu0 0.0
        %1840 = vmatprep.subr.mxu0 0.0
        %1841 = vmatpush1.xpose.msra.mxu0 0.0
        %1842 = vmatprep.subr.mxu0 0.0
        %1843 = vmatpush1.xpose.msra.mxu0 0.0
        %1844 = vmatprep.subr.mxu0 0.0
        %1845 = vmatpush1.xpose.msra.mxu0 0.0
        %1846 = vmatprep.mubr.f32.mxu0 0.0
        %1847 = vmatmul.mubr.f32.gmra.mrb[0].mxu0 %v1778
        %v1848 = vpop.f32.mrb[0].mxu0
        %v1849 = vadd.f32 0.0, %v1848
        %v1850 = vpop.f32.mrb[0].mxu0
        %1851 = vdwg.mxu0
        %1852 = vrot.lane.b32.xlu0 %v907, 112
        %v1853 = vpop.permute.xlu0 %1852
        %1854 = vrot.lane.b32.xlu0 %v907, 80
        %v1855 = vpop.permute.xlu0 %1854
        %v1856 = vsel %vm913, %v1853, 0
        %v1858 = vsel %vm913, %v1855, 0
        %1860 = vmatprep.subr.mxu0 0.0
        %1861 = vmatpush1.xpose.msra.mxu0 %v1858
        %1862 = vmatprep.subr.mxu0 0.0
        %1863 = vmatpush1.xpose.msra.mxu0 0.0
        %1864 = vmatprep.subr.mxu0 0.0
        %1865 = vmatpush1.xpose.msra.mxu0 0.0
        %1866 = vmatprep.subr.mxu0 0.0
        %1867 = vmatpush1.xpose.msra.mxu0 0.0
        %1868 = vmatprep.subr.mxu0 0.0
        %1869 = vmatpush1.xpose.msra.mxu0 0.0
        %1870 = vmatprep.subr.mxu0 0.0
        %1871 = vmatpush1.xpose.msra.mxu0 0.0
        %1872 = vmatprep.subr.mxu0 0.0
        %1873 = vmatpush1.xpose.msra.mxu0 0.0
        %1874 = vmatprep.subr.mxu0 0.0
        %1875 = vmatpush1.xpose.msra.mxu0 0.0
        %1876 = vmatprep.subr.mxu0 0.0
        %1877 = vmatpush1.xpose.msra.mxu0 0.0
        %1878 = vmatprep.subr.mxu0 0.0
        %1879 = vmatpush1.xpose.msra.mxu0 0.0
        %1880 = vmatprep.subr.mxu0 0.0
        %1881 = vmatpush1.xpose.msra.mxu0 0.0
        %1882 = vmatprep.subr.mxu0 0.0
        %1883 = vmatpush1.xpose.msra.mxu0 0.0
        %1884 = vmatprep.subr.mxu0 0.0
        %1885 = vmatpush1.xpose.msra.mxu0 0.0
        %1886 = vmatprep.subr.mxu0 0.0
        %1887 = vmatpush1.xpose.msra.mxu0 0.0
        %1888 = vmatprep.subr.mxu0 0.0
        %1889 = vmatpush1.xpose.msra.mxu0 0.0
        %1890 = vmatprep.subr.mxu0 0.0
        %1891 = vmatpush1.xpose.msra.mxu0 0.0
        %1892 = vmatprep.subr.mxu0 0.0
        %1893 = vmatpush1.xpose.msra.mxu0 0.0
        %1894 = vmatprep.subr.mxu0 0.0
        %1895 = vmatpush1.xpose.msra.mxu0 0.0
        %1896 = vmatprep.subr.mxu0 0.0
        %1897 = vmatpush1.xpose.msra.mxu0 0.0
        %1898 = vmatprep.subr.mxu0 0.0
        %1899 = vmatpush1.xpose.msra.mxu0 0.0
        %1900 = vmatprep.subr.mxu0 0.0
        %1901 = vmatpush1.xpose.msra.mxu0 0.0
        %1902 = vmatprep.subr.mxu0 0.0
        %1903 = vmatpush1.xpose.msra.mxu0 0.0
        %1904 = vmatprep.subr.mxu0 0.0
        %1905 = vmatpush1.xpose.msra.mxu0 0.0
        %1906 = vmatprep.subr.mxu0 0.0
        %1907 = vmatpush1.xpose.msra.mxu0 0.0
        %1908 = vmatprep.subr.mxu0 0.0
        %1909 = vmatpush1.xpose.msra.mxu0 0.0
        %1910 = vmatprep.subr.mxu0 0.0
        %1911 = vmatpush1.xpose.msra.mxu0 0.0
        %1912 = vmatprep.subr.mxu0 0.0
        %1913 = vmatpush1.xpose.msra.mxu0 0.0
        %1914 = vmatprep.subr.mxu0 0.0
        %1915 = vmatpush1.xpose.msra.mxu0 0.0
        %1916 = vmatprep.subr.mxu0 0.0
        %1917 = vmatpush1.xpose.msra.mxu0 0.0
        %1918 = vmatprep.subr.mxu0 0.0
        %1919 = vmatpush1.xpose.msra.mxu0 0.0
        %1920 = vmatprep.subr.mxu0 0.0
        %1921 = vmatpush1.xpose.msra.mxu0 0.0
        %1922 = vmatprep.subr.mxu0 0.0
        %1923 = vmatpush1.xpose.msra.mxu0 0.0
        %1924 = vmatprep.mubr.f32.mxu0 0.0
        %1925 = vmatmul.mubr.f32.gmra.mrb[0].mxu0 %v1856
        %v1926 = vpop.f32.mrb[0].mxu0
        %v1927 = vadd.f32 0.0, %v1926
        %v1928 = vpop.f32.mrb[0].mxu0
        %1929 = vdwg.mxu0
        %v1930 = vmul.f32 %v1849, 0.35355338
        %v1931 = vmul.f32 %v1927, 0.35355338
        %v1932 = vadd.f32 %v1930, %v1093
        %v1933 = vadd.f32 %v1931, %v1097
        %v1934 = vsel %vm913, %v1932, -inf
        %1935 = vmax.xlane.f32.xlu0 %v1934
        %v1936 = vpop.xlane.xlu0 %1935
        %v1937 = vsel %vm913, %v1933, -inf
        %1938 = vmax.xlane.f32.xlu0 %v1937
        %v1939 = vpop.xlane.xlu0 %1938
        %v1940 = vsub.f32 %v1932, %v1936
        %v1941 = vsub.f32 %v1933, %v1939
        %v1942 = vmul.f32 %v1940, 1.442695
        %v1943 = vpow.pop %v1942
        %v1944 = vmul.f32 %v1941, 1.442695
        %v1945 = vpow.pop %v1944
        %v1946 = vsel %vm913, %v1943, 0.0
        %1947 = vadd.xlane.f32.xlu0 %v1946
        %v1948 = vpop.xlane.xlu0 %1947
        %v1949 = vsel %vm913, %v1945, 0.0
        %1950 = vadd.xlane.f32.xlu0 %v1949
        %v1951 = vpop.xlane.xlu0 %1950
        %v1952 = vrcp.pop %v1948
        %v1953 = vrcp.pop %v1951
        %v1954 = vmul.f32 %v1943, %v1952
        %v1955 = vmul.f32 %v1945, %v1953
        %1956 = vrot.lane.b32.xlu0 %v902, 48
        %v1957 = vpop.permute.xlu0 %1956
        %v1960 = vsel %vm913, %v1954, 0
        %1962 = vmatprep.subr.mxu0 0.0
        %1963 = vmatpush1.msra.mxu0 %v1957
        %1964 = vmatprep.subr.mxu0 0.0
        %1965 = vmatpush1.msra.mxu0 0.0
        %1966 = vmatprep.subr.mxu0 0.0
        %1967 = vmatpush1.msra.mxu0 0.0
        %1968 = vmatprep.subr.mxu0 0.0
        %1969 = vmatpush1.msra.mxu0 0.0
        %1970 = vmatprep.subr.mxu0 0.0
        %1971 = vmatpush1.msra.mxu0 0.0
        %1972 = vmatprep.subr.mxu0 0.0
        %1973 = vmatpush1.msra.mxu0 0.0
        %1974 = vmatprep.subr.mxu0 0.0
        %1975 = vmatpush1.msra.mxu0 0.0
        %1976 = vmatprep.subr.mxu0 0.0
        %1977 = vmatpush1.msra.mxu0 0.0
        %1978 = vmatprep.subr.mxu0 0.0
        %1979 = vmatpush1.msra.mxu0 0.0
        %1980 = vmatprep.subr.mxu0 0.0
        %1981 = vmatpush1.msra.mxu0 0.0
        %1982 = vmatprep.subr.mxu0 0.0
        %1983 = vmatpush1.msra.mxu0 0.0
        %1984 = vmatprep.subr.mxu0 0.0
        %1985 = vmatpush1.msra.mxu0 0.0
        %1986 = vmatprep.subr.mxu0 0.0
        %1987 = vmatpush1.msra.mxu0 0.0
        %1988 = vmatprep.subr.mxu0 0.0
        %1989 = vmatpush1.msra.mxu0 0.0
        %1990 = vmatprep.subr.mxu0 0.0
        %1991 = vmatpush1.msra.mxu0 0.0
        %1992 = vmatprep.subr.mxu0 0.0
        %1993 = vmatpush1.msra.mxu0 0.0
        %1994 = vmatprep.subr.mxu0 0.0
        %1995 = vmatpush1.msra.mxu0 0.0
        %1996 = vmatprep.subr.mxu0 0.0
        %1997 = vmatpush1.msra.mxu0 0.0
        %1998 = vmatprep.subr.mxu0 0.0
        %1999 = vmatpush1.msra.mxu0 0.0
        %2000 = vmatprep.subr.mxu0 0.0
        %2001 = vmatpush1.msra.mxu0 0.0
        %2002 = vmatprep.subr.mxu0 0.0
        %2003 = vmatpush1.msra.mxu0 0.0
        %2004 = vmatprep.subr.mxu0 0.0
        %2005 = vmatpush1.msra.mxu0 0.0
        %2006 = vmatprep.subr.mxu0 0.0
        %2007 = vmatpush1.msra.mxu0 0.0
        %2008 = vmatprep.subr.mxu0 0.0
        %2009 = vmatpush1.msra.mxu0 0.0
        %2010 = vmatprep.subr.mxu0 0.0
        %2011 = vmatpush1.msra.mxu0 0.0
        %2012 = vmatprep.subr.mxu0 0.0
        %2013 = vmatpush1.msra.mxu0 0.0
        %2014 = vmatprep.subr.mxu0 0.0
        %2015 = vmatpush1.msra.mxu0 0.0
        %2016 = vmatprep.subr.mxu0 0.0
        %2017 = vmatpush1.msra.mxu0 0.0
        %2018 = vmatprep.subr.mxu0 0.0
        %2019 = vmatpush1.msra.mxu0 0.0
        %2020 = vmatprep.subr.mxu0 0.0
        %2021 = vmatpush1.msra.mxu0 0.0
        %2022 = vmatprep.subr.mxu0 0.0
        %2023 = vmatpush1.msra.mxu0 0.0
        %2024 = vmatprep.subr.mxu0 0.0
        %2025 = vmatpush1.msra.mxu0 0.0
        %2026 = vmatprep.mubr.f32.mxu0 0.0
        %2027 = vmatmul.mubr.f32.gmra.mrb[0].mxu0 %v1960
        %v2028 = vpop.f32.mrb[0].mxu0
        %v2029 = vadd.f32 0.0, %v2028
        %v2030 = vpop.f32.mrb[0].mxu0
        %2031 = vdwg.mxu0
        %2032 = vrot.lane.b32.xlu0 %v907, 48
        %v2033 = vpop.permute.xlu0 %2032
        %v2036 = vsel %vm913, %v1955, 0
        %2038 = vmatprep.subr.mxu0 0.0
        %2039 = vmatpush1.msra.mxu0 %v2033
        %2040 = vmatprep.subr.mxu0 0.0
        %2041 = vmatpush1.msra.mxu0 0.0
        %2042 = vmatprep.subr.mxu0 0.0
        %2043 = vmatpush1.msra.mxu0 0.0
        %2044 = vmatprep.subr.mxu0 0.0
        %2045 = vmatpush1.msra.mxu0 0.0
        %2046 = vmatprep.subr.mxu0 0.0
        %2047 = vmatpush1.msra.mxu0 0.0
        %2048 = vmatprep.subr.mxu0 0.0
        %2049 = vmatpush1.msra.mxu0 0.0
        %2050 = vmatprep.subr.mxu0 0.0
        %2051 = vmatpush1.msra.mxu0 0.0
        %2052 = vmatprep.subr.mxu0 0.0
        %2053 = vmatpush1.msra.mxu0 0.0
        %2054 = vmatprep.subr.mxu0 0.0
        %2055 = vmatpush1.msra.mxu0 0.0
        %2056 = vmatprep.subr.mxu0 0.0
        %2057 = vmatpush1.msra.mxu0 0.0
        %2058 = vmatprep.subr.mxu0 0.0
        %2059 = vmatpush1.msra.mxu0 0.0
        %2060 = vmatprep.subr.mxu0 0.0
        %2061 = vmatpush1.msra.mxu0 0.0
        %2062 = vmatprep.subr.mxu0 0.0
        %2063 = vmatpush1.msra.mxu0 0.0
        %2064 = vmatprep.subr.mxu0 0.0
        %2065 = vmatpush1.msra.mxu0 0.0
        %2066 = vmatprep.subr.mxu0 0.0
        %2067 = vmatpush1.msra.mxu0 0.0
        %2068 = vmatprep.subr.mxu0 0.0
        %2069 = vmatpush1.msra.mxu0 0.0
        %2070 = vmatprep.subr.mxu0 0.0
        %2071 = vmatpush1.msra.mxu0 0.0
        %2072 = vmatprep.subr.mxu0 0.0
        %2073 = vmatpush1.msra.mxu0 0.0
        %2074 = vmatprep.subr.mxu0 0.0
        %2075 = vmatpush1.msra.mxu0 0.0
        %2076 = vmatprep.subr.mxu0 0.0
        %2077 = vmatpush1.msra.mxu0 0.0
        %2078 = vmatprep.subr.mxu0 0.0
        %2079 = vmatpush1.msra.mxu0 0.0
        %2080 = vmatprep.subr.mxu0 0.0
        %2081 = vmatpush1.msra.mxu0 0.0
        %2082 = vmatprep.subr.mxu0 0.0
        %2083 = vmatpush1.msra.mxu0 0.0
        %2084 = vmatprep.subr.mxu0 0.0
        %2085 = vmatpush1.msra.mxu0 0.0
        %2086 = vmatprep.subr.mxu0 0.0
        %2087 = vmatpush1.msra.mxu0 0.0
        %2088 = vmatprep.subr.mxu0 0.0
        %2089 = vmatpush1.msra.mxu0 0.0
        %2090 = vmatprep.subr.mxu0 0.0
        %2091 = vmatpush1.msra.mxu0 0.0
        %2092 = vmatprep.subr.mxu0 0.0
        %2093 = vmatpush1.msra.mxu0 0.0
        %2094 = vmatprep.subr.mxu0 0.0
        %2095 = vmatpush1.msra.mxu0 0.0
        %2096 = vmatprep.subr.mxu0 0.0
        %2097 = vmatpush1.msra.mxu0 0.0
        %2098 = vmatprep.subr.mxu0 0.0
        %2099 = vmatpush1.msra.mxu0 0.0
        %2100 = vmatprep.subr.mxu0 0.0
        %2101 = vmatpush1.msra.mxu0 0.0
        %2102 = vmatprep.mubr.f32.mxu0 0.0
        %2103 = vmatmul.mubr.f32.gmra.mrb[0].mxu0 %v2036
        %v2104 = vpop.f32.mrb[0].mxu0
        %v2105 = vadd.f32 0.0, %v2104
        %v2106 = vpop.f32.mrb[0].mxu0
        %2107 = vdwg.mxu0
        %v2108 = vld [vmem:[%s728 + $0x10] sm:$0xff]
        %v2110 = vsel %vm913, %v2029, 0
        %v2113 = vsel %vm913, %v2105, 0
        %2115 = vmatprep.subr.mxu0 0.0
        %2116 = vmatpush1.msra.mxu0 %v2108
        %2117 = vmatprep.subr.mxu0 0.0
        %2118 = vmatpush1.msra.mxu0 0.0
        %2119 = vmatprep.subr.mxu0 0.0
        %2120 = vmatpush1.msra.mxu0 0.0
        %2121 = vmatprep.subr.mxu0 0.0
        %2122 = vmatpush1.msra.mxu0 0.0
        %2123 = vmatprep.subr.mxu0 0.0
        %2124 = vmatpush1.msra.mxu0 0.0
        %2125 = vmatprep.subr.mxu0 0.0
        %2126 = vmatpush1.msra.mxu0 0.0
        %2127 = vmatprep.subr.mxu0 0.0
        %2128 = vmatpush1.msra.mxu0 0.0
        %2129 = vmatprep.subr.mxu0 0.0
        %2130 = vmatpush1.msra.mxu0 0.0
        %2131 = vmatprep.subr.mxu0 0.0
        %2132 = vmatpush1.msra.mxu0 0.0
        %2133 = vmatprep.subr.mxu0 0.0
        %2134 = vmatpush1.msra.mxu0 0.0
        %2135 = vmatprep.subr.mxu0 0.0
        %2136 = vmatpush1.msra.mxu0 0.0
        %2137 = vmatprep.subr.mxu0 0.0
        %2138 = vmatpush1.msra.mxu0 0.0
        %2139 = vmatprep.subr.mxu0 0.0
        %2140 = vmatpush1.msra.mxu0 0.0
        %2141 = vmatprep.subr.mxu0 0.0
        %2142 = vmatpush1.msra.mxu0 0.0
        %2143 = vmatprep.subr.mxu0 0.0
        %2144 = vmatpush1.msra.mxu0 0.0
        %2145 = vmatprep.subr.mxu0 0.0
        %2146 = vmatpush1.msra.mxu0 0.0
        %2147 = vmatprep.subr.mxu0 0.0
        %2148 = vmatpush1.msra.mxu0 0.0
        %2149 = vmatprep.subr.mxu0 0.0
        %2150 = vmatpush1.msra.mxu0 0.0
        %2151 = vmatprep.subr.mxu0 0.0
        %2152 = vmatpush1.msra.mxu0 0.0
        %2153 = vmatprep.subr.mxu0 0.0
        %2154 = vmatpush1.msra.mxu0 0.0
        %2155 = vmatprep.subr.mxu0 0.0
        %2156 = vmatpush1.msra.mxu0 0.0
        %2157 = vmatprep.subr.mxu0 0.0
        %2158 = vmatpush1.msra.mxu0 0.0
        %2159 = vmatprep.subr.mxu0 0.0
        %2160 = vmatpush1.msra.mxu0 0.0
        %2161 = vmatprep.subr.mxu0 0.0
        %2162 = vmatpush1.msra.mxu0 0.0
        %2163 = vmatprep.subr.mxu0 0.0
        %2164 = vmatpush1.msra.mxu0 0.0
        %2165 = vmatprep.subr.mxu0 0.0
        %2166 = vmatpush1.msra.mxu0 0.0
        %2167 = vmatprep.subr.mxu0 0.0
        %2168 = vmatpush1.msra.mxu0 0.0
        %2169 = vmatprep.subr.mxu0 0.0
        %2170 = vmatpush1.msra.mxu0 0.0
        %2171 = vmatprep.subr.mxu0 0.0
        %2172 = vmatpush1.msra.mxu0 0.0
        %2173 = vmatprep.subr.mxu0 0.0
        %2174 = vmatpush1.msra.mxu0 0.0
        %2175 = vmatprep.subr.mxu0 0.0
        %2176 = vmatpush1.msra.mxu0 0.0
        %2177 = vmatprep.subr.mxu0 0.0
        %2178 = vmatpush1.msra.mxu0 0.0
        %2179 = vmatprep.mubr.f32.mxu0 0.0
        %2180 = vmatmul.mubr.f32.gmra.mrb[0].mxu0 %v2110
        %v2181 = vpop.f32.mrb[0].mxu0
        %v2182 = vadd.f32 0.0, %v2181
        %v2183 = vpop.f32.mrb[0].mxu0
        %2184 = vmatprep.mubr.f32.mxu0 0.0
        %2185 = vmatmul.mubr.f32.gmra.mrb[0].mxu0 %v2113
        %v2186 = vpop.f32.mrb[0].mxu0
        %v2187 = vadd.f32 0.0, %v2186
        %v2188 = vpop.f32.mrb[0].mxu0
        %2189 = vdwg.mxu0
        %v2190 = vadd.f32 %v1766, %v2182
        %v2191 = vadd.f32 %v1771, %v2187
        %2192 = vrot.lane.b32.xlu0 %v902, 104
        %v2193 = vpop.permute.xlu0 %2192
        %2194 = vrot.lane.b32.xlu0 %v902, 72
        %v2195 = vpop.permute.xlu0 %2194
        %v2196 = vsel %vm913, %v2193, 0
        %v2198 = vsel %vm913, %v2195, 0
        %2200 = vmatprep.subr.mxu0 0.0
        %2201 = vmatpush1.xpose.msra.mxu0 %v2198
        %2202 = vmatprep.subr.mxu0 0.0
        %2203 = vmatpush1.xpose.msra.mxu0 0.0
        %2204 = vmatprep.subr.mxu0 0.0
        %2205 = vmatpush1.xpose.msra.mxu0 0.0
        %2206 = vmatprep.subr.mxu0 0.0
        %2207 = vmatpush1.xpose.msra.mxu0 0.0
        %2208 = vmatprep.subr.mxu0 0.0
        %2209 = vmatpush1.xpose.msra.mxu0 0.0
        %2210 = vmatprep.subr.mxu0 0.0
        %2211 = vmatpush1.xpose.msra.mxu0 0.0
        %2212 = vmatprep.subr.mxu0 0.0
        %2213 = vmatpush1.xpose.msra.mxu0 0.0
        %2214 = vmatprep.subr.mxu0 0.0
        %2215 = vmatpush1.xpose.msra.mxu0 0.0
        %2216 = vmatprep.subr.mxu0 0.0
        %2217 = vmatpush1.xpose.msra.mxu0 0.0
        %2218 = vmatprep.subr.mxu0 0.0
        %2219 = vmatpush1.xpose.msra.mxu0 0.0
        %2220 = vmatprep.subr.mxu0 0.0
        %2221 = vmatpush1.xpose.msra.mxu0 0.0
        %2222 = vmatprep.subr.mxu0 0.0
        %2223 = vmatpush1.xpose.msra.mxu0 0.0
        %2224 = vmatprep.subr.mxu0 0.0
        %2225 = vmatpush1.xpose.msra.mxu0 0.0
        %2226 = vmatprep.subr.mxu0 0.0
        %2227 = vmatpush1.xpose.msra.mxu0 0.0
        %2228 = vmatprep.subr.mxu0 0.0
        %2229 = vmatpush1.xpose.msra.mxu0 0.0
        %2230 = vmatprep.subr.mxu0 0.0
        %2231 = vmatpush1.xpose.msra.mxu0 0.0
        %2232 = vmatprep.subr.mxu0 0.0
        %2233 = vmatpush1.xpose.msra.mxu0 0.0
        %2234 = vmatprep.subr.mxu0 0.0
        %2235 = vmatpush1.xpose.msra.mxu0 0.0
        %2236 = vmatprep.subr.mxu0 0.0
        %2237 = vmatpush1.xpose.msra.mxu0 0.0
        %2238 = vmatprep.subr.mxu0 0.0
        %2239 = vmatpush1.xpose.msra.mxu0 0.0
        %2240 = vmatprep.subr.mxu0 0.0
        %2241 = vmatpush1.xpose.msra.mxu0 0.0
        %2242 = vmatprep.subr.mxu0 0.0
        %2243 = vmatpush1.xpose.msra.mxu0 0.0
        %2244 = vmatprep.subr.mxu0 0.0
        %2245 = vmatpush1.xpose.msra.mxu0 0.0
        %2246 = vmatprep.subr.mxu0 0.0
        %2247 = vmatpush1.xpose.msra.mxu0 0.0
        %2248 = vmatprep.subr.mxu0 0.0
        %2249 = vmatpush1.xpose.msra.mxu0 0.0
        %2250 = vmatprep.subr.mxu0 0.0
        %2251 = vmatpush1.xpose.msra.mxu0 0.0
        %2252 = vmatprep.subr.mxu0 0.0
        %2253 = vmatpush1.xpose.msra.mxu0 0.0
        %2254 = vmatprep.subr.mxu0 0.0
        %2255 = vmatpush1.xpose.msra.mxu0 0.0
        %2256 = vmatprep.subr.mxu0 0.0
        %2257 = vmatpush1.xpose.msra.mxu0 0.0
        %2258 = vmatprep.subr.mxu0 0.0
        %2259 = vmatpush1.xpose.msra.mxu0 0.0
        %2260 = vmatprep.subr.mxu0 0.0
        %2261 = vmatpush1.xpose.msra.mxu0 0.0
        %2262 = vmatprep.subr.mxu0 0.0
        %2263 = vmatpush1.xpose.msra.mxu0 0.0
        %2264 = vmatprep.mubr.f32.mxu0 0.0
        %2265 = vmatmul.mubr.f32.gmra.mrb[0].mxu0 %v2196
        %v2266 = vpop.f32.mrb[0].mxu0
        %v2267 = vadd.f32 0.0, %v2266
        %v2268 = vpop.f32.mrb[0].mxu0
        %2269 = vdwg.mxu0
        %2270 = vrot.lane.b32.xlu0 %v907, 104
        %v2271 = vpop.permute.xlu0 %2270
        %2272 = vrot.lane.b32.xlu0 %v907, 72
        %v2273 = vpop.permute.xlu0 %2272
        %v2274 = vsel %vm913, %v2271, 0
        %v2276 = vsel %vm913, %v2273, 0
        %2278 = vmatprep.subr.mxu0 0.0
        %2279 = vmatpush1.xpose.msra.mxu0 %v2276
        %2280 = vmatprep.subr.mxu0 0.0
        %2281 = vmatpush1.xpose.msra.mxu0 0.0
        %2282 = vmatprep.subr.mxu0 0.0
        %2283 = vmatpush1.xpose.msra.mxu0 0.0
        %2284 = vmatprep.subr.mxu0 0.0
        %2285 = vmatpush1.xpose.msra.mxu0 0.0
        %2286 = vmatprep.subr.mxu0 0.0
        %2287 = vmatpush1.xpose.msra.mxu0 0.0
        %2288 = vmatprep.subr.mxu0 0.0
        %2289 = vmatpush1.xpose.msra.mxu0 0.0
        %2290 = vmatprep.subr.mxu0 0.0
        %2291 = vmatpush1.xpose.msra.mxu0 0.0
        %2292 = vmatprep.subr.mxu0 0.0
        %2293 = vmatpush1.xpose.msra.mxu0 0.0
        %2294 = vmatprep.subr.mxu0 0.0
        %2295 = vmatpush1.xpose.msra.mxu0 0.0
        %2296 = vmatprep.subr.mxu0 0.0
        %2297 = vmatpush1.xpose.msra.mxu0 0.0
        %2298 = vmatprep.subr.mxu0 0.0
        %2299 = vmatpush1.xpose.msra.mxu0 0.0
        %2300 = vmatprep.subr.mxu0 0.0
        %2301 = vmatpush1.xpose.msra.mxu0 0.0
        %2302 = vmatprep.subr.mxu0 0.0
        %2303 = vmatpush1.xpose.msra.mxu0 0.0
        %2304 = vmatprep.subr.mxu0 0.0
        %2305 = vmatpush1.xpose.msra.mxu0 0.0
        %2306 = vmatprep.subr.mxu0 0.0
        %2307 = vmatpush1.xpose.msra.mxu0 0.0
        %2308 = vmatprep.subr.mxu0 0.0
        %2309 = vmatpush1.xpose.msra.mxu0 0.0
        %2310 = vmatprep.subr.mxu0 0.0
        %2311 = vmatpush1.xpose.msra.mxu0 0.0
        %2312 = vmatprep.subr.mxu0 0.0
        %2313 = vmatpush1.xpose.msra.mxu0 0.0
        %2314 = vmatprep.subr.mxu0 0.0
        %2315 = vmatpush1.xpose.msra.mxu0 0.0
        %2316 = vmatprep.subr.mxu0 0.0
        %2317 = vmatpush1.xpose.msra.mxu0 0.0
        %2318 = vmatprep.subr.mxu0 0.0
        %2319 = vmatpush1.xpose.msra.mxu0 0.0
        %2320 = vmatprep.subr.mxu0 0.0
        %2321 = vmatpush1.xpose.msra.mxu0 0.0
        %2322 = vmatprep.subr.mxu0 0.0
        %2323 = vmatpush1.xpose.msra.mxu0 0.0
        %2324 = vmatprep.subr.mxu0 0.0
        %2325 = vmatpush1.xpose.msra.mxu0 0.0
        %2326 = vmatprep.subr.mxu0 0.0
        %2327 = vmatpush1.xpose.msra.mxu0 0.0
        %2328 = vmatprep.subr.mxu0 0.0
        %2329 = vmatpush1.xpose.msra.mxu0 0.0
        %2330 = vmatprep.subr.mxu0 0.0
        %2331 = vmatpush1.xpose.msra.mxu0 0.0
        %2332 = vmatprep.subr.mxu0 0.0
        %2333 = vmatpush1.xpose.msra.mxu0 0.0
        %2334 = vmatprep.subr.mxu0 0.0
        %2335 = vmatpush1.xpose.msra.mxu0 0.0
        %2336 = vmatprep.subr.mxu0 0.0
        %2337 = vmatpush1.xpose.msra.mxu0 0.0
        %2338 = vmatprep.subr.mxu0 0.0
        %2339 = vmatpush1.xpose.msra.mxu0 0.0
        %2340 = vmatprep.subr.mxu0 0.0
        %2341 = vmatpush1.xpose.msra.mxu0 0.0
        %2342 = vmatprep.mubr.f32.mxu0 0.0
        %2343 = vmatmul.mubr.f32.gmra.mrb[0].mxu0 %v2274
        %v2344 = vpop.f32.mrb[0].mxu0
        %v2345 = vadd.f32 0.0, %v2344
        %v2346 = vpop.f32.mrb[0].mxu0
        %2347 = vdwg.mxu0
        %v2348 = vmul.f32 %v2267, 0.35355338
        %v2349 = vmul.f32 %v2345, 0.35355338
        %v2350 = vadd.f32 %v2348, %v1093
        %v2351 = vadd.f32 %v2349, %v1097
        %v2352 = vsel %vm913, %v2350, -inf
        %2353 = vmax.xlane.f32.xlu0 %v2352
        %v2354 = vpop.xlane.xlu0 %2353
        %v2355 = vsel %vm913, %v2351, -inf
        %2356 = vmax.xlane.f32.xlu0 %v2355
        %v2357 = vpop.xlane.xlu0 %2356
        %v2358 = vsub.f32 %v2350, %v2354
        %v2359 = vsub.f32 %v2351, %v2357
        %v2360 = vmul.f32 %v2358, 1.442695
        %v2361 = vpow.pop %v2360
        %v2362 = vmul.f32 %v2359, 1.442695
        %v2363 = vpow.pop %v2362
        %v2364 = vsel %vm913, %v2361, 0.0
        %2365 = vadd.xlane.f32.xlu0 %v2364
        %v2366 = vpop.xlane.xlu0 %2365
        %v2367 = vsel %vm913, %v2363, 0.0
        %2368 = vadd.xlane.f32.xlu0 %v2367
        %v2369 = vpop.xlane.xlu0 %2368
        %v2370 = vrcp.pop %v2366
        %v2371 = vrcp.pop %v2369
        %v2372 = vmul.f32 %v2361, %v2370
        %v2373 = vmul.f32 %v2363, %v2371
        %2374 = vrot.lane.b32.xlu0 %v902, 40
        %v2375 = vpop.permute.xlu0 %2374
        %v2378 = vsel %vm913, %v2372, 0
        %2380 = vmatprep.subr.mxu0 0.0
        %2381 = vmatpush1.msra.mxu0 %v2375
        %2382 = vmatprep.subr.mxu0 0.0
        %2383 = vmatpush1.msra.mxu0 0.0
        %2384 = vmatprep.subr.mxu0 0.0
        %2385 = vmatpush1.msra.mxu0 0.0
        %2386 = vmatprep.subr.mxu0 0.0
        %2387 = vmatpush1.msra.mxu0 0.0
        %2388 = vmatprep.subr.mxu0 0.0
        %2389 = vmatpush1.msra.mxu0 0.0
        %2390 = vmatprep.subr.mxu0 0.0
        %2391 = vmatpush1.msra.mxu0 0.0
        %2392 = vmatprep.subr.mxu0 0.0
        %2393 = vmatpush1.msra.mxu0 0.0
        %2394 = vmatprep.subr.mxu0 0.0
        %2395 = vmatpush1.msra.mxu0 0.0
        %2396 = vmatprep.subr.mxu0 0.0
        %2397 = vmatpush1.msra.mxu0 0.0
        %2398 = vmatprep.subr.mxu0 0.0
        %2399 = vmatpush1.msra.mxu0 0.0
        %2400 = vmatprep.subr.mxu0 0.0
        %2401 = vmatpush1.msra.mxu0 0.0
        %2402 = vmatprep.subr.mxu0 0.0
        %2403 = vmatpush1.msra.mxu0 0.0
        %2404 = vmatprep.subr.mxu0 0.0
        %2405 = vmatpush1.msra.mxu0 0.0
        %2406 = vmatprep.subr.mxu0 0.0
        %2407 = vmatpush1.msra.mxu0 0.0
        %2408 = vmatprep.subr.mxu0 0.0
        %2409 = vmatpush1.msra.mxu0 0.0
        %2410 = vmatprep.subr.mxu0 0.0
        %2411 = vmatpush1.msra.mxu0 0.0
        %2412 = vmatprep.subr.mxu0 0.0
        %2413 = vmatpush1.msra.mxu0 0.0
        %2414 = vmatprep.subr.mxu0 0.0
        %2415 = vmatpush1.msra.mxu0 0.0
        %2416 = vmatprep.subr.mxu0 0.0
        %2417 = vmatpush1.msra.mxu0 0.0
        %2418 = vmatprep.subr.mxu0 0.0
        %2419 = vmatpush1.msra.mxu0 0.0
        %2420 = vmatprep.subr.mxu0 0.0
        %2421 = vmatpush1.msra.mxu0 0.0
        %2422 = vmatprep.subr.mxu0 0.0
        %2423 = vmatpush1.msra.mxu0 0.0
        %2424 = vmatprep.subr.mxu0 0.0
        %2425 = vmatpush1.msra.mxu0 0.0
        %2426 = vmatprep.subr.mxu0 0.0
        %2427 = vmatpush1.msra.mxu0 0.0
        %2428 = vmatprep.subr.mxu0 0.0
        %2429 = vmatpush1.msra.mxu0 0.0
        %2430 = vmatprep.subr.mxu0 0.0
        %2431 = vmatpush1.msra.mxu0 0.0
        %2432 = vmatprep.subr.mxu0 0.0
        %2433 = vmatpush1.msra.mxu0 0.0
        %2434 = vmatprep.subr.mxu0 0.0
        %2435 = vmatpush1.msra.mxu0 0.0
        %2436 = vmatprep.subr.mxu0 0.0
        %2437 = vmatpush1.msra.mxu0 0.0
        %2438 = vmatprep.subr.mxu0 0.0
        %2439 = vmatpush1.msra.mxu0 0.0
        %2440 = vmatprep.subr.mxu0 0.0
        %2441 = vmatpush1.msra.mxu0 0.0
        %2442 = vmatprep.subr.mxu0 0.0
        %2443 = vmatpush1.msra.mxu0 0.0
        %2444 = vmatprep.mubr.f32.mxu0 0.0
        %2445 = vmatmul.mubr.f32.gmra.mrb[0].mxu0 %v2378
        %v2446 = vpop.f32.mrb[0].mxu0
        %v2447 = vadd.f32 0.0, %v2446
        %v2448 = vpop.f32.mrb[0].mxu0
        %2449 = vdwg.mxu0
        %2450 = vrot.lane.b32.xlu0 %v907, 40
        %v2451 = vpop.permute.xlu0 %2450
        %v2454 = vsel %vm913, %v2373, 0
        %2456 = vmatprep.subr.mxu0 0.0
        %2457 = vmatpush1.msra.mxu0 %v2451
        %2458 = vmatprep.subr.mxu0 0.0
        %2459 = vmatpush1.msra.mxu0 0.0
        %2460 = vmatprep.subr.mxu0 0.0
        %2461 = vmatpush1.msra.mxu0 0.0
        %2462 = vmatprep.subr.mxu0 0.0
        %2463 = vmatpush1.msra.mxu0 0.0
        %2464 = vmatprep.subr.mxu0 0.0
        %2465 = vmatpush1.msra.mxu0 0.0
        %2466 = vmatprep.subr.mxu0 0.0
        %2467 = vmatpush1.msra.mxu0 0.0
        %2468 = vmatprep.subr.mxu0 0.0
        %2469 = vmatpush1.msra.mxu0 0.0
        %2470 = vmatprep.subr.mxu0 0.0
        %2471 = vmatpush1.msra.mxu0 0.0
        %2472 = vmatprep.subr.mxu0 0.0
        %2473 = vmatpush1.msra.mxu0 0.0
        %2474 = vmatprep.subr.mxu0 0.0
        %2475 = vmatpush1.msra.mxu0 0.0
        %2476 = vmatprep.subr.mxu0 0.0
        %2477 = vmatpush1.msra.mxu0 0.0
        %2478 = vmatprep.subr.mxu0 0.0
        %2479 = vmatpush1.msra.mxu0 0.0
        %2480 = vmatprep.subr.mxu0 0.0
        %2481 = vmatpush1.msra.mxu0 0.0
        %2482 = vmatprep.subr.mxu0 0.0
        %2483 = vmatpush1.msra.mxu0 0.0
        %2484 = vmatprep.subr.mxu0 0.0
        %2485 = vmatpush1.msra.mxu0 0.0
        %2486 = vmatprep.subr.mxu0 0.0
        %2487 = vmatpush1.msra.mxu0 0.0
        %2488 = vmatprep.subr.mxu0 0.0
        %2489 = vmatpush1.msra.mxu0 0.0
        %2490 = vmatprep.subr.mxu0 0.0
        %2491 = vmatpush1.msra.mxu0 0.0
        %2492 = vmatprep.subr.mxu0 0.0
        %2493 = vmatpush1.msra.mxu0 0.0
        %2494 = vmatprep.subr.mxu0 0.0
        %2495 = vmatpush1.msra.mxu0 0.0
        %2496 = vmatprep.subr.mxu0 0.0
        %2497 = vmatpush1.msra.mxu0 0.0
        %2498 = vmatprep.subr.mxu0 0.0
        %2499 = vmatpush1.msra.mxu0 0.0
        %2500 = vmatprep.subr.mxu0 0.0
        %2501 = vmatpush1.msra.mxu0 0.0
        %2502 = vmatprep.subr.mxu0 0.0
        %2503 = vmatpush1.msra.mxu0 0.0
        %2504 = vmatprep.subr.mxu0 0.0
        %2505 = vmatpush1.msra.mxu0 0.0
        %2506 = vmatprep.subr.mxu0 0.0
        %2507 = vmatpush1.msra.mxu0 0.0
        %2508 = vmatprep.subr.mxu0 0.0
        %2509 = vmatpush1.msra.mxu0 0.0
        %2510 = vmatprep.subr.mxu0 0.0
        %2511 = vmatpush1.msra.mxu0 0.0
        %2512 = vmatprep.subr.mxu0 0.0
        %2513 = vmatpush1.msra.mxu0 0.0
        %2514 = vmatprep.subr.mxu0 0.0
        %2515 = vmatpush1.msra.mxu0 0.0
        %2516 = vmatprep.subr.mxu0 0.0
        %2517 = vmatpush1.msra.mxu0 0.0
        %2518 = vmatprep.subr.mxu0 0.0
        %2519 = vmatpush1.msra.mxu0 0.0
        %2520 = vmatprep.mubr.f32.mxu0 0.0
        %2521 = vmatmul.mubr.f32.gmra.mrb[0].mxu0 %v2454
        %v2522 = vpop.f32.mrb[0].mxu0
        %v2523 = vadd.f32 0.0, %v2522
        %v2524 = vpop.f32.mrb[0].mxu0
        %2525 = vdwg.mxu0
        %v2526 = vld [vmem:[%s728 + $0x18] sm:$0xff]
        %v2528 = vsel %vm913, %v2447, 0
        %v2531 = vsel %vm913, %v2523, 0
        %2533 = vmatprep.subr.mxu0 0.0
        %2534 = vmatpush1.msra.mxu0 %v2526
        %2535 = vmatprep.subr.mxu0 0.0
        %2536 = vmatpush1.msra.mxu0 0.0
        %2537 = vmatprep.subr.mxu0 0.0
        %2538 = vmatpush1.msra.mxu0 0.0
        %2539 = vmatprep.subr.mxu0 0.0
        %2540 = vmatpush1.msra.mxu0 0.0
        %2541 = vmatprep.subr.mxu0 0.0
        %2542 = vmatpush1.msra.mxu0 0.0
        %2543 = vmatprep.subr.mxu0 0.0
        %2544 = vmatpush1.msra.mxu0 0.0
        %2545 = vmatprep.subr.mxu0 0.0
        %2546 = vmatpush1.msra.mxu0 0.0
        %2547 = vmatprep.subr.mxu0 0.0
        %2548 = vmatpush1.msra.mxu0 0.0
        %2549 = vmatprep.subr.mxu0 0.0
        %2550 = vmatpush1.msra.mxu0 0.0
        %2551 = vmatprep.subr.mxu0 0.0
        %2552 = vmatpush1.msra.mxu0 0.0
        %2553 = vmatprep.subr.mxu0 0.0
        %2554 = vmatpush1.msra.mxu0 0.0
        %2555 = vmatprep.subr.mxu0 0.0
        %2556 = vmatpush1.msra.mxu0 0.0
        %2557 = vmatprep.subr.mxu0 0.0
        %2558 = vmatpush1.msra.mxu0 0.0
        %2559 = vmatprep.subr.mxu0 0.0
        %2560 = vmatpush1.msra.mxu0 0.0
        %2561 = vmatprep.subr.mxu0 0.0
        %2562 = vmatpush1.msra.mxu0 0.0
        %2563 = vmatprep.subr.mxu0 0.0
        %2564 = vmatpush1.msra.mxu0 0.0
        %2565 = vmatprep.subr.mxu0 0.0
        %2566 = vmatpush1.msra.mxu0 0.0
        %2567 = vmatprep.subr.mxu0 0.0
        %2568 = vmatpush1.msra.mxu0 0.0
        %2569 = vmatprep.subr.mxu0 0.0
        %2570 = vmatpush1.msra.mxu0 0.0
        %2571 = vmatprep.subr.mxu0 0.0
        %2572 = vmatpush1.msra.mxu0 0.0
        %2573 = vmatprep.subr.mxu0 0.0
        %2574 = vmatpush1.msra.mxu0 0.0
        %2575 = vmatprep.subr.mxu0 0.0
        %2576 = vmatpush1.msra.mxu0 0.0
        %2577 = vmatprep.subr.mxu0 0.0
        %2578 = vmatpush1.msra.mxu0 0.0
        %2579 = vmatprep.subr.mxu0 0.0
        %2580 = vmatpush1.msra.mxu0 0.0
        %2581 = vmatprep.subr.mxu0 0.0
        %2582 = vmatpush1.msra.mxu0 0.0
        %2583 = vmatprep.subr.mxu0 0.0
        %2584 = vmatpush1.msra.mxu0 0.0
        %2585 = vmatprep.subr.mxu0 0.0
        %2586 = vmatpush1.msra.mxu0 0.0
        %2587 = vmatprep.subr.mxu0 0.0
        %2588 = vmatpush1.msra.mxu0 0.0
        %2589 = vmatprep.subr.mxu0 0.0
        %2590 = vmatpush1.msra.mxu0 0.0
        %2591 = vmatprep.subr.mxu0 0.0
        %2592 = vmatpush1.msra.mxu0 0.0
        %2593 = vmatprep.subr.mxu0 0.0
        %2594 = vmatpush1.msra.mxu0 0.0
        %2595 = vmatprep.subr.mxu0 0.0
        %2596 = vmatpush1.msra.mxu0 0.0
        %2597 = vmatprep.mubr.f32.mxu0 0.0
        %2598 = vmatmul.mubr.f32.gmra.mrb[0].mxu0 %v2528
        %v2599 = vpop.f32.mrb[0].mxu0
        %v2600 = vadd.f32 0.0, %v2599
        %v2601 = vpop.f32.mrb[0].mxu0
        %2602 = vmatprep.mubr.f32.mxu0 0.0
        %2603 = vmatmul.mubr.f32.gmra.mrb[0].mxu0 %v2531
        %v2604 = vpop.f32.mrb[0].mxu0
        %v2605 = vadd.f32 0.0, %v2604
        %v2606 = vpop.f32.mrb[0].mxu0
        %2607 = vdwg.mxu0
        %v2608 = vadd.f32 %v2190, %v2600
        %v2609 = vadd.f32 %v2191, %v2605
        %v2610 = vld [vmem:[%s731] sm:$0x1]
        %v2612 = vlaneseq
        %v2613 = vshrl.u32 %v2612, 7
        %v2614 = vsub.s32 0, %v2613
        %v2615 = vrot.slane %v2610, %v2614
        %v2617 = vadd.f32 %v2608, %v2615
        %v2618 = vadd.f32 %v2609, %v2615
        %v2619 = vadd.f32 %v2617, %v814
        %v2620 = vadd.f32 %v2618, %v815
        %v2621 = vld [vmem:[%s734] sm:$0x1]
        %v2622 = vld [vmem:[%s737] sm:$0x1]
        %v2623 = vsel %vm828, %v2619, 0.0
        %2624 = vadd.xlane.f32.xlu0 %v2623
        %v2625 = vpop.xlane.xlu0 %2624
        %v2626 = vsel %vm828, %v2620, 0.0
        %2627 = vadd.xlane.f32.xlu0 %v2626
        %v2628 = vpop.xlane.xlu0 %2627
        %v2629 = vrcp.pop 32.0
        %v2630 = vmul.f32 %v2625, %v2629
        %v2631 = vmul.f32 %v2628, %v2629
        %v2632 = vsub.f32 %v2619, %v2630
        %v2633 = vsub.f32 %v2620, %v2631
        %v2634 = vmul.f32 %v2632, %v2632
        %v2635 = vmul.f32 %v2633, %v2633
        %v2636 = vsel %vm828, %v2634, 0.0
        %2637 = vadd.xlane.f32.xlu0 %v2636
        %v2638 = vpop.xlane.xlu0 %2637
        %v2639 = vsel %vm828, %v2635, 0.0
        %2640 = vadd.xlane.f32.xlu0 %v2639
        %v2641 = vpop.xlane.xlu0 %2640
        %v2642 = vmul.f32 %v2638, %v2629
        %v2643 = vmul.f32 %v2641, %v2629
        %v2644 = vadd.f32 %v2642, 1e-12
        %v2645 = vadd.f32 %v2643, 1e-12
        %v2646 = vrsqrt.pop %v2644
        %v2647 = vrsqrt.pop %v2645
        %v2648 = vmul.f32 %v2632, %v2646
        %v2649 = vmul.f32 %v2633, %v2647
        %v2651 = vlaneseq
        %v2652 = vshrl.u32 %v2651, 7
        %v2653 = vsub.s32 0, %v2652
        %v2654 = vrot.slane %v2621, %v2653
        %v2656 = vmul.f32 %v2648, %v2654
        %v2657 = vmul.f32 %v2649, %v2654
        %v2659 = vlaneseq
        %v2660 = vshrl.u32 %v2659, 7
        %v2661 = vsub.s32 0, %v2660
        %v2662 = vrot.slane %v2622, %v2661
        %v2664 = vadd.f32 %v2656, %v2662
        %v2665 = vadd.f32 %v2657, %v2662
        %v2666 = vld [vmem:[%s742] sm:$0xff]
        %v2667 = vld [vmem:[%s742 + $0x8] sm:$0xff]
        %v2668 = vld [vmem:[%s742 + $0x10] sm:$0xff]
        %v2669 = vld [vmem:[%s742 + $0x18] sm:$0xff]
        %v2670 = vld [vmem:[%s745] sm:$0x1]
        %v2672 = vlaneseq
        %v2673 = vshrl.u32 %v2672, 7
        %v2674 = vsub.s32 0, %v2673
        %v2675 = vrot.slane %v2670, %v2674
        %v2678 = vsel %vm828, %v2664, 0
        %v2681 = vsel %vm828, %v2665, 0
        %2683 = vmatprep.subr.mxu0 0.0
        %2684 = vmatpush1.msra.mxu0 %v2666
        %2685 = vmatprep.subr.mxu0 0.0
        %2686 = vmatpush1.msra.mxu0 %v2667
        %2687 = vmatprep.subr.mxu0 0.0
        %2688 = vmatpush1.msra.mxu0 %v2668
        %2689 = vmatprep.subr.mxu0 0.0
        %2690 = vmatpush1.msra.mxu0 %v2669
        %2691 = vmatprep.subr.mxu0 0.0
        %2692 = vmatpush1.msra.mxu0 0.0
        %2693 = vmatprep.subr.mxu0 0.0
        %2694 = vmatpush1.msra.mxu0 0.0
        %2695 = vmatprep.subr.mxu0 0.0
        %2696 = vmatpush1.msra.mxu0 0.0
        %2697 = vmatprep.subr.mxu0 0.0
        %2698 = vmatpush1.msra.mxu0 0.0
        %2699 = vmatprep.subr.mxu0 0.0
        %2700 = vmatpush1.msra.mxu0 0.0
        %2701 = vmatprep.subr.mxu0 0.0
        %2702 = vmatpush1.msra.mxu0 0.0
        %2703 = vmatprep.subr.mxu0 0.0
        %2704 = vmatpush1.msra.mxu0 0.0
        %2705 = vmatprep.subr.mxu0 0.0
        %2706 = vmatpush1.msra.mxu0 0.0
        %2707 = vmatprep.subr.mxu0 0.0
        %2708 = vmatpush1.msra.mxu0 0.0
        %2709 = vmatprep.subr.mxu0 0.0
        %2710 = vmatpush1.msra.mxu0 0.0
        %2711 = vmatprep.subr.mxu0 0.0
        %2712 = vmatpush1.msra.mxu0 0.0
        %2713 = vmatprep.subr.mxu0 0.0
        %2714 = vmatpush1.msra.mxu0 0.0
        %2715 = vmatprep.subr.mxu0 0.0
        %2716 = vmatpush1.msra.mxu0 0.0
        %2717 = vmatprep.subr.mxu0 0.0
        %2718 = vmatpush1.msra.mxu0 0.0
        %2719 = vmatprep.subr.mxu0 0.0
        %2720 = vmatpush1.msra.mxu0 0.0
        %2721 = vmatprep.subr.mxu0 0.0
        %2722 = vmatpush1.msra.mxu0 0.0
        %2723 = vmatprep.subr.mxu0 0.0
        %2724 = vmatpush1.msra.mxu0 0.0
        %2725 = vmatprep.subr.mxu0 0.0
        %2726 = vmatpush1.msra.mxu0 0.0
        %2727 = vmatprep.subr.mxu0 0.0
        %2728 = vmatpush1.msra.mxu0 0.0
        %2729 = vmatprep.subr.mxu0 0.0
        %2730 = vmatpush1.msra.mxu0 0.0
        %2731 = vmatprep.subr.mxu0 0.0
        %2732 = vmatpush1.msra.mxu0 0.0
        %2733 = vmatprep.subr.mxu0 0.0
        %2734 = vmatpush1.msra.mxu0 0.0
        %2735 = vmatprep.subr.mxu0 0.0
        %2736 = vmatpush1.msra.mxu0 0.0
        %2737 = vmatprep.subr.mxu0 0.0
        %2738 = vmatpush1.msra.mxu0 0.0
        %2739 = vmatprep.subr.mxu0 0.0
        %2740 = vmatpush1.msra.mxu0 0.0
        %2741 = vmatprep.subr.mxu0 0.0
        %2742 = vmatpush1.msra.mxu0 0.0
        %2743 = vmatprep.subr.mxu0 0.0
        %2744 = vmatpush1.msra.mxu0 0.0
        %2745 = vmatprep.subr.mxu0 0.0
        %2746 = vmatpush1.msra.mxu0 0.0
        %2747 = vmatprep.mubr.f32.mxu0 0.0
        %2748 = vmatmul.mubr.f32.gmra.mrb[0].mxu0 %v2678
        %v2749 = vpop.f32.mrb[0].mxu0
        %v2750 = vadd.f32 %v2675, %v2749
        %v2751 = vpop.f32.mrb[0].mxu0
        %2752 = vmatprep.mubr.f32.mxu0 0.0
        %2753 = vmatmul.mubr.f32.gmra.mrb[0].mxu0 %v2681
        %v2754 = vpop.f32.mrb[0].mxu0
        %v2755 = vadd.f32 %v2675, %v2754
        %v2756 = vpop.f32.mrb[0].mxu0
        %2757 = vdwg.mxu0
        %v2758 = vmul.f32 %v2750, 0.5
        %v2759 = vmul.f32 %v2755, 0.5
        %v2760 = vmul.f32 %v2750, 0.70710677
        %v2761 = vmul.f32 %v2755, 0.70710677
        %v2762 = vand.u32 2147483647, %v2760
        %v2763 = vand.u32 2147483647, %v2761
        %v2764 = vmul.f32 %v2762, 0.3275911
        %v2765 = vmul.f32 %v2763, 0.3275911
        %v2766 = vadd.f32 %v2764, 1.0
        %v2767 = vadd.f32 %v2765, 1.0
        %v2768 = vrcp.pop %v2766
        %v2769 = vmul.f32 1.0, %v2768
        %v2770 = vrcp.pop %v2767
        %v2771 = vmul.f32 1.0, %v2770
        %v2772 = vmul.f32 %v2769, 1.0614054
        %v2773 = vmul.f32 %v2771, 1.0614054
        %v2774 = vadd.f32 %v2772, -1.4531521
        %v2775 = vadd.f32 %v2773, -1.4531521
        %v2776 = vmul.f32 %v2769, %v2774
        %v2777 = vmul.f32 %v2771, %v2775
        %v2778 = vadd.f32 %v2776, 1.4214138
        %v2779 = vadd.f32 %v2777, 1.4214138
        %v2780 = vmul.f32 %v2769, %v2778
        %v2781 = vmul.f32 %v2771, %v2779
        %v2782 = vadd.f32 %v2780, -0.28449672
        %v2783 = vadd.f32 %v2781, -0.28449672
        %v2784 = vmul.f32 %v2769, %v2782
        %v2785 = vmul.f32 %v2771, %v2783
        %v2786 = vadd.f32 %v2784, 0.2548296
        %v2787 = vadd.f32 %v2785, 0.2548296
        %v2788 = vmul.f32 %v2769, %v2786
        %v2789 = vmul.f32 %v2771, %v2787
        %v2790 = vsub.f32 0.0, %v2762
        %v2791 = vsub.f32 0.0, %v2763
        %v2792 = vmul.f32 %v2790, %v2762
        %v2793 = vmul.f32 %v2791, %v2763
        %v2794 = vmul.f32 %v2792, 1.442695
        %v2795 = vpow.pop %v2794
        %v2796 = vmul.f32 %v2793, 1.442695
        %v2797 = vpow.pop %v2796
        %v2798 = vmul.f32 %v2788, %v2795
        %v2799 = vmul.f32 %v2789, %v2797
        %v2800 = vsub.f32 1.0, %v2798
        %v2801 = vsub.f32 1.0, %v2799
        %vm2802 = vcmp.ge.f32.partialorder %v2760, 0.0
        %vm2803 = vcmp.ge.f32.partialorder %v2761, 0.0
        %v2804 = vsub.f32 0.0, %v2800
        %v2805 = vsub.f32 0.0, %v2801
        %v2806 = vsel %vm2802, %v2800, %v2804
        %v2807 = vsel %vm2803, %v2801, %v2805
        %v2808 = vadd.f32 %v2806, 1.0
        %v2809 = vadd.f32 %v2807, 1.0
        %v2810 = vmul.f32 %v2758, %v2808
        %v2811 = vmul.f32 %v2759, %v2809
        %v2812 = vld [vmem:[%s750] sm:$0xff]
        %v2813 = vld [vmem:[%s750 + $0x8] sm:$0xff]
        %v2814 = vld [vmem:[%s750 + $0x10] sm:$0xff]
        %v2815 = vld [vmem:[%s750 + $0x18] sm:$0xff]
        %v2816 = vld [vmem:[%s750 + $0x20] sm:$0xff]
        %v2817 = vld [vmem:[%s750 + $0x28] sm:$0xff]
        %v2818 = vld [vmem:[%s750 + $0x30] sm:$0xff]
        %v2819 = vld [vmem:[%s750 + $0x38] sm:$0xff]
        %v2820 = vld [vmem:[%s753] sm:$0x1]
        %v2822 = vlaneseq
        %v2823 = vshrl.u32 %v2822, 7
        %v2824 = vsub.s32 0, %v2823
        %v2825 = vrot.slane %v2820, %v2824
        %vm2827 = vcmask 523264
        %v2829 = vsel %vm2827, %v2810, 0
        %v2832 = vsel %vm2827, %v2811, 0
        %2834 = vmatprep.subr.mxu0 0.0
        %2835 = vmatpush1.msra.mxu0 %v2812
        %2836 = vmatprep.subr.mxu0 0.0
        %2837 = vmatpush1.msra.mxu0 %v2813
        %2838 = vmatprep.subr.mxu0 0.0
        %2839 = vmatpush1.msra.mxu0 %v2814
        %2840 = vmatprep.subr.mxu0 0.0
        %2841 = vmatpush1.msra.mxu0 %v2815
        %2842 = vmatprep.subr.mxu0 0.0
        %2843 = vmatpush1.msra.mxu0 %v2816
        %2844 = vmatprep.subr.mxu0 0.0
        %2845 = vmatpush1.msra.mxu0 %v2817
        %2846 = vmatprep.subr.mxu0 0.0
        %2847 = vmatpush1.msra.mxu0 %v2818
        %2848 = vmatprep.subr.mxu0 0.0
        %2849 = vmatpush1.msra.mxu0 %v2819
        %2850 = vmatprep.subr.mxu0 0.0
        %2851 = vmatpush1.msra.mxu0 0.0
        %2852 = vmatprep.subr.mxu0 0.0
        %2853 = vmatpush1.msra.mxu0 0.0
        %2854 = vmatprep.subr.mxu0 0.0
        %2855 = vmatpush1.msra.mxu0 0.0
        %2856 = vmatprep.subr.mxu0 0.0
        %2857 = vmatpush1.msra.mxu0 0.0
        %2858 = vmatprep.subr.mxu0 0.0
        %2859 = vmatpush1.msra.mxu0 0.0
        %2860 = vmatprep.subr.mxu0 0.0
        %2861 = vmatpush1.msra.mxu0 0.0
        %2862 = vmatprep.subr.mxu0 0.0
        %2863 = vmatpush1.msra.mxu0 0.0
        %2864 = vmatprep.subr.mxu0 0.0
        %2865 = vmatpush1.msra.mxu0 0.0
        %2866 = vmatprep.subr.mxu0 0.0
        %2867 = vmatpush1.msra.mxu0 0.0
        %2868 = vmatprep.subr.mxu0 0.0
        %2869 = vmatpush1.msra.mxu0 0.0
        %2870 = vmatprep.subr.mxu0 0.0
        %2871 = vmatpush1.msra.mxu0 0.0
        %2872 = vmatprep.subr.mxu0 0.0
        %2873 = vmatpush1.msra.mxu0 0.0
        %2874 = vmatprep.subr.mxu0 0.0
        %2875 = vmatpush1.msra.mxu0 0.0
        %2876 = vmatprep.subr.mxu0 0.0
        %2877 = vmatpush1.msra.mxu0 0.0
        %2878 = vmatprep.subr.mxu0 0.0
        %2879 = vmatpush1.msra.mxu0 0.0
        %2880 = vmatprep.subr.mxu0 0.0
        %2881 = vmatpush1.msra.mxu0 0.0
        %2882 = vmatprep.subr.mxu0 0.0
        %2883 = vmatpush1.msra.mxu0 0.0
        %2884 = vmatprep.subr.mxu0 0.0
        %2885 = vmatpush1.msra.mxu0 0.0
        %2886 = vmatprep.subr.mxu0 0.0
        %2887 = vmatpush1.msra.mxu0 0.0
        %2888 = vmatprep.subr.mxu0 0.0
        %2889 = vmatpush1.msra.mxu0 0.0
        %2890 = vmatprep.subr.mxu0 0.0
        %2891 = vmatpush1.msra.mxu0 0.0
        %2892 = vmatprep.subr.mxu0 0.0
        %2893 = vmatpush1.msra.mxu0 0.0
        %2894 = vmatprep.subr.mxu0 0.0
        %2895 = vmatpush1.msra.mxu0 0.0
        %2896 = vmatprep.subr.mxu0 0.0
        %2897 = vmatpush1.msra.mxu0 0.0
        %2898 = vmatprep.mubr.f32.mxu0 0.0
        %2899 = vmatmul.mubr.f32.gmra.mrb[0].mxu0 %v2829
        %v2900 = vpop.f32.mrb[0].mxu0
        %v2901 = vadd.f32 %v2825, %v2900
        %v2902 = vpop.f32.mrb[0].mxu0
        %2903 = vmatprep.mubr.f32.mxu0 0.0
        %2904 = vmatmul.mubr.f32.gmra.mrb[0].mxu0 %v2832
        %v2905 = vpop.f32.mrb[0].mxu0
        %v2906 = vadd.f32 %v2825, %v2905
        %v2907 = vpop.f32.mrb[0].mxu0
        %2908 = vdwg.mxu0
        %v2909 = vadd.f32 %v2901, %v2664
        %v2910 = vadd.f32 %v2906, %v2665
        %v2911 = vld [vmem:[%s756] sm:$0x1]
        %v2912 = vld [vmem:[%s759] sm:$0x1]
        %v2913 = vsel %vm828, %v2909, 0.0
        %2914 = vadd.xlane.f32.xlu0 %v2913
        %v2915 = vpop.xlane.xlu0 %2914
        %v2916 = vsel %vm828, %v2910, 0.0
        %2917 = vadd.xlane.f32.xlu0 %v2916
        %v2918 = vpop.xlane.xlu0 %2917
        %v2919 = vmul.f32 %v2915, %v2629
        %v2920 = vmul.f32 %v2918, %v2629
        %v2921 = vsub.f32 %v2909, %v2919
        %v2922 = vsub.f32 %v2910, %v2920
        %v2923 = vmul.f32 %v2921, %v2921
        %v2924 = vmul.f32 %v2922, %v2922
        %v2925 = vsel %vm828, %v2923, 0.0
        %2926 = vadd.xlane.f32.xlu0 %v2925
        %v2927 = vpop.xlane.xlu0 %2926
        %v2928 = vsel %vm828, %v2924, 0.0
        %2929 = vadd.xlane.f32.xlu0 %v2928
        %v2930 = vpop.xlane.xlu0 %2929
        %v2931 = vmul.f32 %v2927, %v2629
        %v2932 = vmul.f32 %v2930, %v2629
        %v2933 = vadd.f32 %v2931, 1e-12
        %v2934 = vadd.f32 %v2932, 1e-12
        %v2935 = vrsqrt.pop %v2933
        %v2936 = vrsqrt.pop %v2934
        %v2937 = vmul.f32 %v2921, %v2935
        %v2938 = vmul.f32 %v2922, %v2936
        %v2940 = vlaneseq
        %v2941 = vshrl.u32 %v2940, 7
        %v2942 = vsub.s32 0, %v2941
        %v2943 = vrot.slane %v2911, %v2942
        %v2945 = vmul.f32 %v2937, %v2943
        %v2946 = vmul.f32 %v2938, %v2943
        %v2948 = vlaneseq
        %v2949 = vshrl.u32 %v2948, 7
        %v2950 = vsub.s32 0, %v2949
        %v2951 = vrot.slane %v2912, %v2950
        %v2953 = vadd.f32 %v2945, %v2951
        %v2954 = vadd.f32 %v2946, %v2951
        %2955 = vst.msk [vmem:[#allocation2] sm:$0xff] %vm828, %v2953
        %2956 = vst.msk [vmem:[#allocation2 + $0x8] sm:$0xff] %vm828, %v2954
        %p2957 = scmp.eq.s32.totalorder %s33, 1
        // Predicated region
        $region97: #{bert_forward.1} parent=91 // pred_check
          %p2958 = pneg %p2957
        $region98: #{bert_forward.1} parent=91 // pred_check_branch
          %2960 = sbr.rel (%p2958) target = $region100
        $region99: #{bert_forward.1} parent=91 // pred_region
          %v2961 = vld [vmem:[%s16] sm:$0xff]
          %v2962 = vld [vmem:[%s16 + $0x8] sm:$0xff]
          %v2963 = vld [vmem:[%s16 + $0x10] sm:$0xff]
          %v2964 = vld [vmem:[%s16 + $0x18] sm:$0xff]
          %v2965 = vld [vmem:[%s17] sm:$0x1]
          %v2967 = vlaneseq
          %v2968 = vshrl.u32 %v2967, 7
          %v2969 = vsub.s32 0, %v2968
          %v2970 = vrot.slane %v2965, %v2969
          %v2974 = vrot.slane %v2954, 7
          %vm2975 = vcmask 1041409
          %v2976 = vsel %vm2975, %v2974, %v2953
          %v2977 = vsel %vm828, %v2976, 0
          %2979 = vmatprep.subr.mxu0 0.0
          %2980 = vmatpush1.msra.mxu0 %v2961
          %2981 = vmatprep.subr.mxu0 0.0
          %2982 = vmatpush1.msra.mxu0 %v2962
          %2983 = vmatprep.subr.mxu0 0.0
          %2984 = vmatpush1.msra.mxu0 %v2963
          %2985 = vmatprep.subr.mxu0 0.0
          %2986 = vmatpush1.msra.mxu0 %v2964
          %2987 = vmatprep.subr.mxu0 0.0
          %2988 = vmatpush1.msra.mxu0 0.0
          %2989 = vmatprep.subr.mxu0 0.0
          %2990 = vmatpush1.msra.mxu0 0.0
          %2991 = vmatprep.subr.mxu0 0.0
          %2992 = vmatpush1.msra.mxu0 0.0
          %2993 = vmatprep.subr.mxu0 0.0
          %2994 = vmatpush1.msra.mxu0 0.0
          %2995 = vmatprep.subr.mxu0 0.0
          %2996 = vmatpush1.msra.mxu0 0.0
          %2997 = vmatprep.subr.mxu0 0.0
          %2998 = vmatpush1.msra.mxu0 0.0
          %2999 = vmatprep.subr.mxu0 0.0
          %3000 = vmatpush1.msra.mxu0 0.0
          %3001 = vmatprep.subr.mxu0 0.0
          %3002 = vmatpush1.msra.mxu0 0.0
          %3003 = vmatprep.subr.mxu0 0.0
          %3004 = vmatpush1.msra.mxu0 0.0
          %3005 = vmatprep.subr.mxu0 0.0
          %3006 = vmatpush1.msra.mxu0 0.0
          %3007 = vmatprep.subr.mxu0 0.0
          %3008 = vmatpush1.msra.mxu0 0.0
          %3009 = vmatprep.subr.mxu0 0.0
          %3010 = vmatpush1.msra.mxu0 0.0
          %3011 = vmatprep.subr.mxu0 0.0
          %3012 = vmatpush1.msra.mxu0 0.0
          %3013 = vmatprep.subr.mxu0 0.0
          %3014 = vmatpush1.msra.mxu0 0.0
          %3015 = vmatprep.subr.mxu0 0.0
          %3016 = vmatpush1.msra.mxu0 0.0
          %3017 = vmatprep.subr.mxu0 0.0
          %3018 = vmatpush1.msra.mxu0 0.0
          %3019 = vmatprep.subr.mxu0 0.0
          %3020 = vmatpush1.msra.mxu0 0.0
          %3021 = vmatprep.subr.mxu0 0.0
          %3022 = vmatpush1.msra.mxu0 0.0
          %3023 = vmatprep.subr.mxu0 0.0
          %3024 = vmatpush1.msra.mxu0 0.0
          %3025 = vmatprep.subr.mxu0 0.0
          %3026 = vmatpush1.msra.mxu0 0.0
          %3027 = vmatprep.subr.mxu0 0.0
          %3028 = vmatpush1.msra.mxu0 0.0
          %3029 = vmatprep.subr.mxu0 0.0
          %3030 = vmatpush1.msra.mxu0 0.0
          %3031 = vmatprep.subr.mxu0 0.0
          %3032 = vmatpush1.msra.mxu0 0.0
          %3033 = vmatprep.subr.mxu0 0.0
          %3034 = vmatpush1.msra.mxu0 0.0
          %3035 = vmatprep.subr.mxu0 0.0
          %3036 = vmatpush1.msra.mxu0 0.0
          %3037 = vmatprep.subr.mxu0 0.0
          %3038 = vmatpush1.msra.mxu0 0.0
          %3039 = vmatprep.subr.mxu0 0.0
          %3040 = vmatpush1.msra.mxu0 0.0
          %3041 = vmatprep.subr.mxu0 0.0
          %3042 = vmatpush1.msra.mxu0 0.0
          %3043 = vmatprep.mubr.f32.mxu0 0.0
          %3044 = vmatmul.mubr.f32.gmra.mrb[0].mxu0 %v2977
          %v3045 = vpop.f32.mrb[0].mxu0
          %v3046 = vadd.f32 %v2970, %v3045
          %v3047 = vpop.f32.mrb[0].mxu0
          %3048 = vdwg.mxu0
          %v3049 = vtanh.pop %v3046
          %vm3050 = vcmask 254976
          %3051 = vst.msk [vmem:[#allocation4] sm:$0x3] %vm3050, %v3049
        $region100: #{bert_forward.1} parent=91 // pred_fallthru
          _
        // Predicated region
        $region101: #{bert_forward.1} parent=91 // pred_check
          %p3052 = pneg %p484
        $region102: #{bert_forward.1} parent=91 // pred_check_branch
          %3054 = sbr.rel (%p3052) target = $region104
        $region103: #{bert_forward.1} parent=91 // pred_region
          %s3056 = ssub.s32 256, 256
          %3057 = vsyncadd [#allocation3], %s3056
          %s3058 = sshll.u32 [#allocation2], 4
          %s3059 = int_to_ptr.vmem [resolvable:$true] %s3058
          %3064 = dma.vmem_to_hbm [thread:$0]  %s3059, 256, %s18, [#allocation3], 128, 128, 8
        $region104: #{bert_forward.1} parent=91 // pred_fallthru
          _
        // Predicated region
        $region105: #{bert_forward.1} parent=91 // pred_check
          %p3065 = pneg %p505
        $region106: #{bert_forward.1} parent=91 // pred_check_branch
          %3067 = sbr.rel (%p3065) target = $region108
        $region107: #{bert_forward.1} parent=91 // pred_region
          %s3069 = ssub.s32 32, 32
          %3070 = vsyncadd [#allocation5], %s3069
          %s3072 = sshll.u32 [#allocation4], 4
          %s3073 = int_to_ptr.vmem [resolvable:$true] %s3072
          %3075 = dma.vmem_to_hbm [thread:$0]  %s3073, 32, %s19, [#allocation5]
        $region108: #{bert_forward.1} parent=91 // pred_fallthru
          _
        // Predicated region
        $region109: #{bert_forward.1} parent=91 // pred_check
          %p3076 = pneg %p484
        $region110: #{bert_forward.1} parent=91 // pred_check_branch
          %3078 = sbr.rel (%p3076) target = $region112
        $region111: #{bert_forward.1} parent=91 // pred_region
          %3079 = dma.done [#allocation3], 256
        $region112: #{bert_forward.1} parent=91 // pred_fallthru
          _
        // Predicated region
        $region113: #{bert_forward.1} parent=91 // pred_check
          %p3080 = pneg %p505
        $region114: #{bert_forward.1} parent=91 // pred_check_branch
          %3082 = sbr.rel (%p3080) target = $region116
        $region115: #{bert_forward.1} parent=91 // pred_region
          %3083 = dma.done [#allocation5], 32
        $region116: #{bert_forward.1} parent=91 // pred_fallthru
          _
      $region92: #{bert_forward.1} parent=5 // pred_fallthru
        _
      %p3084 = scmp.le.s32.totalorder 2, %s28
      // Predicated region
      $region117: #{bert_forward.1} parent=5 // pred_check
        %p3085 = pneg %p3084
      $region118: #{bert_forward.1} parent=5 // pred_check_branch
        %3087 = sbr.rel (%p3085) target = $region120
      $region119: #{bert_forward.1} parent=5 // pred_region
        %s3088 = ssub.s32 %s28, 2
      $region120: #{bert_forward.1} parent=5 // pred_fallthru
        _
    $region6: #{bert_forward.1} parent=1 // loop_footer
      %s32 = sadd.s32 1, %s28
    $region7: #{bert_forward.1} parent=1 // loop_footer_branch
      %27 = sbr.rel target = $region3
    $region8: #{bert_forward.1} parent=1 // loop_exit
      _
    %3089 = vsyncpa [#allocation3], 1
    %s3090 = scalar_lea.sflag [#allocation3], 1
    %3091 = vsyncpa %s3090, 1
    %3092 = vsyncpa [#allocation5], 1

</llo_original>
